<compile_context>
chip_gen: v6e
topology: v6e:2x2x1
jax: 0.10.0
libtpu: 0.0.40
codegen_flags: <defaults>
</compile_context>

<pallas_src>
import functools

import jax
import jax.numpy as jnp
from jax import lax
from jax.experimental import pallas as pl
from jax.experimental.pallas import tpu as pltpu


# ----------------------------------------------------------------------------
# In-kernel helpers
# ----------------------------------------------------------------------------
def _dw3x3_same(v, w):
    """3x3 depthwise conv (stride 1, zero-pad 1) on an unpadded (H, W, C) value.

    `w` is a (3, 3, C) value already loaded from VMEM (load hoisted by the
    caller) with the folded BN scale baked in.  Cross-correlation, matching
    nn.Conv2d.  The zero halo is built as an in-register value; no VMEM pad
    scratch, no scratch zeroing, no readback.
    """
    H, W, C = v.shape
    zrow = jnp.zeros((1, W, C), v.dtype)
    zcol = jnp.zeros((H + 2, 1, C), v.dtype)
    vp = jnp.concatenate([zrow, v, zrow], axis=0)       # (H+2, W,   C)
    vp = jnp.concatenate([zcol, vp, zcol], axis=1)      # (H+2, W+2, C)

    acc = vp[1:1 + H, 1:1 + W, :] * w[1, 1]             # centre tap initializes
    for ki in range(3):
        for kj in range(3):
            if ki == 1 and kj == 1:
                continue
            acc = acc + vp[ki:ki + H, kj:kj + W, :] * w[ki, kj]
    return acc


def _transition_kernel(
    x_ref,        # (1, H, W, Cin)   f32, unpadded NHWC input tile
    dw1_w_ref,    # (3, 3, Cin)      f32, conv1 depthwise weight * folded BN scale
    dw1_b_ref,    # (1, Cin)         f32, folded conv1.bn bias
    pw1_w_ref,    # (Cin, Cout)      bf16, conv1 pointwise weight * bn1 scale
    pw1_b_ref,    # (1, Cout)        f32, bn1 bias
    dw2_w_ref,    # (3, 3, Cout)     f32, conv2 depthwise weight * folded BN scale
    dw2_b_ref,    # (1, Cout)        f32, folded conv2.bn bias
    fuse_w_ref,   # (Cout+Cin, Cout) bf16, [pw2_w*bn2_s ; sc_w*sc_s]
    fuse_b_ref,   # (1, Cout)        f32, bn2_b + sc_b
    out_ref,      # (1, H, W, Cout)
    *, H, W,
):
    x = x_ref[0].astype(jnp.float32)                    # (H, W, Cin)
    Cin = x.shape[-1]
    Cout = out_ref.shape[-1]

    # ---- conv1: depthwise 3x3 (BN scale folded) + bias + ReLU (VPU, f32) ----
    h = _dw3x3_same(x, dw1_w_ref[...])
    h = jnp.maximum(h + dw1_b_ref[0], 0.0)

    # ---- conv1 pointwise (bn1 scale folded) + bn1 bias + ReLU ----
    # bf16 operands, single-pass MXU, f32 accumulation (HIGHEST dropped).
    h2 = jnp.dot(h.reshape(H * W, Cin).astype(jnp.bfloat16), pw1_w_ref[...],
                 preferred_element_type=jnp.float32)    # (H*W, Cout)
    h2 = jnp.maximum(h2 + pw1_b_ref[...], 0.0).reshape(H, W, Cout)

    # ---- conv2: depthwise 3x3 (BN scale folded) + bias + ReLU ----
    g = _dw3x3_same(h2, dw2_w_ref[...])
    g = jnp.maximum(g + dw2_b_ref[0], 0.0)

    # ---- fused [conv2-pointwise*bn2 ; shortcut*bn_sc] single MXU matmul ----
    # Residual add is part of the contraction; only the combined bias + ReLU
    # remain on the VPU.
    cat = jnp.concatenate(
        [g.reshape(H * W, Cout).astype(jnp.bfloat16),
         x.reshape(H * W, Cin).astype(jnp.bfloat16)], axis=-1)   # (H*W, Cout+Cin)
    o = jnp.dot(cat, fuse_w_ref[...], preferred_element_type=jnp.float32)
    o = jnp.maximum(o + fuse_b_ref[...], 0.0)

    out_ref[0] = o.reshape(H, W, Cout).astype(out_ref.dtype)


# ----------------------------------------------------------------------------
# Wrappers
# ----------------------------------------------------------------------------
def transition_block_forward_nhwc(x_nhwc, p):
    """Pallas forward on an NHWC activation (preferred end-to-end layout)."""
    N, H, W, Cin = x_nhwc.shape
    Cout = p['pw1_w'].shape[-1]

    def const_spec(shape):
        return pl.BlockSpec(shape, lambda n, _r=len(shape): (0,) * _r)

    kernel = functools.partial(_transition_kernel, H=H, W=W)
    return pl.pallas_call(
        kernel,
        out_shape=jax.ShapeDtypeStruct((N, H, W, Cout), x_nhwc.dtype),
        grid_spec=pltpu.PrefetchScalarGridSpec(
            num_scalar_prefetch=0,
            grid=(N,),
            in_specs=[
                pl.BlockSpec((1, H, W, Cin), lambda n: (n, 0, 0, 0)),
                const_spec((3, 3, Cin)),
                const_spec((1, Cin)),
                const_spec((Cin, Cout)),
                const_spec((1, Cout)),
                const_spec((3, 3, Cout)),
                const_spec((1, Cout)),
                const_spec((Cout + Cin, Cout)),
                const_spec((1, Cout)),
            ],
            out_specs=pl.BlockSpec((1, H, W, Cout), lambda n: (n, 0, 0, 0)),
        ),
        compiler_params=pltpu.CompilerParams(
            dimension_semantics=("parallel",)),
    )(x_nhwc,
      p['dw1_w'], p['dw1_b'],
      p['pw1_w'], p['pw1_b'],
      p['dw2_w'], p['dw2_b'],
      p['fuse_w'], p['fuse_b'])


def transition_block_forward(x_nchw, p):
    """PyTorch-compatible NCHW interface (transposes only for compatibility)."""
    x = jnp.transpose(x_nchw, (0, 2, 3, 1))
    out = transition_block_forward_nhwc(x, p)
    return jnp.transpose(out, (0, 3, 1, 2))


# ----------------------------------------------------------------------------
# Parameters: raw (PyTorch-like) + wrapper-time folding
# ----------------------------------------------------------------------------
def init_raw_params(key, Cin, Cout):
    ks = jax.random.split(key, 10)

    def bn(k, C):
        k1, k2, k3, k4 = jax.random.split(k, 4)
        return dict(
            gamma=1.0 + 0.1 * jax.random.normal(k1, (C,), jnp.float32),
            beta=0.1 * jax.random.normal(k2, (C,), jnp.float32),
            mean=0.1 * jax.random.normal(k3, (C,), jnp.float32),
            var=jnp.abs(jax.random.normal(k4, (C,), jnp.float32)) + 0.5)

    return {
        'dw1_w': 0.3 * jax.random.normal(ks[0], (3, 3, Cin), jnp.float32),
        'bn_dw1': bn(ks[1], Cin),
        'pw1_w': 0.3 * jax.random.normal(ks[2], (Cin, Cout), jnp.float32),
        'bn1': bn(ks[3], Cout),
        'dw2_w': 0.3 * jax.random.normal(ks[4], (3, 3, Cout), jnp.float32),
        'bn_dw2': bn(ks[5], Cout),
        'pw2_w': 0.3 * jax.random.normal(ks[6], (Cout, Cout), jnp.float32),
        'bn2': bn(ks[7], Cout),
        'sc_w': 0.3 * jax.random.normal(ks[8], (Cin, Cout), jnp.float32),
        'bn_sc': bn(ks[9], Cout),
    }


def fold_params(raw, eps=1e-5):
    """Fold every BN scale into the preceding conv weights (inference mode)."""
    def sb(b):
        s = b['gamma'] / jnp.sqrt(b['var'] + eps)
        return s, b['beta'] - b['mean'] * s

    s_dw1, b_dw1 = sb(raw['bn_dw1'])
    s1, b1 = sb(raw['bn1'])
    s_dw2, b_dw2 = sb(raw['bn_dw2'])
    s2, b2 = sb(raw['bn2'])
    ssc, bsc = sb(raw['bn_sc'])

    p = {}
    p['dw1_w'] = raw['dw1_w'] * s_dw1                                  # (3,3,Cin)
    p['dw1_b'] = b_dw1[None, :]                                        # (1,Cin)
    p['pw1_w'] = (raw['pw1_w'] * s1[None, :]).astype(jnp.bfloat16)     # (Cin,Cout)
    p['pw1_b'] = b1[None, :]                                           # (1,Cout)
    p['dw2_w'] = raw['dw2_w'] * s_dw2                                  # (3,3,Cout)
    p['dw2_b'] = b_dw2[None, :]                                        # (1,Cout)
    p['fuse_w'] = jnp.concatenate(
        [raw['pw2_w'] * s2[None, :], raw['sc_w'] * ssc[None, :]],
        axis=0).astype(jnp.bfloat16)                                   # (Cout+Cin,Cout)
    p['fuse_b'] = (b2 + bsc)[None, :]                                  # (1,Cout)
    return p


# ----------------------------------------------------------------------------
# Pure-JAX (XLA conv) reference for the correctness check.
# Pointwise operands are rounded to bf16 exactly as the kernel does, so the
# reference shares the kernel's (intentional) bf16-MXU numerics; everything
# else is f32 / HIGHEST precision.
# ----------------------------------------------------------------------------
def reference_forward(x_nchw, raw, eps=1e-5):
    x = jnp.transpose(x_nchw, (0, 2, 3, 1))
    dn = ('NHWC', 'HWIO', 'NHWC')
    Cin = x.shape[-1]
    Cout = raw['pw1_w'].shape[-1]
    hi = lax.Precision.HIGHEST

    def sb(b):
        s = b['gamma'] / jnp.sqrt(b['var'] + eps)
        return s, b['beta'] - b['mean'] * s

    def dw(v, w, C):
        return lax.conv_general_dilated(v, w[:, :, None, :], (1, 1), 'SAME',
                                        dimension_numbers=dn,
                                        feature_group_count=C, precision=hi)

    def pw(v, w):
        return lax.conv_general_dilated(v, w[None, None], (1, 1), 'VALID',
                                        dimension_numbers=dn, precision=hi)

    def q(v):  # bf16 rounding used for the MXU operands in the kernel
        return v.astype(jnp.bfloat16).astype(jnp.float32)

    s, b = sb(raw['bn_dw1'])
    h = jax.nn.relu(dw(x, raw['dw1_w'], Cin) * s + b)
    s1, b1 = sb(raw['bn1'])
    h = jax.nn.relu(pw(q(h), q(raw['pw1_w'] * s1[None, :])) + b1)
    s, b = sb(raw['bn_dw2'])
    g = jax.nn.relu(dw(h, raw['dw2_w'], Cout) * s + b)
    s2, b2 = sb(raw['bn2'])
    g = pw(q(g), q(raw['pw2_w'] * s2[None, :])) + b2
    ss, bs = sb(raw['bn_sc'])
    sc = pw(q(x), q(raw['sc_w'] * ss[None, :])) + bs
    out = jax.nn.relu(g + sc)
    return jnp.transpose(out, (0, 3, 1, 2))


# ----------------------------------------------------------------------------
if __name__ == "__main__":
    key = jax.random.PRNGKey(0)
    k_x, k_p = jax.random.split(key)

    N, Cin, H, W = 2, 16, 16, 16
    Cout = 32

    x = jax.random.normal(k_x, (N, Cin, H, W), jnp.float32)
    raw = init_raw_params(k_p, Cin, Cout)
    params = fold_params(raw)

    out = jax.block_until_ready(transition_block_forward(x, params))
    ref = jax.block_until_ready(reference_forward(x, raw))

    assert out.shape == (N, Cout, H, W), out.shape
    max_err = float(jnp.max(jnp.abs(out - ref)))
    # Tolerance covers rare bf16 quantization-boundary flips of the MXU
    # operands; any structural bug would be orders of magnitude larger.
    assert jnp.allclose(out, ref, atol=5e-3, rtol=5e-3), max_err

    print("KERNEL_OK")
</pallas_src>

<mosaic_0001>
module attributes {stable_mosaic.version = 11 : i64} {
  func.func @_transition_kernel(%arg0: i32, %arg1: memref<1x16x16x16xf32, #tpu.memory_space<vmem>>, %arg2: memref<3x3x16xf32, #tpu.memory_space<vmem>>, %arg3: memref<1x16xf32, #tpu.memory_space<vmem>>, %arg4: memref<16x32xbf16, #tpu.memory_space<vmem>>, %arg5: memref<1x32xf32, #tpu.memory_space<vmem>>, %arg6: memref<3x3x32xf32, #tpu.memory_space<vmem>>, %arg7: memref<1x32xf32, #tpu.memory_space<vmem>>, %arg8: memref<48x32xbf16, #tpu.memory_space<vmem>>, %arg9: memref<1x32xf32, #tpu.memory_space<vmem>>, %arg10: memref<1x16x16x32xf32, #tpu.memory_space<vmem>>) attributes {dimension_semantics = [#tpu.dimension_semantics<parallel>], iteration_bounds = array<i64: 2>, scalar_prefetch = 0 : i64, scratch_operands = 0 : i64, tpu.core_type = #tpu.core_type<tc>, window_params = [{transform_indices = @transform_0, window_bounds = array<i64: 1, 16, 16, 16>}, {pipeline_mode = #tpu.pipeline_mode<synchronous>, transform_indices = @transform_1, window_bounds = array<i64: 3, 3, 16>}, {pipeline_mode = #tpu.pipeline_mode<synchronous>, transform_indices = @transform_2, window_bounds = array<i64: 1, 16>}, {pipeline_mode = #tpu.pipeline_mode<synchronous>, transform_indices = @transform_3, window_bounds = array<i64: 16, 32>}, {pipeline_mode = #tpu.pipeline_mode<synchronous>, transform_indices = @transform_4, window_bounds = array<i64: 1, 32>}, {pipeline_mode = #tpu.pipeline_mode<synchronous>, transform_indices = @transform_5, window_bounds = array<i64: 3, 3, 32>}, {pipeline_mode = #tpu.pipeline_mode<synchronous>, transform_indices = @transform_6, window_bounds = array<i64: 1, 32>}, {pipeline_mode = #tpu.pipeline_mode<synchronous>, transform_indices = @transform_7, window_bounds = array<i64: 48, 32>}, {pipeline_mode = #tpu.pipeline_mode<synchronous>, transform_indices = @transform_8, window_bounds = array<i64: 1, 32>}, {transform_indices = @transform_9, window_bounds = array<i64: 1, 16, 16, 32>}]} {
    %c0 = arith.constant 0 : index
    %c0_0 = arith.constant 0 : index
    %c0_1 = arith.constant 0 : index
    %c0_2 = arith.constant 0 : index
    %0 = vector.load %arg1[%c0, %c0_0, %c0_1, %c0_2] : memref<1x16x16x16xf32, #tpu.memory_space<vmem>>, vector<1x16x16x16xf32>
    %1 = vector.shape_cast %0 : vector<1x16x16x16xf32> to vector<16x16x16xf32>
    %c0_3 = arith.constant 0 : index
    %c0_4 = arith.constant 0 : index
    %c0_5 = arith.constant 0 : index
    %2 = vector.load %arg2[%c0_3, %c0_4, %c0_5] : memref<3x3x16xf32, #tpu.memory_space<vmem>>, vector<3x3x16xf32>
    %cst = arith.constant 0.000000e+00 : f32
    %3 = vector.broadcast %cst : f32 to vector<1x16x16xf32>
    %cst_6 = arith.constant 0.000000e+00 : f32
    %4 = vector.broadcast %cst_6 : f32 to vector<18x1x16xf32>
    %5 = tpu.concatenate %3, %1, %3 in 0 : vector<1x16x16xf32>, vector<16x16x16xf32>, vector<1x16x16xf32> -> vector<18x16x16xf32>
    %6 = tpu.concatenate %4, %5, %4 in 1 : vector<18x1x16xf32>, vector<18x16x16xf32>, vector<18x1x16xf32> -> vector<18x18x16xf32>
    %7 = vector.extract_strided_slice %6 {offsets = [1, 1, 0], sizes = [16, 16, 16], strides = [1, 1, 1]} : vector<18x18x16xf32> to vector<16x16x16xf32>
    %8 = vector.extract_strided_slice %2 {offsets = [1, 1, 0], sizes = [1, 1, 16], strides = [1, 1, 1]} : vector<3x3x16xf32> to vector<1x1x16xf32>
    %9 = vector.shape_cast %8 : vector<1x1x16xf32> to vector<16xf32>
    %10 = vector.shape_cast %9 : vector<16xf32> to vector<1x1x16xf32>
    %11 = vector.broadcast %10 : vector<1x1x16xf32> to vector<16x16x16xf32>
    %12 = arith.mulf %7, %11 : vector<16x16x16xf32>
    %13 = vector.extract_strided_slice %6 {offsets = [0, 0, 0], sizes = [16, 16, 16], strides = [1, 1, 1]} : vector<18x18x16xf32> to vector<16x16x16xf32>
    %14 = vector.extract_strided_slice %2 {offsets = [0, 0, 0], sizes = [1, 1, 16], strides = [1, 1, 1]} : vector<3x3x16xf32> to vector<1x1x16xf32>
    %15 = vector.shape_cast %14 : vector<1x1x16xf32> to vector<16xf32>
    %16 = vector.shape_cast %15 : vector<16xf32> to vector<1x1x16xf32>
    %17 = vector.broadcast %16 : vector<1x1x16xf32> to vector<16x16x16xf32>
    %18 = arith.mulf %13, %17 : vector<16x16x16xf32>
    %19 = arith.addf %12, %18 : vector<16x16x16xf32>
    %20 = vector.extract_strided_slice %6 {offsets = [0, 1, 0], sizes = [16, 16, 16], strides = [1, 1, 1]} : vector<18x18x16xf32> to vector<16x16x16xf32>
    %21 = vector.extract_strided_slice %2 {offsets = [0, 1, 0], sizes = [1, 1, 16], strides = [1, 1, 1]} : vector<3x3x16xf32> to vector<1x1x16xf32>
    %22 = vector.shape_cast %21 : vector<1x1x16xf32> to vector<16xf32>
    %23 = vector.shape_cast %22 : vector<16xf32> to vector<1x1x16xf32>
    %24 = vector.broadcast %23 : vector<1x1x16xf32> to vector<16x16x16xf32>
    %25 = arith.mulf %20, %24 : vector<16x16x16xf32>
    %26 = arith.addf %19, %25 : vector<16x16x16xf32>
    %27 = vector.extract_strided_slice %6 {offsets = [0, 2, 0], sizes = [16, 16, 16], strides = [1, 1, 1]} : vector<18x18x16xf32> to vector<16x16x16xf32>
    %28 = vector.extract_strided_slice %2 {offsets = [0, 2, 0], sizes = [1, 1, 16], strides = [1, 1, 1]} : vector<3x3x16xf32> to vector<1x1x16xf32>
    %29 = vector.shape_cast %28 : vector<1x1x16xf32> to vector<16xf32>
    %30 = vector.shape_cast %29 : vector<16xf32> to vector<1x1x16xf32>
    %31 = vector.broadcast %30 : vector<1x1x16xf32> to vector<16x16x16xf32>
    %32 = arith.mulf %27, %31 : vector<16x16x16xf32>
    %33 = arith.addf %26, %32 : vector<16x16x16xf32>
    %34 = vector.extract_strided_slice %6 {offsets = [1, 0, 0], sizes = [16, 16, 16], strides = [1, 1, 1]} : vector<18x18x16xf32> to vector<16x16x16xf32>
    %35 = vector.extract_strided_slice %2 {offsets = [1, 0, 0], sizes = [1, 1, 16], strides = [1, 1, 1]} : vector<3x3x16xf32> to vector<1x1x16xf32>
    %36 = vector.shape_cast %35 : vector<1x1x16xf32> to vector<16xf32>
    %37 = vector.shape_cast %36 : vector<16xf32> to vector<1x1x16xf32>
    %38 = vector.broadcast %37 : vector<1x1x16xf32> to vector<16x16x16xf32>
    %39 = arith.mulf %34, %38 : vector<16x16x16xf32>
    %40 = arith.addf %33, %39 : vector<16x16x16xf32>
    %41 = vector.extract_strided_slice %6 {offsets = [1, 2, 0], sizes = [16, 16, 16], strides = [1, 1, 1]} : vector<18x18x16xf32> to vector<16x16x16xf32>
    %42 = vector.extract_strided_slice %2 {offsets = [1, 2, 0], sizes = [1, 1, 16], strides = [1, 1, 1]} : vector<3x3x16xf32> to vector<1x1x16xf32>
    %43 = vector.shape_cast %42 : vector<1x1x16xf32> to vector<16xf32>
    %44 = vector.shape_cast %43 : vector<16xf32> to vector<1x1x16xf32>
    %45 = vector.broadcast %44 : vector<1x1x16xf32> to vector<16x16x16xf32>
    %46 = arith.mulf %41, %45 : vector<16x16x16xf32>
    %47 = arith.addf %40, %46 : vector<16x16x16xf32>
    %48 = vector.extract_strided_slice %6 {offsets = [2, 0, 0], sizes = [16, 16, 16], strides = [1, 1, 1]} : vector<18x18x16xf32> to vector<16x16x16xf32>
    %49 = vector.extract_strided_slice %2 {offsets = [2, 0, 0], sizes = [1, 1, 16], strides = [1, 1, 1]} : vector<3x3x16xf32> to vector<1x1x16xf32>
    %50 = vector.shape_cast %49 : vector<1x1x16xf32> to vector<16xf32>
    %51 = vector.shape_cast %50 : vector<16xf32> to vector<1x1x16xf32>
    %52 = vector.broadcast %51 : vector<1x1x16xf32> to vector<16x16x16xf32>
    %53 = arith.mulf %48, %52 : vector<16x16x16xf32>
    %54 = arith.addf %47, %53 : vector<16x16x16xf32>
    %55 = vector.extract_strided_slice %6 {offsets = [2, 1, 0], sizes = [16, 16, 16], strides = [1, 1, 1]} : vector<18x18x16xf32> to vector<16x16x16xf32>
    %56 = vector.extract_strided_slice %2 {offsets = [2, 1, 0], sizes = [1, 1, 16], strides = [1, 1, 1]} : vector<3x3x16xf32> to vector<1x1x16xf32>
    %57 = vector.shape_cast %56 : vector<1x1x16xf32> to vector<16xf32>
    %58 = vector.shape_cast %57 : vector<16xf32> to vector<1x1x16xf32>
    %59 = vector.broadcast %58 : vector<1x1x16xf32> to vector<16x16x16xf32>
    %60 = arith.mulf %55, %59 : vector<16x16x16xf32>
    %61 = arith.addf %54, %60 : vector<16x16x16xf32>
    %62 = vector.extract_strided_slice %6 {offsets = [2, 2, 0], sizes = [16, 16, 16], strides = [1, 1, 1]} : vector<18x18x16xf32> to vector<16x16x16xf32>
    %63 = vector.extract_strided_slice %2 {offsets = [2, 2, 0], sizes = [1, 1, 16], strides = [1, 1, 1]} : vector<3x3x16xf32> to vector<1x1x16xf32>
    %64 = vector.shape_cast %63 : vector<1x1x16xf32> to vector<16xf32>
    %65 = vector.shape_cast %64 : vector<16xf32> to vector<1x1x16xf32>
    %66 = vector.broadcast %65 : vector<1x1x16xf32> to vector<16x16x16xf32>
    %67 = arith.mulf %62, %66 : vector<16x16x16xf32>
    %68 = arith.addf %61, %67 : vector<16x16x16xf32>
    %c0_7 = arith.constant 0 : index
    %c0_8 = arith.constant 0 : index
    %69 = vector.load %arg3[%c0_7, %c0_8] : memref<1x16xf32, #tpu.memory_space<vmem>>, vector<1x16xf32>
    %70 = vector.shape_cast %69 : vector<1x16xf32> to vector<16xf32>
    %71 = vector.shape_cast %70 : vector<16xf32> to vector<1x1x16xf32>
    %72 = vector.broadcast %71 : vector<1x1x16xf32> to vector<16x16x16xf32>
    %73 = arith.addf %68, %72 : vector<16x16x16xf32>
    %cst_9 = arith.constant 0.000000e+00 : f32
    %74 = vector.broadcast %cst_9 : f32 to vector<16x16x16xf32>
    %75 = arith.maximumf %73, %74 : vector<16x16x16xf32>
    %76 = vector.shape_cast %75 : vector<16x16x16xf32> to vector<256x16xf32>
    %77 = arith.truncf %76 : vector<256x16xf32> to vector<256x16xbf16>
    %c0_10 = arith.constant 0 : index
    %c0_11 = arith.constant 0 : index
    %78 = vector.load %arg4[%c0_10, %c0_11] : memref<16x32xbf16, #tpu.memory_space<vmem>>, vector<16x32xbf16>
    %cst_12 = arith.constant dense<0.000000e+00> : vector<256x32xf32>
    %79 = tpu.matmul %77, %78, %cst_12 {dimension_numbers = #tpu.dot_dimension_numbers<[1], [0], [0], [1], [0, 0, 1, 1], [], []>} : vector<256x16xbf16>, vector<16x32xbf16>, vector<256x32xf32> -> vector<256x32xf32>
    %c0_13 = arith.constant 0 : index
    %c0_14 = arith.constant 0 : index
    %80 = vector.load %arg5[%c0_13, %c0_14] : memref<1x32xf32, #tpu.memory_space<vmem>>, vector<1x32xf32>
    %81 = vector.broadcast %80 : vector<1x32xf32> to vector<256x32xf32>
    %82 = arith.addf %79, %81 : vector<256x32xf32>
    %cst_15 = arith.constant 0.000000e+00 : f32
    %83 = vector.broadcast %cst_15 : f32 to vector<256x32xf32>
    %84 = arith.maximumf %82, %83 : vector<256x32xf32>
    %85 = vector.shape_cast %84 : vector<256x32xf32> to vector<16x16x32xf32>
    %c0_16 = arith.constant 0 : index
    %c0_17 = arith.constant 0 : index
    %c0_18 = arith.constant 0 : index
    %86 = vector.load %arg6[%c0_16, %c0_17, %c0_18] : memref<3x3x32xf32, #tpu.memory_space<vmem>>, vector<3x3x32xf32>
    %cst_19 = arith.constant 0.000000e+00 : f32
    %87 = vector.broadcast %cst_19 : f32 to vector<1x16x32xf32>
    %cst_20 = arith.constant 0.000000e+00 : f32
    %88 = vector.broadcast %cst_20 : f32 to vector<18x1x32xf32>
    %89 = tpu.concatenate %87, %85, %87 in 0 : vector<1x16x32xf32>, vector<16x16x32xf32>, vector<1x16x32xf32> -> vector<18x16x32xf32>
    %90 = tpu.concatenate %88, %89, %88 in 1 : vector<18x1x32xf32>, vector<18x16x32xf32>, vector<18x1x32xf32> -> vector<18x18x32xf32>
    %91 = vector.extract_strided_slice %90 {offsets = [1, 1, 0], sizes = [16, 16, 32], strides = [1, 1, 1]} : vector<18x18x32xf32> to vector<16x16x32xf32>
    %92 = vector.extract_strided_slice %86 {offsets = [1, 1, 0], sizes = [1, 1, 32], strides = [1, 1, 1]} : vector<3x3x32xf32> to vector<1x1x32xf32>
    %93 = vector.shape_cast %92 : vector<1x1x32xf32> to vector<32xf32>
    %94 = vector.shape_cast %93 : vector<32xf32> to vector<1x1x32xf32>
    %95 = vector.broadcast %94 : vector<1x1x32xf32> to vector<16x16x32xf32>
    %96 = arith.mulf %91, %95 : vector<16x16x32xf32>
    %97 = vector.extract_strided_slice %90 {offsets = [0, 0, 0], sizes = [16, 16, 32], strides = [1, 1, 1]} : vector<18x18x32xf32> to vector<16x16x32xf32>
    %98 = vector.extract_strided_slice %86 {offsets = [0, 0, 0], sizes = [1, 1, 32], strides = [1, 1, 1]} : vector<3x3x32xf32> to vector<1x1x32xf32>
    %99 = vector.shape_cast %98 : vector<1x1x32xf32> to vector<32xf32>
    %100 = vector.shape_cast %99 : vector<32xf32> to vector<1x1x32xf32>
    %101 = vector.broadcast %100 : vector<1x1x32xf32> to vector<16x16x32xf32>
    %102 = arith.mulf %97, %101 : vector<16x16x32xf32>
    %103 = arith.addf %96, %102 : vector<16x16x32xf32>
    %104 = vector.extract_strided_slice %90 {offsets = [0, 1, 0], sizes = [16, 16, 32], strides = [1, 1, 1]} : vector<18x18x32xf32> to vector<16x16x32xf32>
    %105 = vector.extract_strided_slice %86 {offsets = [0, 1, 0], sizes = [1, 1, 32], strides = [1, 1, 1]} : vector<3x3x32xf32> to vector<1x1x32xf32>
    %106 = vector.shape_cast %105 : vector<1x1x32xf32> to vector<32xf32>
    %107 = vector.shape_cast %106 : vector<32xf32> to vector<1x1x32xf32>
    %108 = vector.broadcast %107 : vector<1x1x32xf32> to vector<16x16x32xf32>
    %109 = arith.mulf %104, %108 : vector<16x16x32xf32>
    %110 = arith.addf %103, %109 : vector<16x16x32xf32>
    %111 = vector.extract_strided_slice %90 {offsets = [0, 2, 0], sizes = [16, 16, 32], strides = [1, 1, 1]} : vector<18x18x32xf32> to vector<16x16x32xf32>
    %112 = vector.extract_strided_slice %86 {offsets = [0, 2, 0], sizes = [1, 1, 32], strides = [1, 1, 1]} : vector<3x3x32xf32> to vector<1x1x32xf32>
    %113 = vector.shape_cast %112 : vector<1x1x32xf32> to vector<32xf32>
    %114 = vector.shape_cast %113 : vector<32xf32> to vector<1x1x32xf32>
    %115 = vector.broadcast %114 : vector<1x1x32xf32> to vector<16x16x32xf32>
    %116 = arith.mulf %111, %115 : vector<16x16x32xf32>
    %117 = arith.addf %110, %116 : vector<16x16x32xf32>
    %118 = vector.extract_strided_slice %90 {offsets = [1, 0, 0], sizes = [16, 16, 32], strides = [1, 1, 1]} : vector<18x18x32xf32> to vector<16x16x32xf32>
    %119 = vector.extract_strided_slice %86 {offsets = [1, 0, 0], sizes = [1, 1, 32], strides = [1, 1, 1]} : vector<3x3x32xf32> to vector<1x1x32xf32>
    %120 = vector.shape_cast %119 : vector<1x1x32xf32> to vector<32xf32>
    %121 = vector.shape_cast %120 : vector<32xf32> to vector<1x1x32xf32>
    %122 = vector.broadcast %121 : vector<1x1x32xf32> to vector<16x16x32xf32>
    %123 = arith.mulf %118, %122 : vector<16x16x32xf32>
    %124 = arith.addf %117, %123 : vector<16x16x32xf32>
    %125 = vector.extract_strided_slice %90 {offsets = [1, 2, 0], sizes = [16, 16, 32], strides = [1, 1, 1]} : vector<18x18x32xf32> to vector<16x16x32xf32>
    %126 = vector.extract_strided_slice %86 {offsets = [1, 2, 0], sizes = [1, 1, 32], strides = [1, 1, 1]} : vector<3x3x32xf32> to vector<1x1x32xf32>
    %127 = vector.shape_cast %126 : vector<1x1x32xf32> to vector<32xf32>
    %128 = vector.shape_cast %127 : vector<32xf32> to vector<1x1x32xf32>
    %129 = vector.broadcast %128 : vector<1x1x32xf32> to vector<16x16x32xf32>
    %130 = arith.mulf %125, %129 : vector<16x16x32xf32>
    %131 = arith.addf %124, %130 : vector<16x16x32xf32>
    %132 = vector.extract_strided_slice %90 {offsets = [2, 0, 0], sizes = [16, 16, 32], strides = [1, 1, 1]} : vector<18x18x32xf32> to vector<16x16x32xf32>
    %133 = vector.extract_strided_slice %86 {offsets = [2, 0, 0], sizes = [1, 1, 32], strides = [1, 1, 1]} : vector<3x3x32xf32> to vector<1x1x32xf32>
    %134 = vector.shape_cast %133 : vector<1x1x32xf32> to vector<32xf32>
    %135 = vector.shape_cast %134 : vector<32xf32> to vector<1x1x32xf32>
    %136 = vector.broadcast %135 : vector<1x1x32xf32> to vector<16x16x32xf32>
    %137 = arith.mulf %132, %136 : vector<16x16x32xf32>
    %138 = arith.addf %131, %137 : vector<16x16x32xf32>
    %139 = vector.extract_strided_slice %90 {offsets = [2, 1, 0], sizes = [16, 16, 32], strides = [1, 1, 1]} : vector<18x18x32xf32> to vector<16x16x32xf32>
    %140 = vector.extract_strided_slice %86 {offsets = [2, 1, 0], sizes = [1, 1, 32], strides = [1, 1, 1]} : vector<3x3x32xf32> to vector<1x1x32xf32>
    %141 = vector.shape_cast %140 : vector<1x1x32xf32> to vector<32xf32>
    %142 = vector.shape_cast %141 : vector<32xf32> to vector<1x1x32xf32>
    %143 = vector.broadcast %142 : vector<1x1x32xf32> to vector<16x16x32xf32>
    %144 = arith.mulf %139, %143 : vector<16x16x32xf32>
    %145 = arith.addf %138, %144 : vector<16x16x32xf32>
    %146 = vector.extract_strided_slice %90 {offsets = [2, 2, 0], sizes = [16, 16, 32], strides = [1, 1, 1]} : vector<18x18x32xf32> to vector<16x16x32xf32>
    %147 = vector.extract_strided_slice %86 {offsets = [2, 2, 0], sizes = [1, 1, 32], strides = [1, 1, 1]} : vector<3x3x32xf32> to vector<1x1x32xf32>
    %148 = vector.shape_cast %147 : vector<1x1x32xf32> to vector<32xf32>
    %149 = vector.shape_cast %148 : vector<32xf32> to vector<1x1x32xf32>
    %150 = vector.broadcast %149 : vector<1x1x32xf32> to vector<16x16x32xf32>
    %151 = arith.mulf %146, %150 : vector<16x16x32xf32>
    %152 = arith.addf %145, %151 : vector<16x16x32xf32>
    %c0_21 = arith.constant 0 : index
    %c0_22 = arith.constant 0 : index
    %153 = vector.load %arg7[%c0_21, %c0_22] : memref<1x32xf32, #tpu.memory_space<vmem>>, vector<1x32xf32>
    %154 = vector.shape_cast %153 : vector<1x32xf32> to vector<32xf32>
    %155 = vector.shape_cast %154 : vector<32xf32> to vector<1x1x32xf32>
    %156 = vector.broadcast %155 : vector<1x1x32xf32> to vector<16x16x32xf32>
    %157 = arith.addf %152, %156 : vector<16x16x32xf32>
    %cst_23 = arith.constant 0.000000e+00 : f32
    %158 = vector.broadcast %cst_23 : f32 to vector<16x16x32xf32>
    %159 = arith.maximumf %157, %158 : vector<16x16x32xf32>
    %160 = vector.shape_cast %159 : vector<16x16x32xf32> to vector<256x32xf32>
    %161 = arith.truncf %160 : vector<256x32xf32> to vector<256x32xbf16>
    %162 = vector.shape_cast %1 : vector<16x16x16xf32> to vector<256x16xf32>
    %163 = arith.truncf %162 : vector<256x16xf32> to vector<256x16xbf16>
    %164 = tpu.concatenate %161, %163 in 1 : vector<256x32xbf16>, vector<256x16xbf16> -> vector<256x48xbf16>
    %c0_24 = arith.constant 0 : index
    %c0_25 = arith.constant 0 : index
    %165 = vector.load %arg8[%c0_24, %c0_25] : memref<48x32xbf16, #tpu.memory_space<vmem>>, vector<48x32xbf16>
    %cst_26 = arith.constant dense<0.000000e+00> : vector<256x32xf32>
    %166 = tpu.matmul %164, %165, %cst_26 {dimension_numbers = #tpu.dot_dimension_numbers<[1], [0], [0], [1], [0, 0, 1, 1], [], []>} : vector<256x48xbf16>, vector<48x32xbf16>, vector<256x32xf32> -> vector<256x32xf32>
    %c0_27 = arith.constant 0 : index
    %c0_28 = arith.constant 0 : index
    %167 = vector.load %arg9[%c0_27, %c0_28] : memref<1x32xf32, #tpu.memory_space<vmem>>, vector<1x32xf32>
    %168 = vector.broadcast %167 : vector<1x32xf32> to vector<256x32xf32>
    %169 = arith.addf %166, %168 : vector<256x32xf32>
    %cst_29 = arith.constant 0.000000e+00 : f32
    %170 = vector.broadcast %cst_29 : f32 to vector<256x32xf32>
    %171 = arith.maximumf %169, %170 : vector<256x32xf32>
    %172 = vector.shape_cast %171 : vector<256x32xf32> to vector<16x16x32xf32>
    %c0_30 = arith.constant 0 : index
    %c0_31 = arith.constant 0 : index
    %c0_32 = arith.constant 0 : index
    %c0_33 = arith.constant 0 : index
    %173 = vector.load %arg10[%c0_30, %c0_31, %c0_32, %c0_33] : memref<1x16x16x32xf32, #tpu.memory_space<vmem>>, vector<1x16x16x32xf32>
    %174 = vector.shape_cast %173 : vector<1x16x16x32xf32> to vector<16x16x32xf32>
    %175 = vector.shape_cast %172 : vector<16x16x32xf32> to vector<1x16x16x32xf32>
    tpu.vector_store %arg10[%c0_30, %c0_31, %c0_32, %c0_33], %175 {strides = array<i32>} : memref<1x16x16x32xf32, #tpu.memory_space<vmem>>, vector<1x16x16x32xf32>,
    return
  }
  func.func @transform_0(%arg0: i32) -> (i32, i32, i32, i32) {
    %c0_i32 = arith.constant 0 : i32
    %c0_i32_0 = arith.constant 0 : i32
    %c0_i32_1 = arith.constant 0 : i32
    %c0_i32_2 = arith.constant 0 : i32
    return %arg0, %c0_i32, %c0_i32_0, %c0_i32_1 : i32, i32, i32, i32
  }
  func.func @transform_1(%arg0: i32) -> (i32, i32, i32) {
    %c0_i32 = arith.constant 0 : i32
    %c0_i32_0 = arith.constant 0 : i32
    %c0_i32_1 = arith.constant 0 : i32
    %c0_i32_2 = arith.constant 0 : i32
    return %c0_i32, %c0_i32_0, %c0_i32_1 : i32, i32, i32
  }
  func.func @transform_2(%arg0: i32) -> (i32, i32) {
    %c0_i32 = arith.constant 0 : i32
    %c0_i32_0 = arith.constant 0 : i32
    %c0_i32_1 = arith.constant 0 : i32
    return %c0_i32, %c0_i32_0 : i32, i32
  }
  func.func @transform_3(%arg0: i32) -> (i32, i32) {
    %c0_i32 = arith.constant 0 : i32
    %c0_i32_0 = arith.constant 0 : i32
    %c0_i32_1 = arith.constant 0 : i32
    return %c0_i32, %c0_i32_0 : i32, i32
  }
  func.func @transform_4(%arg0: i32) -> (i32, i32) {
    %c0_i32 = arith.constant 0 : i32
    %c0_i32_0 = arith.constant 0 : i32
    %c0_i32_1 = arith.constant 0 : i32
    return %c0_i32, %c0_i32_0 : i32, i32
  }
  func.func @transform_5(%arg0: i32) -> (i32, i32, i32) {
    %c0_i32 = arith.constant 0 : i32
    %c0_i32_0 = arith.constant 0 : i32
    %c0_i32_1 = arith.constant 0 : i32
    %c0_i32_2 = arith.constant 0 : i32
    return %c0_i32, %c0_i32_0, %c0_i32_1 : i32, i32, i32
  }
  func.func @transform_6(%arg0: i32) -> (i32, i32) {
    %c0_i32 = arith.constant 0 : i32
    %c0_i32_0 = arith.constant 0 : i32
    %c0_i32_1 = arith.constant 0 : i32
    return %c0_i32, %c0_i32_0 : i32, i32
  }
  func.func @transform_7(%arg0: i32) -> (i32, i32) {
    %c0_i32 = arith.constant 0 : i32
    %c0_i32_0 = arith.constant 0 : i32
    %c0_i32_1 = arith.constant 0 : i32
    return %c0_i32, %c0_i32_0 : i32, i32
  }
  func.func @transform_8(%arg0: i32) -> (i32, i32) {
    %c0_i32 = arith.constant 0 : i32
    %c0_i32_0 = arith.constant 0 : i32
    %c0_i32_1 = arith.constant 0 : i32
    return %c0_i32, %c0_i32_0 : i32, i32
  }
  func.func @transform_9(%arg0: i32) -> (i32, i32, i32, i32) {
    %c0_i32 = arith.constant 0 : i32
    %c0_i32_0 = arith.constant 0 : i32
    %c0_i32_1 = arith.constant 0 : i32
    %c0_i32_2 = arith.constant 0 : i32
    return %arg0, %c0_i32, %c0_i32_0, %c0_i32_1 : i32, i32, i32, i32
  }
}

</mosaic_0001>

<llo_original>
// kernel: tpu_custom_call.1
$region0: #{tpu_custom_call.1}
  #allocation0 [shape = 'u32[]', space=smem, size = 0x4, offset = 0x4, fixed_abs, tag = 'smem constant byte address 0x4 - core index']
  #allocation1 [shape = 'u32[144,128]{1,0:T(1,128)}', space=vmem, size = 0x12000, scoped, tag = 'internal scratch']
  %s0 = inlined_call_operand.hbm [shape: f32[2,16,16,16], index: 0, kind: input, shape index: {}]
  %s1 = inlined_call_operand.vmem [shape: f32[3,3,16], index: 1, kind: input, shape index: {}]
  %s2 = inlined_call_operand.vmem [shape: f32[1,16], index: 2, kind: input, shape index: {}]
  %s3 = inlined_call_operand.vmem [shape: bf16[16,32], index: 3, kind: input, shape index: {}]
  %s4 = inlined_call_operand.vmem [shape: f32[1,32], index: 4, kind: input, shape index: {}]
  %s5 = inlined_call_operand.vmem [shape: f32[3,3,32], index: 5, kind: input, shape index: {}]
  %s6 = inlined_call_operand.vmem [shape: f32[1,32], index: 6, kind: input, shape index: {}]
  %s7 = inlined_call_operand.vmem [shape: bf16[48,32], index: 7, kind: input, shape index: {}]
  %s8 = inlined_call_operand.vmem [shape: f32[1,32], index: 8, kind: input, shape index: {}]
  %s9 = inlined_call_operand.hbm [shape: f32[2,16,16,32], index: 9, kind: output, shape index: {}]
  %s10 = sld [smem:[#allocation0]]
  $region73: #{tpu_custom_call.1} parent=0
    _
  %s12 = ssub.s32 1, %s10
  %s13 = scalar_select 0, %s12, %s10
  $region1: #{tpu_custom_call.1} parent=0
    #allocation2 [shape = 'u8[262144]{0}', space=vmem, size = 0x40000, scoped, tag = 'input window, operand 0']
    #allocation3 [shape = 's32[2]{0}', space=sflag, size = 0x8, scoped, tag = 'scoped memory for tpu_custom_call.1']
    #allocation4 [shape = 's32[2]{0}', space=sflag, size = 0x8, scoped, tag = 'scoped memory for tpu_custom_call.1']
    #allocation5 [shape = 'u8[262144]{0}', space=vmem, size = 0x40000, scoped, tag = 'output window, operand 0']
    %14 = vsyncpa [#allocation3], 0
    %s15 = scalar_lea.sflag [#allocation3], 1
    %16 = vsyncpa %s15, 0
    %17 = vsyncpa [#allocation4], 0
    %s18 = scalar_lea.sflag [#allocation4], 1
    %19 = vsyncpa %s18, 0
    loop: start=0, step=1, limit=4
    $region2: #{tpu_custom_call.1} parent=1 // loop_pre_header
      _
    $region3: #{tpu_custom_call.1} parent=1 // loop_header
      %s21 = sphi 0, %s25
      %p22 = scmp.ge.s32.totalorder %s21, 4
      %s31 = sphi 0, %s33
      %s34 = sphi 0, %s31
      %s35 = sphi 0, %s34
      %s51 = sphi 0, %s35
      %s55 = sphi 0, %s55
      %s57 = sphi 0, %s55
      %s58 = sphi 0, %s57
      %s72 = sphi 0, %s58
      %s76 = sphi 0, %s76
      %s78 = sphi 0, %s76
      %s79 = sphi 0, %s78
      %s93 = sphi 0, %s79
      %s97 = sphi 0, %s97
      %s99 = sphi 0, %s97
      %s100 = sphi 0, %s99
      %s114 = sphi 0, %s100
      %s118 = sphi 0, %s118
      %s120 = sphi 0, %s118
      %s121 = sphi 0, %s120
      %s135 = sphi 0, %s121
      %s139 = sphi 0, %s139
      %s141 = sphi 0, %s139
      %s142 = sphi 0, %s141
      %s156 = sphi 0, %s142
      %s160 = sphi 0, %s160
      %s162 = sphi 0, %s160
      %s163 = sphi 0, %s162
      %s177 = sphi 0, %s163
      %s181 = sphi 0, %s181
      %s183 = sphi 0, %s181
      %s184 = sphi 0, %s183
      %s198 = sphi 0, %s184
      %s202 = sphi 0, %s202
      %s204 = sphi 0, %s202
      %s205 = sphi 0, %s204
      %s219 = sphi 0, %s205
      %s225 = sphi 0, %s227
      %s228 = sphi 0, %s225
      %s229 = sphi 0, %s228
      %s245 = sphi 0, %s229
    $region4: #{tpu_custom_call.1} parent=1 // loop_header_branch
      %24 = sbr.rel (%p22) target = $region8
    $region5: #{tpu_custom_call.1} parent=1 // loop_body
      %s26 = ssub.s32 %s21, 1
      %s27 = ssub.s32 %s21, 2
      %s28 = sadd.s32 %s21, 1
      %s29 = ssub.s32 %s21, %s28
      %p30 = scmp.eq.s32.totalorder %s29, 0
      %s32 = sadd.s32 %s31, 1
      %s33 = scalar_select %p30, %s31, %s32
      %p36 = pneg %p30
      %p37 = scmp.eq.s32.totalorder %s21, 1
      %p38 = por %p36, %p37
      %p39 = scmp.ne.s32.totalorder %s31, %s34
      %p40 = scmp.eq.s32.totalorder %s21, 0
      %p41 = por %p39, %p40
      %p42 = scmp.ne.s32.totalorder %s31, %s34
      %p43 = scmp.eq.s32.totalorder %s26, 1
      %p44 = por %p42, %p43
      %p45 = scmp.ne.s32.totalorder %s34, %s35
      %p46 = scmp.eq.s32.totalorder %s26, 0
      %p47 = por %p45, %p46
      %p48 = scmp.ne.s32.totalorder %s34, %s35
      %p49 = scmp.eq.s32.totalorder %s27, 1
      %p50 = por %p48, %p49
      %p52 = scmp.ne.s32.totalorder %s35, %s51
      %p53 = scmp.eq.s32.totalorder %s27, 0
      %p54 = por %p52, %p53
      %s56 = sadd.s32 %s55, 1
      %p59 = scmp.eq.s32.totalorder %s21, 1
      %p60 = scmp.ne.s32.totalorder %s55, %s57
      %p61 = scmp.eq.s32.totalorder %s21, 0
      %p62 = por %p60, %p61
      %p63 = scmp.ne.s32.totalorder %s55, %s57
      %p64 = scmp.eq.s32.totalorder %s26, 1
      %p65 = por %p63, %p64
      %p66 = scmp.ne.s32.totalorder %s57, %s58
      %p67 = scmp.eq.s32.totalorder %s26, 0
      %p68 = por %p66, %p67
      %p69 = scmp.ne.s32.totalorder %s57, %s58
      %p70 = scmp.eq.s32.totalorder %s27, 1
      %p71 = por %p69, %p70
      %p73 = scmp.ne.s32.totalorder %s58, %s72
      %p74 = scmp.eq.s32.totalorder %s27, 0
      %p75 = por %p73, %p74
      %s77 = sadd.s32 %s76, 1
      %p80 = scmp.eq.s32.totalorder %s21, 1
      %p81 = scmp.ne.s32.totalorder %s76, %s78
      %p82 = scmp.eq.s32.totalorder %s21, 0
      %p83 = por %p81, %p82
      %p84 = scmp.ne.s32.totalorder %s76, %s78
      %p85 = scmp.eq.s32.totalorder %s26, 1
      %p86 = por %p84, %p85
      %p87 = scmp.ne.s32.totalorder %s78, %s79
      %p88 = scmp.eq.s32.totalorder %s26, 0
      %p89 = por %p87, %p88
      %p90 = scmp.ne.s32.totalorder %s78, %s79
      %p91 = scmp.eq.s32.totalorder %s27, 1
      %p92 = por %p90, %p91
      %p94 = scmp.ne.s32.totalorder %s79, %s93
      %p95 = scmp.eq.s32.totalorder %s27, 0
      %p96 = por %p94, %p95
      %s98 = sadd.s32 %s97, 1
      %p101 = scmp.eq.s32.totalorder %s21, 1
      %p102 = scmp.ne.s32.totalorder %s97, %s99
      %p103 = scmp.eq.s32.totalorder %s21, 0
      %p104 = por %p102, %p103
      %p105 = scmp.ne.s32.totalorder %s97, %s99
      %p106 = scmp.eq.s32.totalorder %s26, 1
      %p107 = por %p105, %p106
      %p108 = scmp.ne.s32.totalorder %s99, %s100
      %p109 = scmp.eq.s32.totalorder %s26, 0
      %p110 = por %p108, %p109
      %p111 = scmp.ne.s32.totalorder %s99, %s100
      %p112 = scmp.eq.s32.totalorder %s27, 1
      %p113 = por %p111, %p112
      %p115 = scmp.ne.s32.totalorder %s100, %s114
      %p116 = scmp.eq.s32.totalorder %s27, 0
      %p117 = por %p115, %p116
      %s119 = sadd.s32 %s118, 1
      %p122 = scmp.eq.s32.totalorder %s21, 1
      %p123 = scmp.ne.s32.totalorder %s118, %s120
      %p124 = scmp.eq.s32.totalorder %s21, 0
      %p125 = por %p123, %p124
      %p126 = scmp.ne.s32.totalorder %s118, %s120
      %p127 = scmp.eq.s32.totalorder %s26, 1
      %p128 = por %p126, %p127
      %p129 = scmp.ne.s32.totalorder %s120, %s121
      %p130 = scmp.eq.s32.totalorder %s26, 0
      %p131 = por %p129, %p130
      %p132 = scmp.ne.s32.totalorder %s120, %s121
      %p133 = scmp.eq.s32.totalorder %s27, 1
      %p134 = por %p132, %p133
      %p136 = scmp.ne.s32.totalorder %s121, %s135
      %p137 = scmp.eq.s32.totalorder %s27, 0
      %p138 = por %p136, %p137
      %s140 = sadd.s32 %s139, 1
      %p143 = scmp.eq.s32.totalorder %s21, 1
      %p144 = scmp.ne.s32.totalorder %s139, %s141
      %p145 = scmp.eq.s32.totalorder %s21, 0
      %p146 = por %p144, %p145
      %p147 = scmp.ne.s32.totalorder %s139, %s141
      %p148 = scmp.eq.s32.totalorder %s26, 1
      %p149 = por %p147, %p148
      %p150 = scmp.ne.s32.totalorder %s141, %s142
      %p151 = scmp.eq.s32.totalorder %s26, 0
      %p152 = por %p150, %p151
      %p153 = scmp.ne.s32.totalorder %s141, %s142
      %p154 = scmp.eq.s32.totalorder %s27, 1
      %p155 = por %p153, %p154
      %p157 = scmp.ne.s32.totalorder %s142, %s156
      %p158 = scmp.eq.s32.totalorder %s27, 0
      %p159 = por %p157, %p158
      %s161 = sadd.s32 %s160, 1
      %p164 = scmp.eq.s32.totalorder %s21, 1
      %p165 = scmp.ne.s32.totalorder %s160, %s162
      %p166 = scmp.eq.s32.totalorder %s21, 0
      %p167 = por %p165, %p166
      %p168 = scmp.ne.s32.totalorder %s160, %s162
      %p169 = scmp.eq.s32.totalorder %s26, 1
      %p170 = por %p168, %p169
      %p171 = scmp.ne.s32.totalorder %s162, %s163
      %p172 = scmp.eq.s32.totalorder %s26, 0
      %p173 = por %p171, %p172
      %p174 = scmp.ne.s32.totalorder %s162, %s163
      %p175 = scmp.eq.s32.totalorder %s27, 1
      %p176 = por %p174, %p175
      %p178 = scmp.ne.s32.totalorder %s163, %s177
      %p179 = scmp.eq.s32.totalorder %s27, 0
      %p180 = por %p178, %p179
      %s182 = sadd.s32 %s181, 1
      %p185 = scmp.eq.s32.totalorder %s21, 1
      %p186 = scmp.ne.s32.totalorder %s181, %s183
      %p187 = scmp.eq.s32.totalorder %s21, 0
      %p188 = por %p186, %p187
      %p189 = scmp.ne.s32.totalorder %s181, %s183
      %p190 = scmp.eq.s32.totalorder %s26, 1
      %p191 = por %p189, %p190
      %p192 = scmp.ne.s32.totalorder %s183, %s184
      %p193 = scmp.eq.s32.totalorder %s26, 0
      %p194 = por %p192, %p193
      %p195 = scmp.ne.s32.totalorder %s183, %s184
      %p196 = scmp.eq.s32.totalorder %s27, 1
      %p197 = por %p195, %p196
      %p199 = scmp.ne.s32.totalorder %s184, %s198
      %p200 = scmp.eq.s32.totalorder %s27, 0
      %p201 = por %p199, %p200
      %s203 = sadd.s32 %s202, 1
      %p206 = scmp.eq.s32.totalorder %s21, 1
      %p207 = scmp.ne.s32.totalorder %s202, %s204
      %p208 = scmp.eq.s32.totalorder %s21, 0
      %p209 = por %p207, %p208
      %p210 = scmp.ne.s32.totalorder %s202, %s204
      %p211 = scmp.eq.s32.totalorder %s26, 1
      %p212 = por %p210, %p211
      %p213 = scmp.ne.s32.totalorder %s204, %s205
      %p214 = scmp.eq.s32.totalorder %s26, 0
      %p215 = por %p213, %p214
      %p216 = scmp.ne.s32.totalorder %s204, %s205
      %p217 = scmp.eq.s32.totalorder %s27, 1
      %p218 = por %p216, %p217
      %p220 = scmp.ne.s32.totalorder %s205, %s219
      %p221 = scmp.eq.s32.totalorder %s27, 0
      %p222 = por %p220, %p221
      %s223 = ssub.s32 %s21, %s28
      %p224 = scmp.eq.s32.totalorder %s223, 0
      %s226 = sadd.s32 %s225, 1
      %s227 = scalar_select %p224, %s225, %s226
      %p230 = pneg %p224
      %p231 = scmp.eq.s32.totalorder %s21, 1
      %p232 = por %p230, %p231
      %p233 = scmp.ne.s32.totalorder %s225, %s228
      %p234 = scmp.eq.s32.totalorder %s21, 0
      %p235 = por %p233, %p234
      %p236 = scmp.ne.s32.totalorder %s225, %s228
      %p237 = scmp.eq.s32.totalorder %s26, 1
      %p238 = por %p236, %p237
      %p239 = scmp.ne.s32.totalorder %s228, %s229
      %p240 = scmp.eq.s32.totalorder %s26, 0
      %p241 = por %p239, %p240
      %p242 = scmp.ne.s32.totalorder %s228, %s229
      %p243 = scmp.eq.s32.totalorder %s27, 1
      %p244 = por %p242, %p243
      %p246 = scmp.ne.s32.totalorder %s229, %s245
      %p247 = scmp.eq.s32.totalorder %s27, 0
      %p248 = por %p246, %p247
      %p249 = scmp.le.s32.totalorder 1, %s21
      %p250 = scmp.lt.s32.totalorder %s21, 3
      %p251 = pnand %p249, %p250
      %p252 = pneg %p251
      // Predicated region
      $region9: #{tpu_custom_call.1} parent=5 // pred_check
        _
      $region10: #{tpu_custom_call.1} parent=5 // pred_check_branch
        %254 = sbr.rel (%p251) target = $region12
      $region11: #{tpu_custom_call.1} parent=5 // pred_region
        %s255 = ssub.s32 %s21, 1
        // Predicated region
        $region13: #{tpu_custom_call.1} parent=11 // pred_check
          %p256 = pneg %p68
        $region14: #{tpu_custom_call.1} parent=11 // pred_check_branch
          %258 = sbr.rel (%p256) target = $region16
        $region15: #{tpu_custom_call.1} parent=11 // pred_region
          _
        $region16: #{tpu_custom_call.1} parent=11 // pred_fallthru
          _
        // Predicated region
        $region17: #{tpu_custom_call.1} parent=11 // pred_check
          %p259 = pneg %p89
        $region18: #{tpu_custom_call.1} parent=11 // pred_check_branch
          %261 = sbr.rel (%p259) target = $region20
        $region19: #{tpu_custom_call.1} parent=11 // pred_region
          _
        $region20: #{tpu_custom_call.1} parent=11 // pred_fallthru
          _
        // Predicated region
        $region21: #{tpu_custom_call.1} parent=11 // pred_check
          %p262 = pneg %p110
        $region22: #{tpu_custom_call.1} parent=11 // pred_check_branch
          %264 = sbr.rel (%p262) target = $region24
        $region23: #{tpu_custom_call.1} parent=11 // pred_region
          _
        $region24: #{tpu_custom_call.1} parent=11 // pred_fallthru
          _
        // Predicated region
        $region25: #{tpu_custom_call.1} parent=11 // pred_check
          %p265 = pneg %p131
        $region26: #{tpu_custom_call.1} parent=11 // pred_check_branch
          %267 = sbr.rel (%p265) target = $region28
        $region27: #{tpu_custom_call.1} parent=11 // pred_region
          _
        $region28: #{tpu_custom_call.1} parent=11 // pred_fallthru
          _
        // Predicated region
        $region29: #{tpu_custom_call.1} parent=11 // pred_check
          %p268 = pneg %p152
        $region30: #{tpu_custom_call.1} parent=11 // pred_check_branch
          %270 = sbr.rel (%p268) target = $region32
        $region31: #{tpu_custom_call.1} parent=11 // pred_region
          _
        $region32: #{tpu_custom_call.1} parent=11 // pred_fallthru
          _
        // Predicated region
        $region33: #{tpu_custom_call.1} parent=11 // pred_check
          %p271 = pneg %p173
        $region34: #{tpu_custom_call.1} parent=11 // pred_check_branch
          %273 = sbr.rel (%p271) target = $region36
        $region35: #{tpu_custom_call.1} parent=11 // pred_region
          _
        $region36: #{tpu_custom_call.1} parent=11 // pred_fallthru
          _
        // Predicated region
        $region37: #{tpu_custom_call.1} parent=11 // pred_check
          %p274 = pneg %p194
        $region38: #{tpu_custom_call.1} parent=11 // pred_check_branch
          %276 = sbr.rel (%p274) target = $region40
        $region39: #{tpu_custom_call.1} parent=11 // pred_region
          _
        $region40: #{tpu_custom_call.1} parent=11 // pred_fallthru
          _
        // Predicated region
        $region41: #{tpu_custom_call.1} parent=11 // pred_check
          %p277 = pneg %p215
        $region42: #{tpu_custom_call.1} parent=11 // pred_check_branch
          %279 = sbr.rel (%p277) target = $region44
        $region43: #{tpu_custom_call.1} parent=11 // pred_region
          _
        $region44: #{tpu_custom_call.1} parent=11 // pred_fallthru
          _
      $region12: #{tpu_custom_call.1} parent=5 // pred_fallthru
        _
      %p280 = scmp.lt.s32.totalorder %s21, 2
      // Predicated region
      $region45: #{tpu_custom_call.1} parent=5 // pred_check
        %p281 = pneg %p280
      $region46: #{tpu_custom_call.1} parent=5 // pred_check_branch
        %283 = sbr.rel (%p281) target = $region48
      $region47: #{tpu_custom_call.1} parent=5 // pred_region
        // Predicated region
        $region49: #{tpu_custom_call.1} parent=47 // pred_check
          %p284 = pneg %p41
        $region50: #{tpu_custom_call.1} parent=47 // pred_check_branch
          %286 = sbr.rel (%p284) target = $region52
        $region51: #{tpu_custom_call.1} parent=47 // pred_region
          %s287 = sand.u32 %s31, 1
          %s288 = scalar_lea.sflag [#allocation3], %s287
          %s289 = sand.u32 %s31, 1
          %s290 = smul.addr %s289, 256
          %s291 = scalar_lea.vmem [#allocation2], %s290
          %s293 = ssub.s32 4096, 4096
          %294 = vsyncadd %s288, %s293
          %s295 = smul.addr %s21, 32
          %s296 = smul.addr %s295, 128
          %s297 = scalar_lea.hbm %s0, %s296
          %s298 = sshll.u32 %s291, 4
          %s299 = int_to_ptr.vmem [resolvable:$true] %s298
          %304 = dma.hbm_to_vmem [thread:$0]  %s297, 4096, %s299, %s288, 128, 128, 8
        $region52: #{tpu_custom_call.1} parent=47 // pred_fallthru
          _
      $region48: #{tpu_custom_call.1} parent=5 // pred_fallthru
        _
      %p305 = scmp.le.s32.totalorder 1, %s21
      %p306 = scmp.lt.s32.totalorder %s21, 3
      %p307 = pnand %p305, %p306
      %p308 = pneg %p307
      // Predicated region
      $region53: #{tpu_custom_call.1} parent=5 // pred_check
        _
      $region54: #{tpu_custom_call.1} parent=5 // pred_check_branch
        %310 = sbr.rel (%p307) target = $region56
      $region55: #{tpu_custom_call.1} parent=5 // pred_region
        %s311 = ssub.s32 %s21, 1
        %s312 = sand.u32 %s34, 1
        %s313 = scalar_lea.sflag [#allocation3], %s312
        %s314 = sand.u32 %s34, 1
        %s315 = smul.addr %s314, 256
        %s316 = scalar_lea.vmem [#allocation2], %s315
        // Predicated region
        $region57: #{tpu_custom_call.1} parent=55 // pred_check
          %p317 = pneg %p47
        $region58: #{tpu_custom_call.1} parent=55 // pred_check_branch
          %319 = sbr.rel (%p317) target = $region60
        $region59: #{tpu_custom_call.1} parent=55 // pred_region
          %320 = dma.done %s313, 4096
        $region60: #{tpu_custom_call.1} parent=55 // pred_fallthru
          _
        %s321 = sand.u32 %s34, 1
        %s322 = scalar_lea.sflag [#allocation3], %s321
        %s323 = sand.u32 %s34, 1
        %s324 = smul.addr %s323, 256
        %s325 = scalar_lea.vmem [#allocation2], %s324
        %p326 = pneg %p47
        %p327 = pneg %p44
        %p328 = pneg %p68
        %p329 = pneg %p65
        %p330 = pneg %p89
        %p331 = pneg %p86
        %p332 = pneg %p110
        %p333 = pneg %p107
        %p334 = pneg %p131
        %p335 = pneg %p128
        %p336 = pneg %p152
        %p337 = pneg %p149
        %p338 = pneg %p173
        %p339 = pneg %p170
        %p340 = pneg %p194
        %p341 = pneg %p191
        %p342 = pneg %p215
        %p343 = pneg %p212
        %p344 = pneg %p241
        %p345 = pneg %p238
        %s346 = sand.u32 %s228, 1
        %s347 = scalar_lea.sflag [#allocation4], %s346
        %s348 = sand.u32 %s228, 1
        %s349 = smul.addr %s348, 256
        %s350 = scalar_lea.vmem [#allocation5], %s349
        %v352 = vld [vmem:[%s316] sm:$0xff]
        %v353 = vld [vmem:[%s316 + $0x8] sm:$0xff]
        %v354 = vld [vmem:[%s316 + $0x10] sm:$0xff]
        %v355 = vld [vmem:[%s316 + $0x18] sm:$0xff]
        %v356 = vld [vmem:[%s316 + $0x20] sm:$0xff]
        %v357 = vld [vmem:[%s316 + $0x28] sm:$0xff]
        %v358 = vld [vmem:[%s316 + $0x30] sm:$0xff]
        %v359 = vld [vmem:[%s316 + $0x38] sm:$0xff]
        %v360 = vld [vmem:[%s316 + $0x40] sm:$0xff]
        %v361 = vld [vmem:[%s316 + $0x48] sm:$0xff]
        %v362 = vld [vmem:[%s316 + $0x50] sm:$0xff]
        %v363 = vld [vmem:[%s316 + $0x58] sm:$0xff]
        %v364 = vld [vmem:[%s316 + $0x60] sm:$0xff]
        %v365 = vld [vmem:[%s316 + $0x68] sm:$0xff]
        %v366 = vld [vmem:[%s316 + $0x70] sm:$0xff]
        %v367 = vld [vmem:[%s316 + $0x78] sm:$0xff]
        %v368 = vld [vmem:[%s316 + $0x80] sm:$0xff]
        %v369 = vld [vmem:[%s316 + $0x88] sm:$0xff]
        %v370 = vld [vmem:[%s316 + $0x90] sm:$0xff]
        %v371 = vld [vmem:[%s316 + $0x98] sm:$0xff]
        %v372 = vld [vmem:[%s316 + $0xa0] sm:$0xff]
        %v373 = vld [vmem:[%s316 + $0xa8] sm:$0xff]
        %v374 = vld [vmem:[%s316 + $0xb0] sm:$0xff]
        %v375 = vld [vmem:[%s316 + $0xb8] sm:$0xff]
        %v376 = vld [vmem:[%s316 + $0xc0] sm:$0xff]
        %v377 = vld [vmem:[%s316 + $0xc8] sm:$0xff]
        %v378 = vld [vmem:[%s316 + $0xd0] sm:$0xff]
        %v379 = vld [vmem:[%s316 + $0xd8] sm:$0xff]
        %v380 = vld [vmem:[%s316 + $0xe0] sm:$0xff]
        %v381 = vld [vmem:[%s316 + $0xe8] sm:$0xff]
        %v382 = vld [vmem:[%s316 + $0xf0] sm:$0xff]
        %v383 = vld [vmem:[%s316 + $0xf8] sm:$0xff]
        %v384 = vld [vmem:[%s1] sm:$0x7]
        %v385 = vld [vmem:[%s1 + $0x4] sm:$0x7]
        %v386 = vld [vmem:[%s1 + $0x8] sm:$0x7]
        %vm420 = vcmask 1040384
        %v421 = vrot.slane 0.0, 7
        %v422 = vsel %vm420, %v421, %v421
        %v423 = vrot.slane %v352, 7
        %v424 = vrot.slane %v353, 7
        %v425 = vsel %vm420, %v423, %v424
        %v426 = vrot.slane %v354, 7
        %v427 = vrot.slane %v355, 7
        %v428 = vsel %vm420, %v426, %v427
        %v429 = vrot.slane %v356, 7
        %v430 = vrot.slane %v357, 7
        %v431 = vsel %vm420, %v429, %v430
        %v432 = vrot.slane %v358, 7
        %v433 = vrot.slane %v359, 7
        %v434 = vsel %vm420, %v432, %v433
        %v435 = vrot.slane %v360, 7
        %v436 = vrot.slane %v361, 7
        %v437 = vsel %vm420, %v435, %v436
        %v438 = vrot.slane %v362, 7
        %v439 = vrot.slane %v363, 7
        %v440 = vsel %vm420, %v438, %v439
        %v441 = vrot.slane %v364, 7
        %v442 = vrot.slane %v365, 7
        %v443 = vsel %vm420, %v441, %v442
        %v444 = vrot.slane %v366, 7
        %v445 = vrot.slane %v367, 7
        %v446 = vsel %vm420, %v444, %v445
        %v447 = vrot.slane %v368, 7
        %v448 = vrot.slane %v369, 7
        %v449 = vsel %vm420, %v447, %v448
        %v450 = vrot.slane %v370, 7
        %v451 = vrot.slane %v371, 7
        %v452 = vsel %vm420, %v450, %v451
        %v453 = vrot.slane %v372, 7
        %v454 = vrot.slane %v373, 7
        %v455 = vsel %vm420, %v453, %v454
        %v456 = vrot.slane %v374, 7
        %v457 = vrot.slane %v375, 7
        %v458 = vsel %vm420, %v456, %v457
        %v459 = vrot.slane %v376, 7
        %v460 = vrot.slane %v377, 7
        %v461 = vsel %vm420, %v459, %v460
        %v462 = vrot.slane %v378, 7
        %v463 = vrot.slane %v379, 7
        %v464 = vsel %vm420, %v462, %v463
        %v465 = vrot.slane %v380, 7
        %v466 = vrot.slane %v381, 7
        %v467 = vsel %vm420, %v465, %v466
        %v468 = vrot.slane %v382, 7
        %v469 = vrot.slane %v383, 7
        %v470 = vsel %vm420, %v468, %v469
        %v521 = vsel %vm420, 0.0, %v421
        %v522 = vsel %vm420, 0.0, %v423
        %v523 = vsel %vm420, 0.0, %v426
        %v524 = vsel %vm420, 0.0, %v429
        %v525 = vsel %vm420, 0.0, %v432
        %v526 = vsel %vm420, 0.0, %v435
        %v527 = vsel %vm420, 0.0, %v438
        %v528 = vsel %vm420, 0.0, %v441
        %v529 = vsel %vm420, 0.0, %v444
        %v530 = vsel %vm420, 0.0, %v447
        %v531 = vsel %vm420, 0.0, %v450
        %v532 = vsel %vm420, 0.0, %v453
        %v533 = vsel %vm420, 0.0, %v456
        %v534 = vsel %vm420, 0.0, %v459
        %v535 = vsel %vm420, 0.0, %v462
        %v536 = vsel %vm420, 0.0, %v465
        %v537 = vsel %vm420, 0.0, %v468
        %v538 = vsel %vm420, %v421, 0.0
        %v539 = vsel %vm420, %v424, 0.0
        %v540 = vsel %vm420, %v427, 0.0
        %v541 = vsel %vm420, %v430, 0.0
        %v542 = vsel %vm420, %v433, 0.0
        %v543 = vsel %vm420, %v436, 0.0
        %v544 = vsel %vm420, %v439, 0.0
        %v545 = vsel %vm420, %v442, 0.0
        %v546 = vsel %vm420, %v445, 0.0
        %v547 = vsel %vm420, %v448, 0.0
        %v548 = vsel %vm420, %v451, 0.0
        %v549 = vsel %vm420, %v454, 0.0
        %v550 = vsel %vm420, %v457, 0.0
        %v551 = vsel %vm420, %v460, 0.0
        %v552 = vsel %vm420, %v463, 0.0
        %v553 = vsel %vm420, %v466, 0.0
        %v554 = vsel %vm420, %v469, 0.0
        %v555 = vlaneseq
        %v556 = vshrl.u32 %v555, 7
        %v557 = vsub.s32 1, %v556
        %v558 = vrot.slane %v385, %v557
        %v559 = vmul.f32 %v522, %v558
        %v560 = vmul.f32 %v425, %v558
        %v561 = vmul.f32 %v539, %v558
        %v562 = vmul.f32 %v523, %v558
        %v563 = vmul.f32 %v428, %v558
        %v564 = vmul.f32 %v540, %v558
        %v565 = vmul.f32 %v524, %v558
        %v566 = vmul.f32 %v431, %v558
        %v567 = vmul.f32 %v541, %v558
        %v568 = vmul.f32 %v525, %v558
        %v569 = vmul.f32 %v434, %v558
        %v570 = vmul.f32 %v542, %v558
        %v571 = vmul.f32 %v526, %v558
        %v572 = vmul.f32 %v437, %v558
        %v573 = vmul.f32 %v543, %v558
        %v574 = vmul.f32 %v527, %v558
        %v575 = vmul.f32 %v440, %v558
        %v576 = vmul.f32 %v544, %v558
        %v577 = vmul.f32 %v528, %v558
        %v578 = vmul.f32 %v443, %v558
        %v579 = vmul.f32 %v545, %v558
        %v580 = vmul.f32 %v529, %v558
        %v581 = vmul.f32 %v446, %v558
        %v582 = vmul.f32 %v546, %v558
        %v583 = vmul.f32 %v530, %v558
        %v584 = vmul.f32 %v449, %v558
        %v585 = vmul.f32 %v547, %v558
        %v586 = vmul.f32 %v531, %v558
        %v587 = vmul.f32 %v452, %v558
        %v588 = vmul.f32 %v548, %v558
        %v589 = vmul.f32 %v532, %v558
        %v590 = vmul.f32 %v455, %v558
        %v591 = vmul.f32 %v549, %v558
        %v592 = vmul.f32 %v533, %v558
        %v593 = vmul.f32 %v458, %v558
        %v594 = vmul.f32 %v550, %v558
        %v595 = vmul.f32 %v534, %v558
        %v596 = vmul.f32 %v461, %v558
        %v597 = vmul.f32 %v551, %v558
        %v598 = vmul.f32 %v535, %v558
        %v599 = vmul.f32 %v464, %v558
        %v600 = vmul.f32 %v552, %v558
        %v601 = vmul.f32 %v536, %v558
        %v602 = vmul.f32 %v467, %v558
        %v603 = vmul.f32 %v553, %v558
        %v604 = vmul.f32 %v537, %v558
        %v605 = vmul.f32 %v470, %v558
        %v606 = vmul.f32 %v554, %v558
        %v607 = vlaneseq
        %v608 = vshrl.u32 %v607, 7
        %v609 = vsub.s32 0, %v608
        %v610 = vrot.slane %v384, %v609
        %v611 = vmul.f32 %v521, %v610
        %v612 = vmul.f32 %v422, %v610
        %v613 = vmul.f32 %v522, %v610
        %v614 = vmul.f32 %v425, %v610
        %v615 = vmul.f32 %v523, %v610
        %v616 = vmul.f32 %v428, %v610
        %v617 = vmul.f32 %v524, %v610
        %v618 = vmul.f32 %v431, %v610
        %v619 = vmul.f32 %v525, %v610
        %v620 = vmul.f32 %v434, %v610
        %v621 = vmul.f32 %v526, %v610
        %v622 = vmul.f32 %v437, %v610
        %v623 = vmul.f32 %v527, %v610
        %v624 = vmul.f32 %v440, %v610
        %v625 = vmul.f32 %v528, %v610
        %v626 = vmul.f32 %v443, %v610
        %v627 = vmul.f32 %v529, %v610
        %v628 = vmul.f32 %v446, %v610
        %v629 = vmul.f32 %v530, %v610
        %v630 = vmul.f32 %v449, %v610
        %v631 = vmul.f32 %v531, %v610
        %v632 = vmul.f32 %v452, %v610
        %v633 = vmul.f32 %v532, %v610
        %v634 = vmul.f32 %v455, %v610
        %v635 = vmul.f32 %v533, %v610
        %v636 = vmul.f32 %v458, %v610
        %v637 = vmul.f32 %v534, %v610
        %v638 = vmul.f32 %v461, %v610
        %v639 = vmul.f32 %v535, %v610
        %v640 = vmul.f32 %v464, %v610
        %v641 = vmul.f32 %v536, %v610
        %v642 = vmul.f32 %v467, %v610
        %v675 = vrot.slane %v611, 7
        %v676 = vrot.slane %v612, 7
        %v677 = vsel %vm420, %v675, %v676
        %v678 = vrot.slane %v613, 7
        %v679 = vrot.slane %v614, 7
        %v680 = vsel %vm420, %v678, %v679
        %v681 = vrot.slane %v615, 7
        %v682 = vrot.slane %v616, 7
        %v683 = vsel %vm420, %v681, %v682
        %v684 = vrot.slane %v617, 7
        %v685 = vrot.slane %v618, 7
        %v686 = vsel %vm420, %v684, %v685
        %v687 = vrot.slane %v619, 7
        %v688 = vrot.slane %v620, 7
        %v689 = vsel %vm420, %v687, %v688
        %v690 = vrot.slane %v621, 7
        %v691 = vrot.slane %v622, 7
        %v692 = vsel %vm420, %v690, %v691
        %v693 = vrot.slane %v623, 7
        %v694 = vrot.slane %v624, 7
        %v695 = vsel %vm420, %v693, %v694
        %v696 = vrot.slane %v625, 7
        %v697 = vrot.slane %v626, 7
        %v698 = vsel %vm420, %v696, %v697
        %v699 = vrot.slane %v627, 7
        %v700 = vrot.slane %v628, 7
        %v701 = vsel %vm420, %v699, %v700
        %v702 = vrot.slane %v629, 7
        %v703 = vrot.slane %v630, 7
        %v704 = vsel %vm420, %v702, %v703
        %v705 = vrot.slane %v631, 7
        %v706 = vrot.slane %v632, 7
        %v707 = vsel %vm420, %v705, %v706
        %v708 = vrot.slane %v633, 7
        %v709 = vrot.slane %v634, 7
        %v710 = vsel %vm420, %v708, %v709
        %v711 = vrot.slane %v635, 7
        %v712 = vrot.slane %v636, 7
        %v713 = vsel %vm420, %v711, %v712
        %v714 = vrot.slane %v637, 7
        %v715 = vrot.slane %v638, 7
        %v716 = vsel %vm420, %v714, %v715
        %v717 = vrot.slane %v639, 7
        %v718 = vrot.slane %v640, 7
        %v719 = vsel %vm420, %v717, %v718
        %v720 = vrot.slane %v641, 7
        %v721 = vrot.slane %v642, 7
        %v722 = vsel %vm420, %v720, %v721
        %v771 = vadd.f32 %v559, %v675
        %v772 = vadd.f32 %v560, %v677
        %v773 = vadd.f32 %v561, %v676
        %v774 = vadd.f32 %v562, %v678
        %v775 = vadd.f32 %v563, %v680
        %v776 = vadd.f32 %v564, %v679
        %v777 = vadd.f32 %v565, %v681
        %v778 = vadd.f32 %v566, %v683
        %v779 = vadd.f32 %v567, %v682
        %v780 = vadd.f32 %v568, %v684
        %v781 = vadd.f32 %v569, %v686
        %v782 = vadd.f32 %v570, %v685
        %v783 = vadd.f32 %v571, %v687
        %v784 = vadd.f32 %v572, %v689
        %v785 = vadd.f32 %v573, %v688
        %v786 = vadd.f32 %v574, %v690
        %v787 = vadd.f32 %v575, %v692
        %v788 = vadd.f32 %v576, %v691
        %v789 = vadd.f32 %v577, %v693
        %v790 = vadd.f32 %v578, %v695
        %v791 = vadd.f32 %v579, %v694
        %v792 = vadd.f32 %v580, %v696
        %v793 = vadd.f32 %v581, %v698
        %v794 = vadd.f32 %v582, %v697
        %v795 = vadd.f32 %v583, %v699
        %v796 = vadd.f32 %v584, %v701
        %v797 = vadd.f32 %v585, %v700
        %v798 = vadd.f32 %v586, %v702
        %v799 = vadd.f32 %v587, %v704
        %v800 = vadd.f32 %v588, %v703
        %v801 = vadd.f32 %v589, %v705
        %v802 = vadd.f32 %v590, %v707
        %v803 = vadd.f32 %v591, %v706
        %v804 = vadd.f32 %v592, %v708
        %v805 = vadd.f32 %v593, %v710
        %v806 = vadd.f32 %v594, %v709
        %v807 = vadd.f32 %v595, %v711
        %v808 = vadd.f32 %v596, %v713
        %v809 = vadd.f32 %v597, %v712
        %v810 = vadd.f32 %v598, %v714
        %v811 = vadd.f32 %v599, %v716
        %v812 = vadd.f32 %v600, %v715
        %v813 = vadd.f32 %v601, %v717
        %v814 = vadd.f32 %v602, %v719
        %v815 = vadd.f32 %v603, %v718
        %v816 = vadd.f32 %v604, %v720
        %v817 = vadd.f32 %v605, %v722
        %v818 = vadd.f32 %v606, %v721
        %v819 = vlaneseq
        %v820 = vshrl.u32 %v819, 7
        %v821 = vsub.s32 1, %v820
        %v822 = vrot.slane %v384, %v821
        %v823 = vmul.f32 %v521, %v822
        %v824 = vmul.f32 %v422, %v822
        %v825 = vmul.f32 %v538, %v822
        %v826 = vmul.f32 %v522, %v822
        %v827 = vmul.f32 %v425, %v822
        %v828 = vmul.f32 %v539, %v822
        %v829 = vmul.f32 %v523, %v822
        %v830 = vmul.f32 %v428, %v822
        %v831 = vmul.f32 %v540, %v822
        %v832 = vmul.f32 %v524, %v822
        %v833 = vmul.f32 %v431, %v822
        %v834 = vmul.f32 %v541, %v822
        %v835 = vmul.f32 %v525, %v822
        %v836 = vmul.f32 %v434, %v822
        %v837 = vmul.f32 %v542, %v822
        %v838 = vmul.f32 %v526, %v822
        %v839 = vmul.f32 %v437, %v822
        %v840 = vmul.f32 %v543, %v822
        %v841 = vmul.f32 %v527, %v822
        %v842 = vmul.f32 %v440, %v822
        %v843 = vmul.f32 %v544, %v822
        %v844 = vmul.f32 %v528, %v822
        %v845 = vmul.f32 %v443, %v822
        %v846 = vmul.f32 %v545, %v822
        %v847 = vmul.f32 %v529, %v822
        %v848 = vmul.f32 %v446, %v822
        %v849 = vmul.f32 %v546, %v822
        %v850 = vmul.f32 %v530, %v822
        %v851 = vmul.f32 %v449, %v822
        %v852 = vmul.f32 %v547, %v822
        %v853 = vmul.f32 %v531, %v822
        %v854 = vmul.f32 %v452, %v822
        %v855 = vmul.f32 %v548, %v822
        %v856 = vmul.f32 %v532, %v822
        %v857 = vmul.f32 %v455, %v822
        %v858 = vmul.f32 %v549, %v822
        %v859 = vmul.f32 %v533, %v822
        %v860 = vmul.f32 %v458, %v822
        %v861 = vmul.f32 %v550, %v822
        %v862 = vmul.f32 %v534, %v822
        %v863 = vmul.f32 %v461, %v822
        %v864 = vmul.f32 %v551, %v822
        %v865 = vmul.f32 %v535, %v822
        %v866 = vmul.f32 %v464, %v822
        %v867 = vmul.f32 %v552, %v822
        %v868 = vmul.f32 %v536, %v822
        %v869 = vmul.f32 %v467, %v822
        %v870 = vmul.f32 %v553, %v822
        %v871 = vadd.f32 %v771, %v823
        %v872 = vadd.f32 %v772, %v824
        %v873 = vadd.f32 %v773, %v825
        %v874 = vadd.f32 %v774, %v826
        %v875 = vadd.f32 %v775, %v827
        %v876 = vadd.f32 %v776, %v828
        %v877 = vadd.f32 %v777, %v829
        %v878 = vadd.f32 %v778, %v830
        %v879 = vadd.f32 %v779, %v831
        %v880 = vadd.f32 %v780, %v832
        %v881 = vadd.f32 %v781, %v833
        %v882 = vadd.f32 %v782, %v834
        %v883 = vadd.f32 %v783, %v835
        %v884 = vadd.f32 %v784, %v836
        %v885 = vadd.f32 %v785, %v837
        %v886 = vadd.f32 %v786, %v838
        %v887 = vadd.f32 %v787, %v839
        %v888 = vadd.f32 %v788, %v840
        %v889 = vadd.f32 %v789, %v841
        %v890 = vadd.f32 %v790, %v842
        %v891 = vadd.f32 %v791, %v843
        %v892 = vadd.f32 %v792, %v844
        %v893 = vadd.f32 %v793, %v845
        %v894 = vadd.f32 %v794, %v846
        %v895 = vadd.f32 %v795, %v847
        %v896 = vadd.f32 %v796, %v848
        %v897 = vadd.f32 %v797, %v849
        %v898 = vadd.f32 %v798, %v850
        %v899 = vadd.f32 %v799, %v851
        %v900 = vadd.f32 %v800, %v852
        %v901 = vadd.f32 %v801, %v853
        %v902 = vadd.f32 %v802, %v854
        %v903 = vadd.f32 %v803, %v855
        %v904 = vadd.f32 %v804, %v856
        %v905 = vadd.f32 %v805, %v857
        %v906 = vadd.f32 %v806, %v858
        %v907 = vadd.f32 %v807, %v859
        %v908 = vadd.f32 %v808, %v860
        %v909 = vadd.f32 %v809, %v861
        %v910 = vadd.f32 %v810, %v862
        %v911 = vadd.f32 %v811, %v863
        %v912 = vadd.f32 %v812, %v864
        %v913 = vadd.f32 %v813, %v865
        %v914 = vadd.f32 %v814, %v866
        %v915 = vadd.f32 %v815, %v867
        %v916 = vadd.f32 %v816, %v868
        %v917 = vadd.f32 %v817, %v869
        %v918 = vadd.f32 %v818, %v870
        %v919 = vlaneseq
        %v920 = vshrl.u32 %v919, 7
        %v921 = vsub.s32 2, %v920
        %v922 = vrot.slane %v384, %v921
        %v923 = vmul.f32 %v521, %v922
        %v924 = vmul.f32 %v422, %v922
        %v925 = vmul.f32 %v538, %v922
        %v926 = vmul.f32 %v522, %v922
        %v927 = vmul.f32 %v425, %v922
        %v928 = vmul.f32 %v539, %v922
        %v929 = vmul.f32 %v523, %v922
        %v930 = vmul.f32 %v428, %v922
        %v931 = vmul.f32 %v540, %v922
        %v932 = vmul.f32 %v524, %v922
        %v933 = vmul.f32 %v431, %v922
        %v934 = vmul.f32 %v541, %v922
        %v935 = vmul.f32 %v525, %v922
        %v936 = vmul.f32 %v434, %v922
        %v937 = vmul.f32 %v542, %v922
        %v938 = vmul.f32 %v526, %v922
        %v939 = vmul.f32 %v437, %v922
        %v940 = vmul.f32 %v543, %v922
        %v941 = vmul.f32 %v527, %v922
        %v942 = vmul.f32 %v440, %v922
        %v943 = vmul.f32 %v544, %v922
        %v944 = vmul.f32 %v528, %v922
        %v945 = vmul.f32 %v443, %v922
        %v946 = vmul.f32 %v545, %v922
        %v947 = vmul.f32 %v529, %v922
        %v948 = vmul.f32 %v446, %v922
        %v949 = vmul.f32 %v546, %v922
        %v950 = vmul.f32 %v530, %v922
        %v951 = vmul.f32 %v449, %v922
        %v952 = vmul.f32 %v547, %v922
        %v953 = vmul.f32 %v531, %v922
        %v954 = vmul.f32 %v452, %v922
        %v955 = vmul.f32 %v548, %v922
        %v956 = vmul.f32 %v532, %v922
        %v957 = vmul.f32 %v455, %v922
        %v958 = vmul.f32 %v549, %v922
        %v959 = vmul.f32 %v533, %v922
        %v960 = vmul.f32 %v458, %v922
        %v961 = vmul.f32 %v550, %v922
        %v962 = vmul.f32 %v534, %v922
        %v963 = vmul.f32 %v461, %v922
        %v964 = vmul.f32 %v551, %v922
        %v965 = vmul.f32 %v535, %v922
        %v966 = vmul.f32 %v464, %v922
        %v967 = vmul.f32 %v552, %v922
        %v968 = vmul.f32 %v536, %v922
        %v969 = vmul.f32 %v467, %v922
        %v970 = vmul.f32 %v553, %v922
        %vm1019 = vcmask 1046528
        %v1020 = vrot.slane %v923, 1
        %v1021 = vrot.slane %v924, 1
        %v1022 = vsel %vm1019, %v1020, %v1021
        %v1023 = vrot.slane %v925, 1
        %v1024 = vsel %vm1019, %v1021, %v1023
        %v1025 = vrot.slane %v926, 1
        %v1026 = vrot.slane %v927, 1
        %v1027 = vsel %vm1019, %v1025, %v1026
        %v1028 = vrot.slane %v928, 1
        %v1029 = vsel %vm1019, %v1026, %v1028
        %v1030 = vrot.slane %v929, 1
        %v1031 = vrot.slane %v930, 1
        %v1032 = vsel %vm1019, %v1030, %v1031
        %v1033 = vrot.slane %v931, 1
        %v1034 = vsel %vm1019, %v1031, %v1033
        %v1035 = vrot.slane %v932, 1
        %v1036 = vrot.slane %v933, 1
        %v1037 = vsel %vm1019, %v1035, %v1036
        %v1038 = vrot.slane %v934, 1
        %v1039 = vsel %vm1019, %v1036, %v1038
        %v1040 = vrot.slane %v935, 1
        %v1041 = vrot.slane %v936, 1
        %v1042 = vsel %vm1019, %v1040, %v1041
        %v1043 = vrot.slane %v937, 1
        %v1044 = vsel %vm1019, %v1041, %v1043
        %v1045 = vrot.slane %v938, 1
        %v1046 = vrot.slane %v939, 1
        %v1047 = vsel %vm1019, %v1045, %v1046
        %v1048 = vrot.slane %v940, 1
        %v1049 = vsel %vm1019, %v1046, %v1048
        %v1050 = vrot.slane %v941, 1
        %v1051 = vrot.slane %v942, 1
        %v1052 = vsel %vm1019, %v1050, %v1051
        %v1053 = vrot.slane %v943, 1
        %v1054 = vsel %vm1019, %v1051, %v1053
        %v1055 = vrot.slane %v944, 1
        %v1056 = vrot.slane %v945, 1
        %v1057 = vsel %vm1019, %v1055, %v1056
        %v1058 = vrot.slane %v946, 1
        %v1059 = vsel %vm1019, %v1056, %v1058
        %v1060 = vrot.slane %v947, 1
        %v1061 = vrot.slane %v948, 1
        %v1062 = vsel %vm1019, %v1060, %v1061
        %v1063 = vrot.slane %v949, 1
        %v1064 = vsel %vm1019, %v1061, %v1063
        %v1065 = vrot.slane %v950, 1
        %v1066 = vrot.slane %v951, 1
        %v1067 = vsel %vm1019, %v1065, %v1066
        %v1068 = vrot.slane %v952, 1
        %v1069 = vsel %vm1019, %v1066, %v1068
        %v1070 = vrot.slane %v953, 1
        %v1071 = vrot.slane %v954, 1
        %v1072 = vsel %vm1019, %v1070, %v1071
        %v1073 = vrot.slane %v955, 1
        %v1074 = vsel %vm1019, %v1071, %v1073
        %v1075 = vrot.slane %v956, 1
        %v1076 = vrot.slane %v957, 1
        %v1077 = vsel %vm1019, %v1075, %v1076
        %v1078 = vrot.slane %v958, 1
        %v1079 = vsel %vm1019, %v1076, %v1078
        %v1080 = vrot.slane %v959, 1
        %v1081 = vrot.slane %v960, 1
        %v1082 = vsel %vm1019, %v1080, %v1081
        %v1083 = vrot.slane %v961, 1
        %v1084 = vsel %vm1019, %v1081, %v1083
        %v1085 = vrot.slane %v962, 1
        %v1086 = vrot.slane %v963, 1
        %v1087 = vsel %vm1019, %v1085, %v1086
        %v1088 = vrot.slane %v964, 1
        %v1089 = vsel %vm1019, %v1086, %v1088
        %v1090 = vrot.slane %v965, 1
        %v1091 = vrot.slane %v966, 1
        %v1092 = vsel %vm1019, %v1090, %v1091
        %v1093 = vrot.slane %v967, 1
        %v1094 = vsel %vm1019, %v1091, %v1093
        %v1095 = vrot.slane %v968, 1
        %v1096 = vrot.slane %v969, 1
        %v1097 = vsel %vm1019, %v1095, %v1096
        %v1098 = vrot.slane %v970, 1
        %v1099 = vsel %vm1019, %v1096, %v1098
        %v1148 = vadd.f32 %v871, %v1022
        %v1149 = vadd.f32 %v872, %v1024
        %v1150 = vadd.f32 %v873, %v1023
        %v1151 = vadd.f32 %v874, %v1027
        %v1152 = vadd.f32 %v875, %v1029
        %v1153 = vadd.f32 %v876, %v1028
        %v1154 = vadd.f32 %v877, %v1032
        %v1155 = vadd.f32 %v878, %v1034
        %v1156 = vadd.f32 %v879, %v1033
        %v1157 = vadd.f32 %v880, %v1037
        %v1158 = vadd.f32 %v881, %v1039
        %v1159 = vadd.f32 %v882, %v1038
        %v1160 = vadd.f32 %v883, %v1042
        %v1161 = vadd.f32 %v884, %v1044
        %v1162 = vadd.f32 %v885, %v1043
        %v1163 = vadd.f32 %v886, %v1047
        %v1164 = vadd.f32 %v887, %v1049
        %v1165 = vadd.f32 %v888, %v1048
        %v1166 = vadd.f32 %v889, %v1052
        %v1167 = vadd.f32 %v890, %v1054
        %v1168 = vadd.f32 %v891, %v1053
        %v1169 = vadd.f32 %v892, %v1057
        %v1170 = vadd.f32 %v893, %v1059
        %v1171 = vadd.f32 %v894, %v1058
        %v1172 = vadd.f32 %v895, %v1062
        %v1173 = vadd.f32 %v896, %v1064
        %v1174 = vadd.f32 %v897, %v1063
        %v1175 = vadd.f32 %v898, %v1067
        %v1176 = vadd.f32 %v899, %v1069
        %v1177 = vadd.f32 %v900, %v1068
        %v1178 = vadd.f32 %v901, %v1072
        %v1179 = vadd.f32 %v902, %v1074
        %v1180 = vadd.f32 %v903, %v1073
        %v1181 = vadd.f32 %v904, %v1077
        %v1182 = vadd.f32 %v905, %v1079
        %v1183 = vadd.f32 %v906, %v1078
        %v1184 = vadd.f32 %v907, %v1082
        %v1185 = vadd.f32 %v908, %v1084
        %v1186 = vadd.f32 %v909, %v1083
        %v1187 = vadd.f32 %v910, %v1087
        %v1188 = vadd.f32 %v911, %v1089
        %v1189 = vadd.f32 %v912, %v1088
        %v1190 = vadd.f32 %v913, %v1092
        %v1191 = vadd.f32 %v914, %v1094
        %v1192 = vadd.f32 %v915, %v1093
        %v1193 = vadd.f32 %v916, %v1097
        %v1194 = vadd.f32 %v917, %v1099
        %v1195 = vadd.f32 %v918, %v1098
        %v1196 = vlaneseq
        %v1197 = vshrl.u32 %v1196, 7
        %v1198 = vsub.s32 0, %v1197
        %v1199 = vrot.slane %v385, %v1198
        %v1200 = vmul.f32 %v522, %v1199
        %v1201 = vmul.f32 %v425, %v1199
        %v1202 = vmul.f32 %v523, %v1199
        %v1203 = vmul.f32 %v428, %v1199
        %v1204 = vmul.f32 %v524, %v1199
        %v1205 = vmul.f32 %v431, %v1199
        %v1206 = vmul.f32 %v525, %v1199
        %v1207 = vmul.f32 %v434, %v1199
        %v1208 = vmul.f32 %v526, %v1199
        %v1209 = vmul.f32 %v437, %v1199
        %v1210 = vmul.f32 %v527, %v1199
        %v1211 = vmul.f32 %v440, %v1199
        %v1212 = vmul.f32 %v528, %v1199
        %v1213 = vmul.f32 %v443, %v1199
        %v1214 = vmul.f32 %v529, %v1199
        %v1215 = vmul.f32 %v446, %v1199
        %v1216 = vmul.f32 %v530, %v1199
        %v1217 = vmul.f32 %v449, %v1199
        %v1218 = vmul.f32 %v531, %v1199
        %v1219 = vmul.f32 %v452, %v1199
        %v1220 = vmul.f32 %v532, %v1199
        %v1221 = vmul.f32 %v455, %v1199
        %v1222 = vmul.f32 %v533, %v1199
        %v1223 = vmul.f32 %v458, %v1199
        %v1224 = vmul.f32 %v534, %v1199
        %v1225 = vmul.f32 %v461, %v1199
        %v1226 = vmul.f32 %v535, %v1199
        %v1227 = vmul.f32 %v464, %v1199
        %v1228 = vmul.f32 %v536, %v1199
        %v1229 = vmul.f32 %v467, %v1199
        %v1230 = vmul.f32 %v537, %v1199
        %v1231 = vmul.f32 %v470, %v1199
        %v1264 = vrot.slane %v1200, 7
        %v1265 = vrot.slane %v1201, 7
        %v1266 = vsel %vm420, %v1264, %v1265
        %v1267 = vrot.slane %v1202, 7
        %v1268 = vrot.slane %v1203, 7
        %v1269 = vsel %vm420, %v1267, %v1268
        %v1270 = vrot.slane %v1204, 7
        %v1271 = vrot.slane %v1205, 7
        %v1272 = vsel %vm420, %v1270, %v1271
        %v1273 = vrot.slane %v1206, 7
        %v1274 = vrot.slane %v1207, 7
        %v1275 = vsel %vm420, %v1273, %v1274
        %v1276 = vrot.slane %v1208, 7
        %v1277 = vrot.slane %v1209, 7
        %v1278 = vsel %vm420, %v1276, %v1277
        %v1279 = vrot.slane %v1210, 7
        %v1280 = vrot.slane %v1211, 7
        %v1281 = vsel %vm420, %v1279, %v1280
        %v1282 = vrot.slane %v1212, 7
        %v1283 = vrot.slane %v1213, 7
        %v1284 = vsel %vm420, %v1282, %v1283
        %v1285 = vrot.slane %v1214, 7
        %v1286 = vrot.slane %v1215, 7
        %v1287 = vsel %vm420, %v1285, %v1286
        %v1288 = vrot.slane %v1216, 7
        %v1289 = vrot.slane %v1217, 7
        %v1290 = vsel %vm420, %v1288, %v1289
        %v1291 = vrot.slane %v1218, 7
        %v1292 = vrot.slane %v1219, 7
        %v1293 = vsel %vm420, %v1291, %v1292
        %v1294 = vrot.slane %v1220, 7
        %v1295 = vrot.slane %v1221, 7
        %v1296 = vsel %vm420, %v1294, %v1295
        %v1297 = vrot.slane %v1222, 7
        %v1298 = vrot.slane %v1223, 7
        %v1299 = vsel %vm420, %v1297, %v1298
        %v1300 = vrot.slane %v1224, 7
        %v1301 = vrot.slane %v1225, 7
        %v1302 = vsel %vm420, %v1300, %v1301
        %v1303 = vrot.slane %v1226, 7
        %v1304 = vrot.slane %v1227, 7
        %v1305 = vsel %vm420, %v1303, %v1304
        %v1306 = vrot.slane %v1228, 7
        %v1307 = vrot.slane %v1229, 7
        %v1308 = vsel %vm420, %v1306, %v1307
        %v1309 = vrot.slane %v1230, 7
        %v1310 = vrot.slane %v1231, 7
        %v1311 = vsel %vm420, %v1309, %v1310
        %v1360 = vadd.f32 %v1148, %v1264
        %v1361 = vadd.f32 %v1149, %v1266
        %v1362 = vadd.f32 %v1150, %v1265
        %v1363 = vadd.f32 %v1151, %v1267
        %v1364 = vadd.f32 %v1152, %v1269
        %v1365 = vadd.f32 %v1153, %v1268
        %v1366 = vadd.f32 %v1154, %v1270
        %v1367 = vadd.f32 %v1155, %v1272
        %v1368 = vadd.f32 %v1156, %v1271
        %v1369 = vadd.f32 %v1157, %v1273
        %v1370 = vadd.f32 %v1158, %v1275
        %v1371 = vadd.f32 %v1159, %v1274
        %v1372 = vadd.f32 %v1160, %v1276
        %v1373 = vadd.f32 %v1161, %v1278
        %v1374 = vadd.f32 %v1162, %v1277
        %v1375 = vadd.f32 %v1163, %v1279
        %v1376 = vadd.f32 %v1164, %v1281
        %v1377 = vadd.f32 %v1165, %v1280
        %v1378 = vadd.f32 %v1166, %v1282
        %v1379 = vadd.f32 %v1167, %v1284
        %v1380 = vadd.f32 %v1168, %v1283
        %v1381 = vadd.f32 %v1169, %v1285
        %v1382 = vadd.f32 %v1170, %v1287
        %v1383 = vadd.f32 %v1171, %v1286
        %v1384 = vadd.f32 %v1172, %v1288
        %v1385 = vadd.f32 %v1173, %v1290
        %v1386 = vadd.f32 %v1174, %v1289
        %v1387 = vadd.f32 %v1175, %v1291
        %v1388 = vadd.f32 %v1176, %v1293
        %v1389 = vadd.f32 %v1177, %v1292
        %v1390 = vadd.f32 %v1178, %v1294
        %v1391 = vadd.f32 %v1179, %v1296
        %v1392 = vadd.f32 %v1180, %v1295
        %v1393 = vadd.f32 %v1181, %v1297
        %v1394 = vadd.f32 %v1182, %v1299
        %v1395 = vadd.f32 %v1183, %v1298
        %v1396 = vadd.f32 %v1184, %v1300
        %v1397 = vadd.f32 %v1185, %v1302
        %v1398 = vadd.f32 %v1186, %v1301
        %v1399 = vadd.f32 %v1187, %v1303
        %v1400 = vadd.f32 %v1188, %v1305
        %v1401 = vadd.f32 %v1189, %v1304
        %v1402 = vadd.f32 %v1190, %v1306
        %v1403 = vadd.f32 %v1191, %v1308
        %v1404 = vadd.f32 %v1192, %v1307
        %v1405 = vadd.f32 %v1193, %v1309
        %v1406 = vadd.f32 %v1194, %v1311
        %v1407 = vadd.f32 %v1195, %v1310
        %v1408 = vlaneseq
        %v1409 = vshrl.u32 %v1408, 7
        %v1410 = vsub.s32 2, %v1409
        %v1411 = vrot.slane %v385, %v1410
        %v1412 = vmul.f32 %v522, %v1411
        %v1413 = vmul.f32 %v425, %v1411
        %v1414 = vmul.f32 %v539, %v1411
        %v1415 = vmul.f32 %v523, %v1411
        %v1416 = vmul.f32 %v428, %v1411
        %v1417 = vmul.f32 %v540, %v1411
        %v1418 = vmul.f32 %v524, %v1411
        %v1419 = vmul.f32 %v431, %v1411
        %v1420 = vmul.f32 %v541, %v1411
        %v1421 = vmul.f32 %v525, %v1411
        %v1422 = vmul.f32 %v434, %v1411
        %v1423 = vmul.f32 %v542, %v1411
        %v1424 = vmul.f32 %v526, %v1411
        %v1425 = vmul.f32 %v437, %v1411
        %v1426 = vmul.f32 %v543, %v1411
        %v1427 = vmul.f32 %v527, %v1411
        %v1428 = vmul.f32 %v440, %v1411
        %v1429 = vmul.f32 %v544, %v1411
        %v1430 = vmul.f32 %v528, %v1411
        %v1431 = vmul.f32 %v443, %v1411
        %v1432 = vmul.f32 %v545, %v1411
        %v1433 = vmul.f32 %v529, %v1411
        %v1434 = vmul.f32 %v446, %v1411
        %v1435 = vmul.f32 %v546, %v1411
        %v1436 = vmul.f32 %v530, %v1411
        %v1437 = vmul.f32 %v449, %v1411
        %v1438 = vmul.f32 %v547, %v1411
        %v1439 = vmul.f32 %v531, %v1411
        %v1440 = vmul.f32 %v452, %v1411
        %v1441 = vmul.f32 %v548, %v1411
        %v1442 = vmul.f32 %v532, %v1411
        %v1443 = vmul.f32 %v455, %v1411
        %v1444 = vmul.f32 %v549, %v1411
        %v1445 = vmul.f32 %v533, %v1411
        %v1446 = vmul.f32 %v458, %v1411
        %v1447 = vmul.f32 %v550, %v1411
        %v1448 = vmul.f32 %v534, %v1411
        %v1449 = vmul.f32 %v461, %v1411
        %v1450 = vmul.f32 %v551, %v1411
        %v1451 = vmul.f32 %v535, %v1411
        %v1452 = vmul.f32 %v464, %v1411
        %v1453 = vmul.f32 %v552, %v1411
        %v1454 = vmul.f32 %v536, %v1411
        %v1455 = vmul.f32 %v467, %v1411
        %v1456 = vmul.f32 %v553, %v1411
        %v1457 = vmul.f32 %v537, %v1411
        %v1458 = vmul.f32 %v470, %v1411
        %v1459 = vmul.f32 %v554, %v1411
        %v1508 = vrot.slane %v1412, 1
        %v1509 = vrot.slane %v1413, 1
        %v1510 = vsel %vm1019, %v1508, %v1509
        %v1511 = vrot.slane %v1414, 1
        %v1512 = vsel %vm1019, %v1509, %v1511
        %v1513 = vrot.slane %v1415, 1
        %v1514 = vrot.slane %v1416, 1
        %v1515 = vsel %vm1019, %v1513, %v1514
        %v1516 = vrot.slane %v1417, 1
        %v1517 = vsel %vm1019, %v1514, %v1516
        %v1518 = vrot.slane %v1418, 1
        %v1519 = vrot.slane %v1419, 1
        %v1520 = vsel %vm1019, %v1518, %v1519
        %v1521 = vrot.slane %v1420, 1
        %v1522 = vsel %vm1019, %v1519, %v1521
        %v1523 = vrot.slane %v1421, 1
        %v1524 = vrot.slane %v1422, 1
        %v1525 = vsel %vm1019, %v1523, %v1524
        %v1526 = vrot.slane %v1423, 1
        %v1527 = vsel %vm1019, %v1524, %v1526
        %v1528 = vrot.slane %v1424, 1
        %v1529 = vrot.slane %v1425, 1
        %v1530 = vsel %vm1019, %v1528, %v1529
        %v1531 = vrot.slane %v1426, 1
        %v1532 = vsel %vm1019, %v1529, %v1531
        %v1533 = vrot.slane %v1427, 1
        %v1534 = vrot.slane %v1428, 1
        %v1535 = vsel %vm1019, %v1533, %v1534
        %v1536 = vrot.slane %v1429, 1
        %v1537 = vsel %vm1019, %v1534, %v1536
        %v1538 = vrot.slane %v1430, 1
        %v1539 = vrot.slane %v1431, 1
        %v1540 = vsel %vm1019, %v1538, %v1539
        %v1541 = vrot.slane %v1432, 1
        %v1542 = vsel %vm1019, %v1539, %v1541
        %v1543 = vrot.slane %v1433, 1
        %v1544 = vrot.slane %v1434, 1
        %v1545 = vsel %vm1019, %v1543, %v1544
        %v1546 = vrot.slane %v1435, 1
        %v1547 = vsel %vm1019, %v1544, %v1546
        %v1548 = vrot.slane %v1436, 1
        %v1549 = vrot.slane %v1437, 1
        %v1550 = vsel %vm1019, %v1548, %v1549
        %v1551 = vrot.slane %v1438, 1
        %v1552 = vsel %vm1019, %v1549, %v1551
        %v1553 = vrot.slane %v1439, 1
        %v1554 = vrot.slane %v1440, 1
        %v1555 = vsel %vm1019, %v1553, %v1554
        %v1556 = vrot.slane %v1441, 1
        %v1557 = vsel %vm1019, %v1554, %v1556
        %v1558 = vrot.slane %v1442, 1
        %v1559 = vrot.slane %v1443, 1
        %v1560 = vsel %vm1019, %v1558, %v1559
        %v1561 = vrot.slane %v1444, 1
        %v1562 = vsel %vm1019, %v1559, %v1561
        %v1563 = vrot.slane %v1445, 1
        %v1564 = vrot.slane %v1446, 1
        %v1565 = vsel %vm1019, %v1563, %v1564
        %v1566 = vrot.slane %v1447, 1
        %v1567 = vsel %vm1019, %v1564, %v1566
        %v1568 = vrot.slane %v1448, 1
        %v1569 = vrot.slane %v1449, 1
        %v1570 = vsel %vm1019, %v1568, %v1569
        %v1571 = vrot.slane %v1450, 1
        %v1572 = vsel %vm1019, %v1569, %v1571
        %v1573 = vrot.slane %v1451, 1
        %v1574 = vrot.slane %v1452, 1
        %v1575 = vsel %vm1019, %v1573, %v1574
        %v1576 = vrot.slane %v1453, 1
        %v1577 = vsel %vm1019, %v1574, %v1576
        %v1578 = vrot.slane %v1454, 1
        %v1579 = vrot.slane %v1455, 1
        %v1580 = vsel %vm1019, %v1578, %v1579
        %v1581 = vrot.slane %v1456, 1
        %v1582 = vsel %vm1019, %v1579, %v1581
        %v1583 = vrot.slane %v1457, 1
        %v1584 = vrot.slane %v1458, 1
        %v1585 = vsel %vm1019, %v1583, %v1584
        %v1586 = vrot.slane %v1459, 1
        %v1587 = vsel %vm1019, %v1584, %v1586
        %v1636 = vadd.f32 %v1360, %v1510
        %v1637 = vadd.f32 %v1361, %v1512
        %v1638 = vadd.f32 %v1362, %v1511
        %v1639 = vadd.f32 %v1363, %v1515
        %v1640 = vadd.f32 %v1364, %v1517
        %v1641 = vadd.f32 %v1365, %v1516
        %v1642 = vadd.f32 %v1366, %v1520
        %v1643 = vadd.f32 %v1367, %v1522
        %v1644 = vadd.f32 %v1368, %v1521
        %v1645 = vadd.f32 %v1369, %v1525
        %v1646 = vadd.f32 %v1370, %v1527
        %v1647 = vadd.f32 %v1371, %v1526
        %v1648 = vadd.f32 %v1372, %v1530
        %v1649 = vadd.f32 %v1373, %v1532
        %v1650 = vadd.f32 %v1374, %v1531
        %v1651 = vadd.f32 %v1375, %v1535
        %v1652 = vadd.f32 %v1376, %v1537
        %v1653 = vadd.f32 %v1377, %v1536
        %v1654 = vadd.f32 %v1378, %v1540
        %v1655 = vadd.f32 %v1379, %v1542
        %v1656 = vadd.f32 %v1380, %v1541
        %v1657 = vadd.f32 %v1381, %v1545
        %v1658 = vadd.f32 %v1382, %v1547
        %v1659 = vadd.f32 %v1383, %v1546
        %v1660 = vadd.f32 %v1384, %v1550
        %v1661 = vadd.f32 %v1385, %v1552
        %v1662 = vadd.f32 %v1386, %v1551
        %v1663 = vadd.f32 %v1387, %v1555
        %v1664 = vadd.f32 %v1388, %v1557
        %v1665 = vadd.f32 %v1389, %v1556
        %v1666 = vadd.f32 %v1390, %v1560
        %v1667 = vadd.f32 %v1391, %v1562
        %v1668 = vadd.f32 %v1392, %v1561
        %v1669 = vadd.f32 %v1393, %v1565
        %v1670 = vadd.f32 %v1394, %v1567
        %v1671 = vadd.f32 %v1395, %v1566
        %v1672 = vadd.f32 %v1396, %v1570
        %v1673 = vadd.f32 %v1397, %v1572
        %v1674 = vadd.f32 %v1398, %v1571
        %v1675 = vadd.f32 %v1399, %v1575
        %v1676 = vadd.f32 %v1400, %v1577
        %v1677 = vadd.f32 %v1401, %v1576
        %v1678 = vadd.f32 %v1402, %v1580
        %v1679 = vadd.f32 %v1403, %v1582
        %v1680 = vadd.f32 %v1404, %v1581
        %v1681 = vadd.f32 %v1405, %v1585
        %v1682 = vadd.f32 %v1406, %v1587
        %v1683 = vadd.f32 %v1407, %v1586
        %v1684 = vlaneseq
        %v1685 = vshrl.u32 %v1684, 7
        %v1686 = vsub.s32 0, %v1685
        %v1687 = vrot.slane %v386, %v1686
        %v1688 = vmul.f32 %v523, %v1687
        %v1689 = vmul.f32 %v428, %v1687
        %v1690 = vmul.f32 %v524, %v1687
        %v1691 = vmul.f32 %v431, %v1687
        %v1692 = vmul.f32 %v525, %v1687
        %v1693 = vmul.f32 %v434, %v1687
        %v1694 = vmul.f32 %v526, %v1687
        %v1695 = vmul.f32 %v437, %v1687
        %v1696 = vmul.f32 %v527, %v1687
        %v1697 = vmul.f32 %v440, %v1687
        %v1698 = vmul.f32 %v528, %v1687
        %v1699 = vmul.f32 %v443, %v1687
        %v1700 = vmul.f32 %v529, %v1687
        %v1701 = vmul.f32 %v446, %v1687
        %v1702 = vmul.f32 %v530, %v1687
        %v1703 = vmul.f32 %v449, %v1687
        %v1704 = vmul.f32 %v531, %v1687
        %v1705 = vmul.f32 %v452, %v1687
        %v1706 = vmul.f32 %v532, %v1687
        %v1707 = vmul.f32 %v455, %v1687
        %v1708 = vmul.f32 %v533, %v1687
        %v1709 = vmul.f32 %v458, %v1687
        %v1710 = vmul.f32 %v534, %v1687
        %v1711 = vmul.f32 %v461, %v1687
        %v1712 = vmul.f32 %v535, %v1687
        %v1713 = vmul.f32 %v464, %v1687
        %v1714 = vmul.f32 %v536, %v1687
        %v1715 = vmul.f32 %v467, %v1687
        %v1716 = vmul.f32 %v537, %v1687
        %v1717 = vmul.f32 %v470, %v1687
        %v1718 = vmul.f32 %v521, %v1687
        %v1719 = vmul.f32 %v422, %v1687
        %v1752 = vrot.slane %v1688, 7
        %v1753 = vrot.slane %v1689, 7
        %v1754 = vsel %vm420, %v1752, %v1753
        %v1755 = vrot.slane %v1690, 7
        %v1756 = vrot.slane %v1691, 7
        %v1757 = vsel %vm420, %v1755, %v1756
        %v1758 = vrot.slane %v1692, 7
        %v1759 = vrot.slane %v1693, 7
        %v1760 = vsel %vm420, %v1758, %v1759
        %v1761 = vrot.slane %v1694, 7
        %v1762 = vrot.slane %v1695, 7
        %v1763 = vsel %vm420, %v1761, %v1762
        %v1764 = vrot.slane %v1696, 7
        %v1765 = vrot.slane %v1697, 7
        %v1766 = vsel %vm420, %v1764, %v1765
        %v1767 = vrot.slane %v1698, 7
        %v1768 = vrot.slane %v1699, 7
        %v1769 = vsel %vm420, %v1767, %v1768
        %v1770 = vrot.slane %v1700, 7
        %v1771 = vrot.slane %v1701, 7
        %v1772 = vsel %vm420, %v1770, %v1771
        %v1773 = vrot.slane %v1702, 7
        %v1774 = vrot.slane %v1703, 7
        %v1775 = vsel %vm420, %v1773, %v1774
        %v1776 = vrot.slane %v1704, 7
        %v1777 = vrot.slane %v1705, 7
        %v1778 = vsel %vm420, %v1776, %v1777
        %v1779 = vrot.slane %v1706, 7
        %v1780 = vrot.slane %v1707, 7
        %v1781 = vsel %vm420, %v1779, %v1780
        %v1782 = vrot.slane %v1708, 7
        %v1783 = vrot.slane %v1709, 7
        %v1784 = vsel %vm420, %v1782, %v1783
        %v1785 = vrot.slane %v1710, 7
        %v1786 = vrot.slane %v1711, 7
        %v1787 = vsel %vm420, %v1785, %v1786
        %v1788 = vrot.slane %v1712, 7
        %v1789 = vrot.slane %v1713, 7
        %v1790 = vsel %vm420, %v1788, %v1789
        %v1791 = vrot.slane %v1714, 7
        %v1792 = vrot.slane %v1715, 7
        %v1793 = vsel %vm420, %v1791, %v1792
        %v1794 = vrot.slane %v1716, 7
        %v1795 = vrot.slane %v1717, 7
        %v1796 = vsel %vm420, %v1794, %v1795
        %v1797 = vrot.slane %v1718, 7
        %v1798 = vrot.slane %v1719, 7
        %v1799 = vsel %vm420, %v1797, %v1798
        %v1848 = vadd.f32 %v1636, %v1752
        %v1849 = vadd.f32 %v1637, %v1754
        %v1850 = vadd.f32 %v1638, %v1753
        %v1851 = vadd.f32 %v1639, %v1755
        %v1852 = vadd.f32 %v1640, %v1757
        %v1853 = vadd.f32 %v1641, %v1756
        %v1854 = vadd.f32 %v1642, %v1758
        %v1855 = vadd.f32 %v1643, %v1760
        %v1856 = vadd.f32 %v1644, %v1759
        %v1857 = vadd.f32 %v1645, %v1761
        %v1858 = vadd.f32 %v1646, %v1763
        %v1859 = vadd.f32 %v1647, %v1762
        %v1860 = vadd.f32 %v1648, %v1764
        %v1861 = vadd.f32 %v1649, %v1766
        %v1862 = vadd.f32 %v1650, %v1765
        %v1863 = vadd.f32 %v1651, %v1767
        %v1864 = vadd.f32 %v1652, %v1769
        %v1865 = vadd.f32 %v1653, %v1768
        %v1866 = vadd.f32 %v1654, %v1770
        %v1867 = vadd.f32 %v1655, %v1772
        %v1868 = vadd.f32 %v1656, %v1771
        %v1869 = vadd.f32 %v1657, %v1773
        %v1870 = vadd.f32 %v1658, %v1775
        %v1871 = vadd.f32 %v1659, %v1774
        %v1872 = vadd.f32 %v1660, %v1776
        %v1873 = vadd.f32 %v1661, %v1778
        %v1874 = vadd.f32 %v1662, %v1777
        %v1875 = vadd.f32 %v1663, %v1779
        %v1876 = vadd.f32 %v1664, %v1781
        %v1877 = vadd.f32 %v1665, %v1780
        %v1878 = vadd.f32 %v1666, %v1782
        %v1879 = vadd.f32 %v1667, %v1784
        %v1880 = vadd.f32 %v1668, %v1783
        %v1881 = vadd.f32 %v1669, %v1785
        %v1882 = vadd.f32 %v1670, %v1787
        %v1883 = vadd.f32 %v1671, %v1786
        %v1884 = vadd.f32 %v1672, %v1788
        %v1885 = vadd.f32 %v1673, %v1790
        %v1886 = vadd.f32 %v1674, %v1789
        %v1887 = vadd.f32 %v1675, %v1791
        %v1888 = vadd.f32 %v1676, %v1793
        %v1889 = vadd.f32 %v1677, %v1792
        %v1890 = vadd.f32 %v1678, %v1794
        %v1891 = vadd.f32 %v1679, %v1796
        %v1892 = vadd.f32 %v1680, %v1795
        %v1893 = vadd.f32 %v1681, %v1797
        %v1894 = vadd.f32 %v1682, %v1799
        %v1895 = vadd.f32 %v1683, %v1798
        %v1896 = vlaneseq
        %v1897 = vshrl.u32 %v1896, 7
        %v1898 = vsub.s32 1, %v1897
        %v1899 = vrot.slane %v386, %v1898
        %v1900 = vmul.f32 %v523, %v1899
        %v1901 = vmul.f32 %v428, %v1899
        %v1902 = vmul.f32 %v540, %v1899
        %v1903 = vmul.f32 %v524, %v1899
        %v1904 = vmul.f32 %v431, %v1899
        %v1905 = vmul.f32 %v541, %v1899
        %v1906 = vmul.f32 %v525, %v1899
        %v1907 = vmul.f32 %v434, %v1899
        %v1908 = vmul.f32 %v542, %v1899
        %v1909 = vmul.f32 %v526, %v1899
        %v1910 = vmul.f32 %v437, %v1899
        %v1911 = vmul.f32 %v543, %v1899
        %v1912 = vmul.f32 %v527, %v1899
        %v1913 = vmul.f32 %v440, %v1899
        %v1914 = vmul.f32 %v544, %v1899
        %v1915 = vmul.f32 %v528, %v1899
        %v1916 = vmul.f32 %v443, %v1899
        %v1917 = vmul.f32 %v545, %v1899
        %v1918 = vmul.f32 %v529, %v1899
        %v1919 = vmul.f32 %v446, %v1899
        %v1920 = vmul.f32 %v546, %v1899
        %v1921 = vmul.f32 %v530, %v1899
        %v1922 = vmul.f32 %v449, %v1899
        %v1923 = vmul.f32 %v547, %v1899
        %v1924 = vmul.f32 %v531, %v1899
        %v1925 = vmul.f32 %v452, %v1899
        %v1926 = vmul.f32 %v548, %v1899
        %v1927 = vmul.f32 %v532, %v1899
        %v1928 = vmul.f32 %v455, %v1899
        %v1929 = vmul.f32 %v549, %v1899
        %v1930 = vmul.f32 %v533, %v1899
        %v1931 = vmul.f32 %v458, %v1899
        %v1932 = vmul.f32 %v550, %v1899
        %v1933 = vmul.f32 %v534, %v1899
        %v1934 = vmul.f32 %v461, %v1899
        %v1935 = vmul.f32 %v551, %v1899
        %v1936 = vmul.f32 %v535, %v1899
        %v1937 = vmul.f32 %v464, %v1899
        %v1938 = vmul.f32 %v552, %v1899
        %v1939 = vmul.f32 %v536, %v1899
        %v1940 = vmul.f32 %v467, %v1899
        %v1941 = vmul.f32 %v553, %v1899
        %v1942 = vmul.f32 %v537, %v1899
        %v1943 = vmul.f32 %v470, %v1899
        %v1944 = vmul.f32 %v554, %v1899
        %v1945 = vmul.f32 %v521, %v1899
        %v1946 = vmul.f32 %v422, %v1899
        %v1947 = vmul.f32 %v538, %v1899
        %v1948 = vadd.f32 %v1848, %v1900
        %v1949 = vadd.f32 %v1849, %v1901
        %v1950 = vadd.f32 %v1850, %v1902
        %v1951 = vadd.f32 %v1851, %v1903
        %v1952 = vadd.f32 %v1852, %v1904
        %v1953 = vadd.f32 %v1853, %v1905
        %v1954 = vadd.f32 %v1854, %v1906
        %v1955 = vadd.f32 %v1855, %v1907
        %v1956 = vadd.f32 %v1856, %v1908
        %v1957 = vadd.f32 %v1857, %v1909
        %v1958 = vadd.f32 %v1858, %v1910
        %v1959 = vadd.f32 %v1859, %v1911
        %v1960 = vadd.f32 %v1860, %v1912
        %v1961 = vadd.f32 %v1861, %v1913
        %v1962 = vadd.f32 %v1862, %v1914
        %v1963 = vadd.f32 %v1863, %v1915
        %v1964 = vadd.f32 %v1864, %v1916
        %v1965 = vadd.f32 %v1865, %v1917
        %v1966 = vadd.f32 %v1866, %v1918
        %v1967 = vadd.f32 %v1867, %v1919
        %v1968 = vadd.f32 %v1868, %v1920
        %v1969 = vadd.f32 %v1869, %v1921
        %v1970 = vadd.f32 %v1870, %v1922
        %v1971 = vadd.f32 %v1871, %v1923
        %v1972 = vadd.f32 %v1872, %v1924
        %v1973 = vadd.f32 %v1873, %v1925
        %v1974 = vadd.f32 %v1874, %v1926
        %v1975 = vadd.f32 %v1875, %v1927
        %v1976 = vadd.f32 %v1876, %v1928
        %v1977 = vadd.f32 %v1877, %v1929
        %v1978 = vadd.f32 %v1878, %v1930
        %v1979 = vadd.f32 %v1879, %v1931
        %v1980 = vadd.f32 %v1880, %v1932
        %v1981 = vadd.f32 %v1881, %v1933
        %v1982 = vadd.f32 %v1882, %v1934
        %v1983 = vadd.f32 %v1883, %v1935
        %v1984 = vadd.f32 %v1884, %v1936
        %v1985 = vadd.f32 %v1885, %v1937
        %v1986 = vadd.f32 %v1886, %v1938
        %v1987 = vadd.f32 %v1887, %v1939
        %v1988 = vadd.f32 %v1888, %v1940
        %v1989 = vadd.f32 %v1889, %v1941
        %v1990 = vadd.f32 %v1890, %v1942
        %v1991 = vadd.f32 %v1891, %v1943
        %v1992 = vadd.f32 %v1892, %v1944
        %v1993 = vadd.f32 %v1893, %v1945
        %v1994 = vadd.f32 %v1894, %v1946
        %v1995 = vadd.f32 %v1895, %v1947
        %v1996 = vlaneseq
        %v1997 = vshrl.u32 %v1996, 7
        %v1998 = vsub.s32 2, %v1997
        %v1999 = vrot.slane %v386, %v1998
        %v2000 = vmul.f32 %v523, %v1999
        %v2001 = vmul.f32 %v428, %v1999
        %v2002 = vmul.f32 %v540, %v1999
        %v2003 = vmul.f32 %v524, %v1999
        %v2004 = vmul.f32 %v431, %v1999
        %v2005 = vmul.f32 %v541, %v1999
        %v2006 = vmul.f32 %v525, %v1999
        %v2007 = vmul.f32 %v434, %v1999
        %v2008 = vmul.f32 %v542, %v1999
        %v2009 = vmul.f32 %v526, %v1999
        %v2010 = vmul.f32 %v437, %v1999
        %v2011 = vmul.f32 %v543, %v1999
        %v2012 = vmul.f32 %v527, %v1999
        %v2013 = vmul.f32 %v440, %v1999
        %v2014 = vmul.f32 %v544, %v1999
        %v2015 = vmul.f32 %v528, %v1999
        %v2016 = vmul.f32 %v443, %v1999
        %v2017 = vmul.f32 %v545, %v1999
        %v2018 = vmul.f32 %v529, %v1999
        %v2019 = vmul.f32 %v446, %v1999
        %v2020 = vmul.f32 %v546, %v1999
        %v2021 = vmul.f32 %v530, %v1999
        %v2022 = vmul.f32 %v449, %v1999
        %v2023 = vmul.f32 %v547, %v1999
        %v2024 = vmul.f32 %v531, %v1999
        %v2025 = vmul.f32 %v452, %v1999
        %v2026 = vmul.f32 %v548, %v1999
        %v2027 = vmul.f32 %v532, %v1999
        %v2028 = vmul.f32 %v455, %v1999
        %v2029 = vmul.f32 %v549, %v1999
        %v2030 = vmul.f32 %v533, %v1999
        %v2031 = vmul.f32 %v458, %v1999
        %v2032 = vmul.f32 %v550, %v1999
        %v2033 = vmul.f32 %v534, %v1999
        %v2034 = vmul.f32 %v461, %v1999
        %v2035 = vmul.f32 %v551, %v1999
        %v2036 = vmul.f32 %v535, %v1999
        %v2037 = vmul.f32 %v464, %v1999
        %v2038 = vmul.f32 %v552, %v1999
        %v2039 = vmul.f32 %v536, %v1999
        %v2040 = vmul.f32 %v467, %v1999
        %v2041 = vmul.f32 %v553, %v1999
        %v2042 = vmul.f32 %v537, %v1999
        %v2043 = vmul.f32 %v470, %v1999
        %v2044 = vmul.f32 %v554, %v1999
        %v2045 = vmul.f32 %v521, %v1999
        %v2046 = vmul.f32 %v422, %v1999
        %v2047 = vmul.f32 %v538, %v1999
        %v2096 = vrot.slane %v2000, 1
        %v2097 = vrot.slane %v2001, 1
        %v2098 = vsel %vm1019, %v2096, %v2097
        %v2099 = vrot.slane %v2002, 1
        %v2100 = vsel %vm1019, %v2097, %v2099
        %v2101 = vrot.slane %v2003, 1
        %v2102 = vrot.slane %v2004, 1
        %v2103 = vsel %vm1019, %v2101, %v2102
        %v2104 = vrot.slane %v2005, 1
        %v2105 = vsel %vm1019, %v2102, %v2104
        %v2106 = vrot.slane %v2006, 1
        %v2107 = vrot.slane %v2007, 1
        %v2108 = vsel %vm1019, %v2106, %v2107
        %v2109 = vrot.slane %v2008, 1
        %v2110 = vsel %vm1019, %v2107, %v2109
        %v2111 = vrot.slane %v2009, 1
        %v2112 = vrot.slane %v2010, 1
        %v2113 = vsel %vm1019, %v2111, %v2112
        %v2114 = vrot.slane %v2011, 1
        %v2115 = vsel %vm1019, %v2112, %v2114
        %v2116 = vrot.slane %v2012, 1
        %v2117 = vrot.slane %v2013, 1
        %v2118 = vsel %vm1019, %v2116, %v2117
        %v2119 = vrot.slane %v2014, 1
        %v2120 = vsel %vm1019, %v2117, %v2119
        %v2121 = vrot.slane %v2015, 1
        %v2122 = vrot.slane %v2016, 1
        %v2123 = vsel %vm1019, %v2121, %v2122
        %v2124 = vrot.slane %v2017, 1
        %v2125 = vsel %vm1019, %v2122, %v2124
        %v2126 = vrot.slane %v2018, 1
        %v2127 = vrot.slane %v2019, 1
        %v2128 = vsel %vm1019, %v2126, %v2127
        %v2129 = vrot.slane %v2020, 1
        %v2130 = vsel %vm1019, %v2127, %v2129
        %v2131 = vrot.slane %v2021, 1
        %v2132 = vrot.slane %v2022, 1
        %v2133 = vsel %vm1019, %v2131, %v2132
        %v2134 = vrot.slane %v2023, 1
        %v2135 = vsel %vm1019, %v2132, %v2134
        %v2136 = vrot.slane %v2024, 1
        %v2137 = vrot.slane %v2025, 1
        %v2138 = vsel %vm1019, %v2136, %v2137
        %v2139 = vrot.slane %v2026, 1
        %v2140 = vsel %vm1019, %v2137, %v2139
        %v2141 = vrot.slane %v2027, 1
        %v2142 = vrot.slane %v2028, 1
        %v2143 = vsel %vm1019, %v2141, %v2142
        %v2144 = vrot.slane %v2029, 1
        %v2145 = vsel %vm1019, %v2142, %v2144
        %v2146 = vrot.slane %v2030, 1
        %v2147 = vrot.slane %v2031, 1
        %v2148 = vsel %vm1019, %v2146, %v2147
        %v2149 = vrot.slane %v2032, 1
        %v2150 = vsel %vm1019, %v2147, %v2149
        %v2151 = vrot.slane %v2033, 1
        %v2152 = vrot.slane %v2034, 1
        %v2153 = vsel %vm1019, %v2151, %v2152
        %v2154 = vrot.slane %v2035, 1
        %v2155 = vsel %vm1019, %v2152, %v2154
        %v2156 = vrot.slane %v2036, 1
        %v2157 = vrot.slane %v2037, 1
        %v2158 = vsel %vm1019, %v2156, %v2157
        %v2159 = vrot.slane %v2038, 1
        %v2160 = vsel %vm1019, %v2157, %v2159
        %v2161 = vrot.slane %v2039, 1
        %v2162 = vrot.slane %v2040, 1
        %v2163 = vsel %vm1019, %v2161, %v2162
        %v2164 = vrot.slane %v2041, 1
        %v2165 = vsel %vm1019, %v2162, %v2164
        %v2166 = vrot.slane %v2042, 1
        %v2167 = vrot.slane %v2043, 1
        %v2168 = vsel %vm1019, %v2166, %v2167
        %v2169 = vrot.slane %v2044, 1
        %v2170 = vsel %vm1019, %v2167, %v2169
        %v2171 = vrot.slane %v2045, 1
        %v2172 = vrot.slane %v2046, 1
        %v2173 = vsel %vm1019, %v2171, %v2172
        %v2174 = vrot.slane %v2047, 1
        %v2175 = vsel %vm1019, %v2172, %v2174
        %v2224 = vadd.f32 %v1948, %v2098
        %v2225 = vadd.f32 %v1949, %v2100
        %v2226 = vadd.f32 %v1950, %v2099
        %v2227 = vadd.f32 %v1951, %v2103
        %v2228 = vadd.f32 %v1952, %v2105
        %v2229 = vadd.f32 %v1953, %v2104
        %v2230 = vadd.f32 %v1954, %v2108
        %v2231 = vadd.f32 %v1955, %v2110
        %v2232 = vadd.f32 %v1956, %v2109
        %v2233 = vadd.f32 %v1957, %v2113
        %v2234 = vadd.f32 %v1958, %v2115
        %v2235 = vadd.f32 %v1959, %v2114
        %v2236 = vadd.f32 %v1960, %v2118
        %v2237 = vadd.f32 %v1961, %v2120
        %v2238 = vadd.f32 %v1962, %v2119
        %v2239 = vadd.f32 %v1963, %v2123
        %v2240 = vadd.f32 %v1964, %v2125
        %v2241 = vadd.f32 %v1965, %v2124
        %v2242 = vadd.f32 %v1966, %v2128
        %v2243 = vadd.f32 %v1967, %v2130
        %v2244 = vadd.f32 %v1968, %v2129
        %v2245 = vadd.f32 %v1969, %v2133
        %v2246 = vadd.f32 %v1970, %v2135
        %v2247 = vadd.f32 %v1971, %v2134
        %v2248 = vadd.f32 %v1972, %v2138
        %v2249 = vadd.f32 %v1973, %v2140
        %v2250 = vadd.f32 %v1974, %v2139
        %v2251 = vadd.f32 %v1975, %v2143
        %v2252 = vadd.f32 %v1976, %v2145
        %v2253 = vadd.f32 %v1977, %v2144
        %v2254 = vadd.f32 %v1978, %v2148
        %v2255 = vadd.f32 %v1979, %v2150
        %v2256 = vadd.f32 %v1980, %v2149
        %v2257 = vadd.f32 %v1981, %v2153
        %v2258 = vadd.f32 %v1982, %v2155
        %v2259 = vadd.f32 %v1983, %v2154
        %v2260 = vadd.f32 %v1984, %v2158
        %v2261 = vadd.f32 %v1985, %v2160
        %v2262 = vadd.f32 %v1986, %v2159
        %v2263 = vadd.f32 %v1987, %v2163
        %v2264 = vadd.f32 %v1988, %v2165
        %v2265 = vadd.f32 %v1989, %v2164
        %v2266 = vadd.f32 %v1990, %v2168
        %v2267 = vadd.f32 %v1991, %v2170
        %v2268 = vadd.f32 %v1992, %v2169
        %v2269 = vadd.f32 %v1993, %v2173
        %v2270 = vadd.f32 %v1994, %v2175
        %v2271 = vadd.f32 %v1995, %v2174
        %v2272 = vld [vmem:[%s2] sm:$0x1]
        %v2274 = vlaneseq
        %v2275 = vshrl.u32 %v2274, 7
        %v2276 = vsub.s32 0, %v2275
        %v2277 = vrot.slane %v2272, %v2276
        %v2279 = vadd.f32 %v2224, %v2277
        %v2280 = vadd.f32 %v2225, %v2277
        %v2281 = vadd.f32 %v2226, %v2277
        %v2282 = vadd.f32 %v2227, %v2277
        %v2283 = vadd.f32 %v2228, %v2277
        %v2284 = vadd.f32 %v2229, %v2277
        %v2285 = vadd.f32 %v2230, %v2277
        %v2286 = vadd.f32 %v2231, %v2277
        %v2287 = vadd.f32 %v2232, %v2277
        %v2288 = vadd.f32 %v2233, %v2277
        %v2289 = vadd.f32 %v2234, %v2277
        %v2290 = vadd.f32 %v2235, %v2277
        %v2291 = vadd.f32 %v2236, %v2277
        %v2292 = vadd.f32 %v2237, %v2277
        %v2293 = vadd.f32 %v2238, %v2277
        %v2294 = vadd.f32 %v2239, %v2277
        %v2295 = vadd.f32 %v2240, %v2277
        %v2296 = vadd.f32 %v2241, %v2277
        %v2297 = vadd.f32 %v2242, %v2277
        %v2298 = vadd.f32 %v2243, %v2277
        %v2299 = vadd.f32 %v2244, %v2277
        %v2300 = vadd.f32 %v2245, %v2277
        %v2301 = vadd.f32 %v2246, %v2277
        %v2302 = vadd.f32 %v2247, %v2277
        %v2303 = vadd.f32 %v2248, %v2277
        %v2304 = vadd.f32 %v2249, %v2277
        %v2305 = vadd.f32 %v2250, %v2277
        %v2306 = vadd.f32 %v2251, %v2277
        %v2307 = vadd.f32 %v2252, %v2277
        %v2308 = vadd.f32 %v2253, %v2277
        %v2309 = vadd.f32 %v2254, %v2277
        %v2310 = vadd.f32 %v2255, %v2277
        %v2311 = vadd.f32 %v2256, %v2277
        %v2312 = vadd.f32 %v2257, %v2277
        %v2313 = vadd.f32 %v2258, %v2277
        %v2314 = vadd.f32 %v2259, %v2277
        %v2315 = vadd.f32 %v2260, %v2277
        %v2316 = vadd.f32 %v2261, %v2277
        %v2317 = vadd.f32 %v2262, %v2277
        %v2318 = vadd.f32 %v2263, %v2277
        %v2319 = vadd.f32 %v2264, %v2277
        %v2320 = vadd.f32 %v2265, %v2277
        %v2321 = vadd.f32 %v2266, %v2277
        %v2322 = vadd.f32 %v2267, %v2277
        %v2323 = vadd.f32 %v2268, %v2277
        %v2324 = vadd.f32 %v2269, %v2277
        %v2325 = vadd.f32 %v2270, %v2277
        %v2326 = vadd.f32 %v2271, %v2277
        %v2327 = vmax.f32 %v2279, 0.0
        %v2328 = vmax.f32 %v2280, 0.0
        %v2329 = vmax.f32 %v2281, 0.0
        %v2330 = vmax.f32 %v2282, 0.0
        %v2331 = vmax.f32 %v2283, 0.0
        %v2332 = vmax.f32 %v2284, 0.0
        %v2333 = vmax.f32 %v2285, 0.0
        %v2334 = vmax.f32 %v2286, 0.0
        %v2335 = vmax.f32 %v2287, 0.0
        %v2336 = vmax.f32 %v2288, 0.0
        %v2337 = vmax.f32 %v2289, 0.0
        %v2338 = vmax.f32 %v2290, 0.0
        %v2339 = vmax.f32 %v2291, 0.0
        %v2340 = vmax.f32 %v2292, 0.0
        %v2341 = vmax.f32 %v2293, 0.0
        %v2342 = vmax.f32 %v2294, 0.0
        %v2343 = vmax.f32 %v2295, 0.0
        %v2344 = vmax.f32 %v2296, 0.0
        %v2345 = vmax.f32 %v2297, 0.0
        %v2346 = vmax.f32 %v2298, 0.0
        %v2347 = vmax.f32 %v2299, 0.0
        %v2348 = vmax.f32 %v2300, 0.0
        %v2349 = vmax.f32 %v2301, 0.0
        %v2350 = vmax.f32 %v2302, 0.0
        %v2351 = vmax.f32 %v2303, 0.0
        %v2352 = vmax.f32 %v2304, 0.0
        %v2353 = vmax.f32 %v2305, 0.0
        %v2354 = vmax.f32 %v2306, 0.0
        %v2355 = vmax.f32 %v2307, 0.0
        %v2356 = vmax.f32 %v2308, 0.0
        %v2357 = vmax.f32 %v2309, 0.0
        %v2358 = vmax.f32 %v2310, 0.0
        %v2359 = vmax.f32 %v2311, 0.0
        %v2360 = vmax.f32 %v2312, 0.0
        %v2361 = vmax.f32 %v2313, 0.0
        %v2362 = vmax.f32 %v2314, 0.0
        %v2363 = vmax.f32 %v2315, 0.0
        %v2364 = vmax.f32 %v2316, 0.0
        %v2365 = vmax.f32 %v2317, 0.0
        %v2366 = vmax.f32 %v2318, 0.0
        %v2367 = vmax.f32 %v2319, 0.0
        %v2368 = vmax.f32 %v2320, 0.0
        %v2369 = vmax.f32 %v2321, 0.0
        %v2370 = vmax.f32 %v2322, 0.0
        %v2371 = vmax.f32 %v2323, 0.0
        %v2372 = vmax.f32 %v2324, 0.0
        %v2373 = vmax.f32 %v2325, 0.0
        %v2374 = vmax.f32 %v2326, 0.0
        %v2423 = vrot.slane %v2327, 1
        %v2424 = vrot.slane %v2328, 1
        %v2425 = vsel %vm1019, %v2423, %v2424
        %v2426 = vrot.slane %v2329, 1
        %v2427 = vsel %vm1019, %v2424, %v2426
        %v2428 = vrot.slane %v2330, 1
        %v2429 = vrot.slane %v2331, 1
        %v2430 = vsel %vm1019, %v2428, %v2429
        %v2431 = vrot.slane %v2332, 1
        %v2432 = vsel %vm1019, %v2429, %v2431
        %v2433 = vrot.slane %v2333, 1
        %v2434 = vrot.slane %v2334, 1
        %v2435 = vsel %vm1019, %v2433, %v2434
        %v2436 = vrot.slane %v2335, 1
        %v2437 = vsel %vm1019, %v2434, %v2436
        %v2438 = vrot.slane %v2336, 1
        %v2439 = vrot.slane %v2337, 1
        %v2440 = vsel %vm1019, %v2438, %v2439
        %v2441 = vrot.slane %v2338, 1
        %v2442 = vsel %vm1019, %v2439, %v2441
        %v2443 = vrot.slane %v2339, 1
        %v2444 = vrot.slane %v2340, 1
        %v2445 = vsel %vm1019, %v2443, %v2444
        %v2446 = vrot.slane %v2341, 1
        %v2447 = vsel %vm1019, %v2444, %v2446
        %v2448 = vrot.slane %v2342, 1
        %v2449 = vrot.slane %v2343, 1
        %v2450 = vsel %vm1019, %v2448, %v2449
        %v2451 = vrot.slane %v2344, 1
        %v2452 = vsel %vm1019, %v2449, %v2451
        %v2453 = vrot.slane %v2345, 1
        %v2454 = vrot.slane %v2346, 1
        %v2455 = vsel %vm1019, %v2453, %v2454
        %v2456 = vrot.slane %v2347, 1
        %v2457 = vsel %vm1019, %v2454, %v2456
        %v2458 = vrot.slane %v2348, 1
        %v2459 = vrot.slane %v2349, 1
        %v2460 = vsel %vm1019, %v2458, %v2459
        %v2461 = vrot.slane %v2350, 1
        %v2462 = vsel %vm1019, %v2459, %v2461
        %v2463 = vrot.slane %v2351, 1
        %v2464 = vrot.slane %v2352, 1
        %v2465 = vsel %vm1019, %v2463, %v2464
        %v2466 = vrot.slane %v2353, 1
        %v2467 = vsel %vm1019, %v2464, %v2466
        %v2468 = vrot.slane %v2354, 1
        %v2469 = vrot.slane %v2355, 1
        %v2470 = vsel %vm1019, %v2468, %v2469
        %v2471 = vrot.slane %v2356, 1
        %v2472 = vsel %vm1019, %v2469, %v2471
        %v2473 = vrot.slane %v2357, 1
        %v2474 = vrot.slane %v2358, 1
        %v2475 = vsel %vm1019, %v2473, %v2474
        %v2476 = vrot.slane %v2359, 1
        %v2477 = vsel %vm1019, %v2474, %v2476
        %v2478 = vrot.slane %v2360, 1
        %v2479 = vrot.slane %v2361, 1
        %v2480 = vsel %vm1019, %v2478, %v2479
        %v2481 = vrot.slane %v2362, 1
        %v2482 = vsel %vm1019, %v2479, %v2481
        %v2483 = vrot.slane %v2363, 1
        %v2484 = vrot.slane %v2364, 1
        %v2485 = vsel %vm1019, %v2483, %v2484
        %v2486 = vrot.slane %v2365, 1
        %v2487 = vsel %vm1019, %v2484, %v2486
        %v2488 = vrot.slane %v2366, 1
        %v2489 = vrot.slane %v2367, 1
        %v2490 = vsel %vm1019, %v2488, %v2489
        %v2491 = vrot.slane %v2368, 1
        %v2492 = vsel %vm1019, %v2489, %v2491
        %v2493 = vrot.slane %v2369, 1
        %v2494 = vrot.slane %v2370, 1
        %v2495 = vsel %vm1019, %v2493, %v2494
        %v2496 = vrot.slane %v2371, 1
        %v2497 = vsel %vm1019, %v2494, %v2496
        %v2498 = vrot.slane %v2372, 1
        %v2499 = vrot.slane %v2373, 1
        %v2500 = vsel %vm1019, %v2498, %v2499
        %v2501 = vrot.slane %v2374, 1
        %v2502 = vsel %vm1019, %v2499, %v2501
        %v2535 = vpack.c.bf16 %v2427, %v2425
        %v2536 = vpack.c.bf16 %v2432, %v2430
        %v2537 = vpack.c.bf16 %v2437, %v2435
        %v2538 = vpack.c.bf16 %v2442, %v2440
        %v2539 = vpack.c.bf16 %v2447, %v2445
        %v2540 = vpack.c.bf16 %v2452, %v2450
        %v2541 = vpack.c.bf16 %v2457, %v2455
        %v2542 = vpack.c.bf16 %v2462, %v2460
        %v2543 = vpack.c.bf16 %v2467, %v2465
        %v2544 = vpack.c.bf16 %v2472, %v2470
        %v2545 = vpack.c.bf16 %v2477, %v2475
        %v2546 = vpack.c.bf16 %v2482, %v2480
        %v2547 = vpack.c.bf16 %v2487, %v2485
        %v2548 = vpack.c.bf16 %v2492, %v2490
        %v2549 = vpack.c.bf16 %v2497, %v2495
        %v2550 = vpack.c.bf16 %v2502, %v2500
        %v2551 = vld [vmem:[%s3] sm:$0xf]
        %v2552 = vld [vmem:[%s3 + $0x4] sm:$0xf]
        %v2553 = vld [vmem:[%s4] sm:$0x1]
        %v2555 = vlaneseq
        %v2556 = vshrl.u32 %v2555, 7
        %v2557 = vsub.s32 0, %v2556
        %v2558 = vrot.slane %v2553, %v2557
        %v2562 = vunpack.c.l.b16 %v2551
        %v2563 = vunpack.c.l.b16 %v2552
        %v2564 = vpack.c.b16 %v2563, %v2562
        %vm2566 = vcmask 130048
        %v2568 = vsel %vm2566, %v2535, 0
        %v2571 = vsel %vm2566, %v2536, 0
        %v2574 = vsel %vm2566, %v2537, 0
        %v2577 = vsel %vm2566, %v2538, 0
        %v2580 = vsel %vm2566, %v2539, 0
        %v2583 = vsel %vm2566, %v2540, 0
        %v2586 = vsel %vm2566, %v2541, 0
        %v2589 = vsel %vm2566, %v2542, 0
        %v2592 = vsel %vm2566, %v2543, 0
        %v2595 = vsel %vm2566, %v2544, 0
        %v2598 = vsel %vm2566, %v2545, 0
        %v2601 = vsel %vm2566, %v2546, 0
        %v2604 = vsel %vm2566, %v2547, 0
        %v2607 = vsel %vm2566, %v2548, 0
        %v2610 = vsel %vm2566, %v2549, 0
        %v2613 = vsel %vm2566, %v2550, 0
        %2615 = vmatprep.subr.bf16.mxu0 0
        %2616 = vmatpush1.bf16.msra.mxu0 0
        %2617 = vmatprep.subr.bf16.mxu0 0
        %2618 = vmatpush1.bf16.msra.mxu0 0
        %2619 = vmatprep.subr.bf16.mxu0 0
        %2620 = vmatpush1.bf16.msra.mxu0 0
        %2621 = vmatprep.subr.bf16.mxu0 0
        %2622 = vmatpush1.bf16.msra.mxu0 0
        %2623 = vmatprep.subr.bf16.mxu0 0
        %2624 = vmatpush1.bf16.msra.mxu0 0
        %2625 = vmatprep.subr.bf16.mxu0 0
        %2626 = vmatpush1.bf16.msra.mxu0 0
        %2627 = vmatprep.subr.bf16.mxu0 0
        %2628 = vmatpush1.bf16.msra.mxu0 0
        %2629 = vmatprep.subr.bf16.mxu0 0
        %2630 = vmatpush1.bf16.msra.mxu0 %v2564
        %2631 = vmatprep.subr.bf16.mxu0 0
        %2632 = vmatpush2.bf16.msra.mxu0 0
        %2633 = vmatprep.subr.bf16.mxu0 0
        %2634 = vmatpush2.bf16.msra.mxu0 0
        %2635 = vmatprep.subr.bf16.mxu0 0
        %2636 = vmatpush2.bf16.msra.mxu0 0
        %2637 = vmatprep.subr.bf16.mxu0 0
        %2638 = vmatpush2.bf16.msra.mxu0 0
        %2639 = vmatprep.subr.bf16.mxu0 0
        %2640 = vmatpush2.bf16.msra.mxu0 0
        %2641 = vmatprep.subr.bf16.mxu0 0
        %2642 = vmatpush2.bf16.msra.mxu0 0
        %2643 = vmatprep.subr.bf16.mxu0 0
        %2644 = vmatpush2.bf16.msra.mxu0 0
        %2645 = vmatprep.subr.bf16.mxu0 0
        %2646 = vmatpush2.bf16.msra.mxu0 0
        %2647 = vmatprep.mubr.bf16.mxu0 0
        %2648 = vmatmul.mubr.bf16.gmra.mxu0 %v2568
        %v2649 = vpop.f32.mrf.mxu0
        %v2650 = vadd.f32 %v2558, %v2649
        %v2651 = vpop.f32.mrf.mxu0
        %v2652 = vpop.f32.mrf.mxu0
        %v2653 = vadd.f32 %v2558, %v2652
        %v2654 = vpop.f32.mrf.mxu0
        %2655 = vmatprep.mubr.bf16.mxu0 0
        %2656 = vmatmul.mubr.bf16.gmra.mxu0 %v2571
        %v2657 = vpop.f32.mrf.mxu0
        %v2658 = vadd.f32 %v2558, %v2657
        %v2659 = vpop.f32.mrf.mxu0
        %v2660 = vpop.f32.mrf.mxu0
        %v2661 = vadd.f32 %v2558, %v2660
        %v2662 = vpop.f32.mrf.mxu0
        %2663 = vmatprep.mubr.bf16.mxu0 0
        %2664 = vmatmul.mubr.bf16.gmra.mxu0 %v2574
        %v2665 = vpop.f32.mrf.mxu0
        %v2666 = vadd.f32 %v2558, %v2665
        %v2667 = vpop.f32.mrf.mxu0
        %v2668 = vpop.f32.mrf.mxu0
        %v2669 = vadd.f32 %v2558, %v2668
        %v2670 = vpop.f32.mrf.mxu0
        %2671 = vmatprep.mubr.bf16.mxu0 0
        %2672 = vmatmul.mubr.bf16.gmra.mxu0 %v2577
        %v2673 = vpop.f32.mrf.mxu0
        %v2674 = vadd.f32 %v2558, %v2673
        %v2675 = vpop.f32.mrf.mxu0
        %v2676 = vpop.f32.mrf.mxu0
        %v2677 = vadd.f32 %v2558, %v2676
        %v2678 = vpop.f32.mrf.mxu0
        %2679 = vmatprep.mubr.bf16.mxu0 0
        %2680 = vmatmul.mubr.bf16.gmra.mxu0 %v2580
        %v2681 = vpop.f32.mrf.mxu0
        %v2682 = vadd.f32 %v2558, %v2681
        %v2683 = vpop.f32.mrf.mxu0
        %v2684 = vpop.f32.mrf.mxu0
        %v2685 = vadd.f32 %v2558, %v2684
        %v2686 = vpop.f32.mrf.mxu0
        %2687 = vmatprep.mubr.bf16.mxu0 0
        %2688 = vmatmul.mubr.bf16.gmra.mxu0 %v2583
        %v2689 = vpop.f32.mrf.mxu0
        %v2690 = vadd.f32 %v2558, %v2689
        %v2691 = vpop.f32.mrf.mxu0
        %v2692 = vpop.f32.mrf.mxu0
        %v2693 = vadd.f32 %v2558, %v2692
        %v2694 = vpop.f32.mrf.mxu0
        %2695 = vmatprep.mubr.bf16.mxu0 0
        %2696 = vmatmul.mubr.bf16.gmra.mxu0 %v2586
        %v2697 = vpop.f32.mrf.mxu0
        %v2698 = vadd.f32 %v2558, %v2697
        %v2699 = vpop.f32.mrf.mxu0
        %v2700 = vpop.f32.mrf.mxu0
        %v2701 = vadd.f32 %v2558, %v2700
        %v2702 = vpop.f32.mrf.mxu0
        %2703 = vmatprep.mubr.bf16.mxu0 0
        %2704 = vmatmul.mubr.bf16.gmra.mxu0 %v2589
        %v2705 = vpop.f32.mrf.mxu0
        %v2706 = vadd.f32 %v2558, %v2705
        %v2707 = vpop.f32.mrf.mxu0
        %v2708 = vpop.f32.mrf.mxu0
        %v2709 = vadd.f32 %v2558, %v2708
        %v2710 = vpop.f32.mrf.mxu0
        %2711 = vmatprep.mubr.bf16.mxu0 0
        %2712 = vmatmul.mubr.bf16.gmra.mxu0 %v2592
        %v2713 = vpop.f32.mrf.mxu0
        %v2714 = vadd.f32 %v2558, %v2713
        %v2715 = vpop.f32.mrf.mxu0
        %v2716 = vpop.f32.mrf.mxu0
        %v2717 = vadd.f32 %v2558, %v2716
        %v2718 = vpop.f32.mrf.mxu0
        %2719 = vmatprep.mubr.bf16.mxu0 0
        %2720 = vmatmul.mubr.bf16.gmra.mxu0 %v2595
        %v2721 = vpop.f32.mrf.mxu0
        %v2722 = vadd.f32 %v2558, %v2721
        %v2723 = vpop.f32.mrf.mxu0
        %v2724 = vpop.f32.mrf.mxu0
        %v2725 = vadd.f32 %v2558, %v2724
        %v2726 = vpop.f32.mrf.mxu0
        %2727 = vmatprep.mubr.bf16.mxu0 0
        %2728 = vmatmul.mubr.bf16.gmra.mxu0 %v2598
        %v2729 = vpop.f32.mrf.mxu0
        %v2730 = vadd.f32 %v2558, %v2729
        %v2731 = vpop.f32.mrf.mxu0
        %v2732 = vpop.f32.mrf.mxu0
        %v2733 = vadd.f32 %v2558, %v2732
        %v2734 = vpop.f32.mrf.mxu0
        %2735 = vmatprep.mubr.bf16.mxu0 0
        %2736 = vmatmul.mubr.bf16.gmra.mxu0 %v2601
        %v2737 = vpop.f32.mrf.mxu0
        %v2738 = vadd.f32 %v2558, %v2737
        %v2739 = vpop.f32.mrf.mxu0
        %v2740 = vpop.f32.mrf.mxu0
        %v2741 = vadd.f32 %v2558, %v2740
        %v2742 = vpop.f32.mrf.mxu0
        %2743 = vmatprep.mubr.bf16.mxu0 0
        %2744 = vmatmul.mubr.bf16.gmra.mxu0 %v2604
        %v2745 = vpop.f32.mrf.mxu0
        %v2746 = vadd.f32 %v2558, %v2745
        %v2747 = vpop.f32.mrf.mxu0
        %v2748 = vpop.f32.mrf.mxu0
        %v2749 = vadd.f32 %v2558, %v2748
        %v2750 = vpop.f32.mrf.mxu0
        %2751 = vmatprep.mubr.bf16.mxu0 0
        %2752 = vmatmul.mubr.bf16.gmra.mxu0 %v2607
        %v2753 = vpop.f32.mrf.mxu0
        %v2754 = vadd.f32 %v2558, %v2753
        %v2755 = vpop.f32.mrf.mxu0
        %v2756 = vpop.f32.mrf.mxu0
        %v2757 = vadd.f32 %v2558, %v2756
        %v2758 = vpop.f32.mrf.mxu0
        %2759 = vmatprep.mubr.bf16.mxu0 0
        %2760 = vmatmul.mubr.bf16.gmra.mxu0 %v2610
        %v2761 = vpop.f32.mrf.mxu0
        %v2762 = vadd.f32 %v2558, %v2761
        %v2763 = vpop.f32.mrf.mxu0
        %v2764 = vpop.f32.mrf.mxu0
        %v2765 = vadd.f32 %v2558, %v2764
        %v2766 = vpop.f32.mrf.mxu0
        %2767 = vmatprep.mubr.bf16.mxu0 0
        %2768 = vmatmul.mubr.bf16.gmra.mxu0 %v2613
        %v2769 = vpop.f32.mrf.mxu0
        %v2770 = vadd.f32 %v2558, %v2769
        %v2771 = vpop.f32.mrf.mxu0
        %v2772 = vpop.f32.mrf.mxu0
        %v2773 = vadd.f32 %v2558, %v2772
        %v2774 = vpop.f32.mrf.mxu0
        %2775 = vdwg.mxu0
        %v2776 = vmax.f32 %v2650, 0.0
        %v2777 = vmax.f32 %v2653, 0.0
        %v2778 = vmax.f32 %v2658, 0.0
        %v2779 = vmax.f32 %v2661, 0.0
        %v2780 = vmax.f32 %v2666, 0.0
        %v2781 = vmax.f32 %v2669, 0.0
        %v2782 = vmax.f32 %v2674, 0.0
        %v2783 = vmax.f32 %v2677, 0.0
        %v2784 = vmax.f32 %v2682, 0.0
        %v2785 = vmax.f32 %v2685, 0.0
        %v2786 = vmax.f32 %v2690, 0.0
        %v2787 = vmax.f32 %v2693, 0.0
        %v2788 = vmax.f32 %v2698, 0.0
        %v2789 = vmax.f32 %v2701, 0.0
        %v2790 = vmax.f32 %v2706, 0.0
        %v2791 = vmax.f32 %v2709, 0.0
        %v2792 = vmax.f32 %v2714, 0.0
        %v2793 = vmax.f32 %v2717, 0.0
        %v2794 = vmax.f32 %v2722, 0.0
        %v2795 = vmax.f32 %v2725, 0.0
        %v2796 = vmax.f32 %v2730, 0.0
        %v2797 = vmax.f32 %v2733, 0.0
        %v2798 = vmax.f32 %v2738, 0.0
        %v2799 = vmax.f32 %v2741, 0.0
        %v2800 = vmax.f32 %v2746, 0.0
        %v2801 = vmax.f32 %v2749, 0.0
        %v2802 = vmax.f32 %v2754, 0.0
        %v2803 = vmax.f32 %v2757, 0.0
        %v2804 = vmax.f32 %v2762, 0.0
        %v2805 = vmax.f32 %v2765, 0.0
        %v2806 = vmax.f32 %v2770, 0.0
        %v2807 = vmax.f32 %v2773, 0.0
        %v2808 = vld [vmem:[%s5] sm:$0x7]
        %v2809 = vld [vmem:[%s5 + $0x4] sm:$0x7]
        %v2810 = vld [vmem:[%s5 + $0x8] sm:$0x7]
        %v2843 = vrot.slane %v2776, 7
        %v2844 = vrot.slane %v2777, 7
        %v2845 = vsel %vm420, %v2843, %v2844
        %v2846 = vrot.slane %v2778, 7
        %v2847 = vrot.slane %v2779, 7
        %v2848 = vsel %vm420, %v2846, %v2847
        %v2849 = vrot.slane %v2780, 7
        %v2850 = vrot.slane %v2781, 7
        %v2851 = vsel %vm420, %v2849, %v2850
        %v2852 = vrot.slane %v2782, 7
        %v2853 = vrot.slane %v2783, 7
        %v2854 = vsel %vm420, %v2852, %v2853
        %v2855 = vrot.slane %v2784, 7
        %v2856 = vrot.slane %v2785, 7
        %v2857 = vsel %vm420, %v2855, %v2856
        %v2858 = vrot.slane %v2786, 7
        %v2859 = vrot.slane %v2787, 7
        %v2860 = vsel %vm420, %v2858, %v2859
        %v2861 = vrot.slane %v2788, 7
        %v2862 = vrot.slane %v2789, 7
        %v2863 = vsel %vm420, %v2861, %v2862
        %v2864 = vrot.slane %v2790, 7
        %v2865 = vrot.slane %v2791, 7
        %v2866 = vsel %vm420, %v2864, %v2865
        %v2867 = vrot.slane %v2792, 7
        %v2868 = vrot.slane %v2793, 7
        %v2869 = vsel %vm420, %v2867, %v2868
        %v2870 = vrot.slane %v2794, 7
        %v2871 = vrot.slane %v2795, 7
        %v2872 = vsel %vm420, %v2870, %v2871
        %v2873 = vrot.slane %v2796, 7
        %v2874 = vrot.slane %v2797, 7
        %v2875 = vsel %vm420, %v2873, %v2874
        %v2876 = vrot.slane %v2798, 7
        %v2877 = vrot.slane %v2799, 7
        %v2878 = vsel %vm420, %v2876, %v2877
        %v2879 = vrot.slane %v2800, 7
        %v2880 = vrot.slane %v2801, 7
        %v2881 = vsel %vm420, %v2879, %v2880
        %v2882 = vrot.slane %v2802, 7
        %v2883 = vrot.slane %v2803, 7
        %v2884 = vsel %vm420, %v2882, %v2883
        %v2885 = vrot.slane %v2804, 7
        %v2886 = vrot.slane %v2805, 7
        %v2887 = vsel %vm420, %v2885, %v2886
        %v2888 = vrot.slane %v2806, 7
        %v2889 = vrot.slane %v2807, 7
        %v2890 = vsel %vm420, %v2888, %v2889
        %v2939 = vsel %vm420, 0.0, %v2843
        %v2940 = vsel %vm420, 0.0, %v2846
        %v2941 = vsel %vm420, 0.0, %v2849
        %v2942 = vsel %vm420, 0.0, %v2852
        %v2943 = vsel %vm420, 0.0, %v2855
        %v2944 = vsel %vm420, 0.0, %v2858
        %v2945 = vsel %vm420, 0.0, %v2861
        %v2946 = vsel %vm420, 0.0, %v2864
        %v2947 = vsel %vm420, 0.0, %v2867
        %v2948 = vsel %vm420, 0.0, %v2870
        %v2949 = vsel %vm420, 0.0, %v2873
        %v2950 = vsel %vm420, 0.0, %v2876
        %v2951 = vsel %vm420, 0.0, %v2879
        %v2952 = vsel %vm420, 0.0, %v2882
        %v2953 = vsel %vm420, 0.0, %v2885
        %v2954 = vsel %vm420, 0.0, %v2888
        %v2955 = vsel %vm420, %v2844, 0.0
        %v2956 = vsel %vm420, %v2847, 0.0
        %v2957 = vsel %vm420, %v2850, 0.0
        %v2958 = vsel %vm420, %v2853, 0.0
        %v2959 = vsel %vm420, %v2856, 0.0
        %v2960 = vsel %vm420, %v2859, 0.0
        %v2961 = vsel %vm420, %v2862, 0.0
        %v2962 = vsel %vm420, %v2865, 0.0
        %v2963 = vsel %vm420, %v2868, 0.0
        %v2964 = vsel %vm420, %v2871, 0.0
        %v2965 = vsel %vm420, %v2874, 0.0
        %v2966 = vsel %vm420, %v2877, 0.0
        %v2967 = vsel %vm420, %v2880, 0.0
        %v2968 = vsel %vm420, %v2883, 0.0
        %v2969 = vsel %vm420, %v2886, 0.0
        %v2970 = vsel %vm420, %v2889, 0.0
        %v2971 = vlaneseq
        %v2972 = vshrl.u32 %v2971, 7
        %v2973 = vsub.s32 1, %v2972
        %v2974 = vrot.slane %v2809, %v2973
        %v2975 = vmul.f32 %v2939, %v2974
        %v2976 = vmul.f32 %v2845, %v2974
        %v2977 = vmul.f32 %v2955, %v2974
        %v2978 = vmul.f32 %v2940, %v2974
        %v2979 = vmul.f32 %v2848, %v2974
        %v2980 = vmul.f32 %v2956, %v2974
        %v2981 = vmul.f32 %v2941, %v2974
        %v2982 = vmul.f32 %v2851, %v2974
        %v2983 = vmul.f32 %v2957, %v2974
        %v2984 = vmul.f32 %v2942, %v2974
        %v2985 = vmul.f32 %v2854, %v2974
        %v2986 = vmul.f32 %v2958, %v2974
        %v2987 = vmul.f32 %v2943, %v2974
        %v2988 = vmul.f32 %v2857, %v2974
        %v2989 = vmul.f32 %v2959, %v2974
        %v2990 = vmul.f32 %v2944, %v2974
        %v2991 = vmul.f32 %v2860, %v2974
        %v2992 = vmul.f32 %v2960, %v2974
        %v2993 = vmul.f32 %v2945, %v2974
        %v2994 = vmul.f32 %v2863, %v2974
        %v2995 = vmul.f32 %v2961, %v2974
        %v2996 = vmul.f32 %v2946, %v2974
        %v2997 = vmul.f32 %v2866, %v2974
        %v2998 = vmul.f32 %v2962, %v2974
        %v2999 = vmul.f32 %v2947, %v2974
        %v3000 = vmul.f32 %v2869, %v2974
        %v3001 = vmul.f32 %v2963, %v2974
        %v3002 = vmul.f32 %v2948, %v2974
        %v3003 = vmul.f32 %v2872, %v2974
        %v3004 = vmul.f32 %v2964, %v2974
        %v3005 = vmul.f32 %v2949, %v2974
        %v3006 = vmul.f32 %v2875, %v2974
        %v3007 = vmul.f32 %v2965, %v2974
        %v3008 = vmul.f32 %v2950, %v2974
        %v3009 = vmul.f32 %v2878, %v2974
        %v3010 = vmul.f32 %v2966, %v2974
        %v3011 = vmul.f32 %v2951, %v2974
        %v3012 = vmul.f32 %v2881, %v2974
        %v3013 = vmul.f32 %v2967, %v2974
        %v3014 = vmul.f32 %v2952, %v2974
        %v3015 = vmul.f32 %v2884, %v2974
        %v3016 = vmul.f32 %v2968, %v2974
        %v3017 = vmul.f32 %v2953, %v2974
        %v3018 = vmul.f32 %v2887, %v2974
        %v3019 = vmul.f32 %v2969, %v2974
        %v3020 = vmul.f32 %v2954, %v2974
        %v3021 = vmul.f32 %v2890, %v2974
        %v3022 = vmul.f32 %v2970, %v2974
        %v3023 = vlaneseq
        %v3024 = vshrl.u32 %v3023, 7
        %v3025 = vsub.s32 0, %v3024
        %v3026 = vrot.slane %v2808, %v3025
        %v3027 = vmul.f32 %v521, %v3026
        %v3028 = vmul.f32 %v422, %v3026
        %v3029 = vmul.f32 %v2939, %v3026
        %v3030 = vmul.f32 %v2845, %v3026
        %v3031 = vmul.f32 %v2940, %v3026
        %v3032 = vmul.f32 %v2848, %v3026
        %v3033 = vmul.f32 %v2941, %v3026
        %v3034 = vmul.f32 %v2851, %v3026
        %v3035 = vmul.f32 %v2942, %v3026
        %v3036 = vmul.f32 %v2854, %v3026
        %v3037 = vmul.f32 %v2943, %v3026
        %v3038 = vmul.f32 %v2857, %v3026
        %v3039 = vmul.f32 %v2944, %v3026
        %v3040 = vmul.f32 %v2860, %v3026
        %v3041 = vmul.f32 %v2945, %v3026
        %v3042 = vmul.f32 %v2863, %v3026
        %v3043 = vmul.f32 %v2946, %v3026
        %v3044 = vmul.f32 %v2866, %v3026
        %v3045 = vmul.f32 %v2947, %v3026
        %v3046 = vmul.f32 %v2869, %v3026
        %v3047 = vmul.f32 %v2948, %v3026
        %v3048 = vmul.f32 %v2872, %v3026
        %v3049 = vmul.f32 %v2949, %v3026
        %v3050 = vmul.f32 %v2875, %v3026
        %v3051 = vmul.f32 %v2950, %v3026
        %v3052 = vmul.f32 %v2878, %v3026
        %v3053 = vmul.f32 %v2951, %v3026
        %v3054 = vmul.f32 %v2881, %v3026
        %v3055 = vmul.f32 %v2952, %v3026
        %v3056 = vmul.f32 %v2884, %v3026
        %v3057 = vmul.f32 %v2953, %v3026
        %v3058 = vmul.f32 %v2887, %v3026
        %v3091 = vrot.slane %v3027, 7
        %v3092 = vrot.slane %v3028, 7
        %v3093 = vsel %vm420, %v3091, %v3092
        %v3094 = vrot.slane %v3029, 7
        %v3095 = vrot.slane %v3030, 7
        %v3096 = vsel %vm420, %v3094, %v3095
        %v3097 = vrot.slane %v3031, 7
        %v3098 = vrot.slane %v3032, 7
        %v3099 = vsel %vm420, %v3097, %v3098
        %v3100 = vrot.slane %v3033, 7
        %v3101 = vrot.slane %v3034, 7
        %v3102 = vsel %vm420, %v3100, %v3101
        %v3103 = vrot.slane %v3035, 7
        %v3104 = vrot.slane %v3036, 7
        %v3105 = vsel %vm420, %v3103, %v3104
        %v3106 = vrot.slane %v3037, 7
        %v3107 = vrot.slane %v3038, 7
        %v3108 = vsel %vm420, %v3106, %v3107
        %v3109 = vrot.slane %v3039, 7
        %v3110 = vrot.slane %v3040, 7
        %v3111 = vsel %vm420, %v3109, %v3110
        %v3112 = vrot.slane %v3041, 7
        %v3113 = vrot.slane %v3042, 7
        %v3114 = vsel %vm420, %v3112, %v3113
        %v3115 = vrot.slane %v3043, 7
        %v3116 = vrot.slane %v3044, 7
        %v3117 = vsel %vm420, %v3115, %v3116
        %v3118 = vrot.slane %v3045, 7
        %v3119 = vrot.slane %v3046, 7
        %v3120 = vsel %vm420, %v3118, %v3119
        %v3121 = vrot.slane %v3047, 7
        %v3122 = vrot.slane %v3048, 7
        %v3123 = vsel %vm420, %v3121, %v3122
        %v3124 = vrot.slane %v3049, 7
        %v3125 = vrot.slane %v3050, 7
        %v3126 = vsel %vm420, %v3124, %v3125
        %v3127 = vrot.slane %v3051, 7
        %v3128 = vrot.slane %v3052, 7
        %v3129 = vsel %vm420, %v3127, %v3128
        %v3130 = vrot.slane %v3053, 7
        %v3131 = vrot.slane %v3054, 7
        %v3132 = vsel %vm420, %v3130, %v3131
        %v3133 = vrot.slane %v3055, 7
        %v3134 = vrot.slane %v3056, 7
        %v3135 = vsel %vm420, %v3133, %v3134
        %v3136 = vrot.slane %v3057, 7
        %v3137 = vrot.slane %v3058, 7
        %v3138 = vsel %vm420, %v3136, %v3137
        %v3187 = vadd.f32 %v2975, %v3091
        %v3188 = vadd.f32 %v2976, %v3093
        %v3189 = vadd.f32 %v2977, %v3092
        %v3190 = vadd.f32 %v2978, %v3094
        %v3191 = vadd.f32 %v2979, %v3096
        %v3192 = vadd.f32 %v2980, %v3095
        %v3193 = vadd.f32 %v2981, %v3097
        %v3194 = vadd.f32 %v2982, %v3099
        %v3195 = vadd.f32 %v2983, %v3098
        %v3196 = vadd.f32 %v2984, %v3100
        %v3197 = vadd.f32 %v2985, %v3102
        %v3198 = vadd.f32 %v2986, %v3101
        %v3199 = vadd.f32 %v2987, %v3103
        %v3200 = vadd.f32 %v2988, %v3105
        %v3201 = vadd.f32 %v2989, %v3104
        %v3202 = vadd.f32 %v2990, %v3106
        %v3203 = vadd.f32 %v2991, %v3108
        %v3204 = vadd.f32 %v2992, %v3107
        %v3205 = vadd.f32 %v2993, %v3109
        %v3206 = vadd.f32 %v2994, %v3111
        %v3207 = vadd.f32 %v2995, %v3110
        %v3208 = vadd.f32 %v2996, %v3112
        %v3209 = vadd.f32 %v2997, %v3114
        %v3210 = vadd.f32 %v2998, %v3113
        %v3211 = vadd.f32 %v2999, %v3115
        %v3212 = vadd.f32 %v3000, %v3117
        %v3213 = vadd.f32 %v3001, %v3116
        %v3214 = vadd.f32 %v3002, %v3118
        %v3215 = vadd.f32 %v3003, %v3120
        %v3216 = vadd.f32 %v3004, %v3119
        %v3217 = vadd.f32 %v3005, %v3121
        %v3218 = vadd.f32 %v3006, %v3123
        %v3219 = vadd.f32 %v3007, %v3122
        %v3220 = vadd.f32 %v3008, %v3124
        %v3221 = vadd.f32 %v3009, %v3126
        %v3222 = vadd.f32 %v3010, %v3125
        %v3223 = vadd.f32 %v3011, %v3127
        %v3224 = vadd.f32 %v3012, %v3129
        %v3225 = vadd.f32 %v3013, %v3128
        %v3226 = vadd.f32 %v3014, %v3130
        %v3227 = vadd.f32 %v3015, %v3132
        %v3228 = vadd.f32 %v3016, %v3131
        %v3229 = vadd.f32 %v3017, %v3133
        %v3230 = vadd.f32 %v3018, %v3135
        %v3231 = vadd.f32 %v3019, %v3134
        %v3232 = vadd.f32 %v3020, %v3136
        %v3233 = vadd.f32 %v3021, %v3138
        %v3234 = vadd.f32 %v3022, %v3137
        %v3235 = vlaneseq
        %v3236 = vshrl.u32 %v3235, 7
        %v3237 = vsub.s32 1, %v3236
        %v3238 = vrot.slane %v2808, %v3237
        %v3239 = vmul.f32 %v521, %v3238
        %v3240 = vmul.f32 %v422, %v3238
        %v3241 = vmul.f32 %v538, %v3238
        %v3242 = vmul.f32 %v2939, %v3238
        %v3243 = vmul.f32 %v2845, %v3238
        %v3244 = vmul.f32 %v2955, %v3238
        %v3245 = vmul.f32 %v2940, %v3238
        %v3246 = vmul.f32 %v2848, %v3238
        %v3247 = vmul.f32 %v2956, %v3238
        %v3248 = vmul.f32 %v2941, %v3238
        %v3249 = vmul.f32 %v2851, %v3238
        %v3250 = vmul.f32 %v2957, %v3238
        %v3251 = vmul.f32 %v2942, %v3238
        %v3252 = vmul.f32 %v2854, %v3238
        %v3253 = vmul.f32 %v2958, %v3238
        %v3254 = vmul.f32 %v2943, %v3238
        %v3255 = vmul.f32 %v2857, %v3238
        %v3256 = vmul.f32 %v2959, %v3238
        %v3257 = vmul.f32 %v2944, %v3238
        %v3258 = vmul.f32 %v2860, %v3238
        %v3259 = vmul.f32 %v2960, %v3238
        %v3260 = vmul.f32 %v2945, %v3238
        %v3261 = vmul.f32 %v2863, %v3238
        %v3262 = vmul.f32 %v2961, %v3238
        %v3263 = vmul.f32 %v2946, %v3238
        %v3264 = vmul.f32 %v2866, %v3238
        %v3265 = vmul.f32 %v2962, %v3238
        %v3266 = vmul.f32 %v2947, %v3238
        %v3267 = vmul.f32 %v2869, %v3238
        %v3268 = vmul.f32 %v2963, %v3238
        %v3269 = vmul.f32 %v2948, %v3238
        %v3270 = vmul.f32 %v2872, %v3238
        %v3271 = vmul.f32 %v2964, %v3238
        %v3272 = vmul.f32 %v2949, %v3238
        %v3273 = vmul.f32 %v2875, %v3238
        %v3274 = vmul.f32 %v2965, %v3238
        %v3275 = vmul.f32 %v2950, %v3238
        %v3276 = vmul.f32 %v2878, %v3238
        %v3277 = vmul.f32 %v2966, %v3238
        %v3278 = vmul.f32 %v2951, %v3238
        %v3279 = vmul.f32 %v2881, %v3238
        %v3280 = vmul.f32 %v2967, %v3238
        %v3281 = vmul.f32 %v2952, %v3238
        %v3282 = vmul.f32 %v2884, %v3238
        %v3283 = vmul.f32 %v2968, %v3238
        %v3284 = vmul.f32 %v2953, %v3238
        %v3285 = vmul.f32 %v2887, %v3238
        %v3286 = vmul.f32 %v2969, %v3238
        %v3287 = vadd.f32 %v3187, %v3239
        %v3288 = vadd.f32 %v3188, %v3240
        %v3289 = vadd.f32 %v3189, %v3241
        %v3290 = vadd.f32 %v3190, %v3242
        %v3291 = vadd.f32 %v3191, %v3243
        %v3292 = vadd.f32 %v3192, %v3244
        %v3293 = vadd.f32 %v3193, %v3245
        %v3294 = vadd.f32 %v3194, %v3246
        %v3295 = vadd.f32 %v3195, %v3247
        %v3296 = vadd.f32 %v3196, %v3248
        %v3297 = vadd.f32 %v3197, %v3249
        %v3298 = vadd.f32 %v3198, %v3250
        %v3299 = vadd.f32 %v3199, %v3251
        %v3300 = vadd.f32 %v3200, %v3252
        %v3301 = vadd.f32 %v3201, %v3253
        %v3302 = vadd.f32 %v3202, %v3254
        %v3303 = vadd.f32 %v3203, %v3255
        %v3304 = vadd.f32 %v3204, %v3256
        %v3305 = vadd.f32 %v3205, %v3257
        %v3306 = vadd.f32 %v3206, %v3258
        %v3307 = vadd.f32 %v3207, %v3259
        %v3308 = vadd.f32 %v3208, %v3260
        %v3309 = vadd.f32 %v3209, %v3261
        %v3310 = vadd.f32 %v3210, %v3262
        %v3311 = vadd.f32 %v3211, %v3263
        %v3312 = vadd.f32 %v3212, %v3264
        %v3313 = vadd.f32 %v3213, %v3265
        %v3314 = vadd.f32 %v3214, %v3266
        %v3315 = vadd.f32 %v3215, %v3267
        %v3316 = vadd.f32 %v3216, %v3268
        %v3317 = vadd.f32 %v3217, %v3269
        %v3318 = vadd.f32 %v3218, %v3270
        %v3319 = vadd.f32 %v3219, %v3271
        %v3320 = vadd.f32 %v3220, %v3272
        %v3321 = vadd.f32 %v3221, %v3273
        %v3322 = vadd.f32 %v3222, %v3274
        %v3323 = vadd.f32 %v3223, %v3275
        %v3324 = vadd.f32 %v3224, %v3276
        %v3325 = vadd.f32 %v3225, %v3277
        %v3326 = vadd.f32 %v3226, %v3278
        %v3327 = vadd.f32 %v3227, %v3279
        %v3328 = vadd.f32 %v3228, %v3280
        %v3329 = vadd.f32 %v3229, %v3281
        %v3330 = vadd.f32 %v3230, %v3282
        %v3331 = vadd.f32 %v3231, %v3283
        %v3332 = vadd.f32 %v3232, %v3284
        %v3333 = vadd.f32 %v3233, %v3285
        %v3334 = vadd.f32 %v3234, %v3286
        %v3335 = vlaneseq
        %v3336 = vshrl.u32 %v3335, 7
        %v3337 = vsub.s32 2, %v3336
        %v3338 = vrot.slane %v2808, %v3337
        %v3339 = vmul.f32 %v521, %v3338
        %v3340 = vmul.f32 %v422, %v3338
        %v3341 = vmul.f32 %v538, %v3338
        %v3342 = vmul.f32 %v2939, %v3338
        %v3343 = vmul.f32 %v2845, %v3338
        %v3344 = vmul.f32 %v2955, %v3338
        %v3345 = vmul.f32 %v2940, %v3338
        %v3346 = vmul.f32 %v2848, %v3338
        %v3347 = vmul.f32 %v2956, %v3338
        %v3348 = vmul.f32 %v2941, %v3338
        %v3349 = vmul.f32 %v2851, %v3338
        %v3350 = vmul.f32 %v2957, %v3338
        %v3351 = vmul.f32 %v2942, %v3338
        %v3352 = vmul.f32 %v2854, %v3338
        %v3353 = vmul.f32 %v2958, %v3338
        %v3354 = vmul.f32 %v2943, %v3338
        %v3355 = vmul.f32 %v2857, %v3338
        %v3356 = vmul.f32 %v2959, %v3338
        %v3357 = vmul.f32 %v2944, %v3338
        %v3358 = vmul.f32 %v2860, %v3338
        %v3359 = vmul.f32 %v2960, %v3338
        %v3360 = vmul.f32 %v2945, %v3338
        %v3361 = vmul.f32 %v2863, %v3338
        %v3362 = vmul.f32 %v2961, %v3338
        %v3363 = vmul.f32 %v2946, %v3338
        %v3364 = vmul.f32 %v2866, %v3338
        %v3365 = vmul.f32 %v2962, %v3338
        %v3366 = vmul.f32 %v2947, %v3338
        %v3367 = vmul.f32 %v2869, %v3338
        %v3368 = vmul.f32 %v2963, %v3338
        %v3369 = vmul.f32 %v2948, %v3338
        %v3370 = vmul.f32 %v2872, %v3338
        %v3371 = vmul.f32 %v2964, %v3338
        %v3372 = vmul.f32 %v2949, %v3338
        %v3373 = vmul.f32 %v2875, %v3338
        %v3374 = vmul.f32 %v2965, %v3338
        %v3375 = vmul.f32 %v2950, %v3338
        %v3376 = vmul.f32 %v2878, %v3338
        %v3377 = vmul.f32 %v2966, %v3338
        %v3378 = vmul.f32 %v2951, %v3338
        %v3379 = vmul.f32 %v2881, %v3338
        %v3380 = vmul.f32 %v2967, %v3338
        %v3381 = vmul.f32 %v2952, %v3338
        %v3382 = vmul.f32 %v2884, %v3338
        %v3383 = vmul.f32 %v2968, %v3338
        %v3384 = vmul.f32 %v2953, %v3338
        %v3385 = vmul.f32 %v2887, %v3338
        %v3386 = vmul.f32 %v2969, %v3338
        %v3435 = vrot.slane %v3339, 1
        %v3436 = vrot.slane %v3340, 1
        %v3437 = vsel %vm1019, %v3435, %v3436
        %v3438 = vrot.slane %v3341, 1
        %v3439 = vsel %vm1019, %v3436, %v3438
        %v3440 = vrot.slane %v3342, 1
        %v3441 = vrot.slane %v3343, 1
        %v3442 = vsel %vm1019, %v3440, %v3441
        %v3443 = vrot.slane %v3344, 1
        %v3444 = vsel %vm1019, %v3441, %v3443
        %v3445 = vrot.slane %v3345, 1
        %v3446 = vrot.slane %v3346, 1
        %v3447 = vsel %vm1019, %v3445, %v3446
        %v3448 = vrot.slane %v3347, 1
        %v3449 = vsel %vm1019, %v3446, %v3448
        %v3450 = vrot.slane %v3348, 1
        %v3451 = vrot.slane %v3349, 1
        %v3452 = vsel %vm1019, %v3450, %v3451
        %v3453 = vrot.slane %v3350, 1
        %v3454 = vsel %vm1019, %v3451, %v3453
        %v3455 = vrot.slane %v3351, 1
        %v3456 = vrot.slane %v3352, 1
        %v3457 = vsel %vm1019, %v3455, %v3456
        %v3458 = vrot.slane %v3353, 1
        %v3459 = vsel %vm1019, %v3456, %v3458
        %v3460 = vrot.slane %v3354, 1
        %v3461 = vrot.slane %v3355, 1
        %v3462 = vsel %vm1019, %v3460, %v3461
        %v3463 = vrot.slane %v3356, 1
        %v3464 = vsel %vm1019, %v3461, %v3463
        %v3465 = vrot.slane %v3357, 1
        %v3466 = vrot.slane %v3358, 1
        %v3467 = vsel %vm1019, %v3465, %v3466
        %v3468 = vrot.slane %v3359, 1
        %v3469 = vsel %vm1019, %v3466, %v3468
        %v3470 = vrot.slane %v3360, 1
        %v3471 = vrot.slane %v3361, 1
        %v3472 = vsel %vm1019, %v3470, %v3471
        %v3473 = vrot.slane %v3362, 1
        %v3474 = vsel %vm1019, %v3471, %v3473
        %v3475 = vrot.slane %v3363, 1
        %v3476 = vrot.slane %v3364, 1
        %v3477 = vsel %vm1019, %v3475, %v3476
        %v3478 = vrot.slane %v3365, 1
        %v3479 = vsel %vm1019, %v3476, %v3478
        %v3480 = vrot.slane %v3366, 1
        %v3481 = vrot.slane %v3367, 1
        %v3482 = vsel %vm1019, %v3480, %v3481
        %v3483 = vrot.slane %v3368, 1
        %v3484 = vsel %vm1019, %v3481, %v3483
        %v3485 = vrot.slane %v3369, 1
        %v3486 = vrot.slane %v3370, 1
        %v3487 = vsel %vm1019, %v3485, %v3486
        %v3488 = vrot.slane %v3371, 1
        %v3489 = vsel %vm1019, %v3486, %v3488
        %v3490 = vrot.slane %v3372, 1
        %v3491 = vrot.slane %v3373, 1
        %v3492 = vsel %vm1019, %v3490, %v3491
        %v3493 = vrot.slane %v3374, 1
        %v3494 = vsel %vm1019, %v3491, %v3493
        %v3495 = vrot.slane %v3375, 1
        %v3496 = vrot.slane %v3376, 1
        %v3497 = vsel %vm1019, %v3495, %v3496
        %v3498 = vrot.slane %v3377, 1
        %v3499 = vsel %vm1019, %v3496, %v3498
        %v3500 = vrot.slane %v3378, 1
        %v3501 = vrot.slane %v3379, 1
        %v3502 = vsel %vm1019, %v3500, %v3501
        %v3503 = vrot.slane %v3380, 1
        %v3504 = vsel %vm1019, %v3501, %v3503
        %v3505 = vrot.slane %v3381, 1
        %v3506 = vrot.slane %v3382, 1
        %v3507 = vsel %vm1019, %v3505, %v3506
        %v3508 = vrot.slane %v3383, 1
        %v3509 = vsel %vm1019, %v3506, %v3508
        %v3510 = vrot.slane %v3384, 1
        %v3511 = vrot.slane %v3385, 1
        %v3512 = vsel %vm1019, %v3510, %v3511
        %v3513 = vrot.slane %v3386, 1
        %v3514 = vsel %vm1019, %v3511, %v3513
        %v3563 = vadd.f32 %v3287, %v3437
        %v3564 = vadd.f32 %v3288, %v3439
        %v3565 = vadd.f32 %v3289, %v3438
        %v3566 = vadd.f32 %v3290, %v3442
        %v3567 = vadd.f32 %v3291, %v3444
        %v3568 = vadd.f32 %v3292, %v3443
        %v3569 = vadd.f32 %v3293, %v3447
        %v3570 = vadd.f32 %v3294, %v3449
        %v3571 = vadd.f32 %v3295, %v3448
        %v3572 = vadd.f32 %v3296, %v3452
        %v3573 = vadd.f32 %v3297, %v3454
        %v3574 = vadd.f32 %v3298, %v3453
        %v3575 = vadd.f32 %v3299, %v3457
        %v3576 = vadd.f32 %v3300, %v3459
        %v3577 = vadd.f32 %v3301, %v3458
        %v3578 = vadd.f32 %v3302, %v3462
        %v3579 = vadd.f32 %v3303, %v3464
        %v3580 = vadd.f32 %v3304, %v3463
        %v3581 = vadd.f32 %v3305, %v3467
        %v3582 = vadd.f32 %v3306, %v3469
        %v3583 = vadd.f32 %v3307, %v3468
        %v3584 = vadd.f32 %v3308, %v3472
        %v3585 = vadd.f32 %v3309, %v3474
        %v3586 = vadd.f32 %v3310, %v3473
        %v3587 = vadd.f32 %v3311, %v3477
        %v3588 = vadd.f32 %v3312, %v3479
        %v3589 = vadd.f32 %v3313, %v3478
        %v3590 = vadd.f32 %v3314, %v3482
        %v3591 = vadd.f32 %v3315, %v3484
        %v3592 = vadd.f32 %v3316, %v3483
        %v3593 = vadd.f32 %v3317, %v3487
        %v3594 = vadd.f32 %v3318, %v3489
        %v3595 = vadd.f32 %v3319, %v3488
        %v3596 = vadd.f32 %v3320, %v3492
        %v3597 = vadd.f32 %v3321, %v3494
        %v3598 = vadd.f32 %v3322, %v3493
        %v3599 = vadd.f32 %v3323, %v3497
        %v3600 = vadd.f32 %v3324, %v3499
        %v3601 = vadd.f32 %v3325, %v3498
        %v3602 = vadd.f32 %v3326, %v3502
        %v3603 = vadd.f32 %v3327, %v3504
        %v3604 = vadd.f32 %v3328, %v3503
        %v3605 = vadd.f32 %v3329, %v3507
        %v3606 = vadd.f32 %v3330, %v3509
        %v3607 = vadd.f32 %v3331, %v3508
        %v3608 = vadd.f32 %v3332, %v3512
        %v3609 = vadd.f32 %v3333, %v3514
        %v3610 = vadd.f32 %v3334, %v3513
        %v3611 = vlaneseq
        %v3612 = vshrl.u32 %v3611, 7
        %v3613 = vsub.s32 0, %v3612
        %v3614 = vrot.slane %v2809, %v3613
        %v3615 = vmul.f32 %v2939, %v3614
        %v3616 = vmul.f32 %v2845, %v3614
        %v3617 = vmul.f32 %v2940, %v3614
        %v3618 = vmul.f32 %v2848, %v3614
        %v3619 = vmul.f32 %v2941, %v3614
        %v3620 = vmul.f32 %v2851, %v3614
        %v3621 = vmul.f32 %v2942, %v3614
        %v3622 = vmul.f32 %v2854, %v3614
        %v3623 = vmul.f32 %v2943, %v3614
        %v3624 = vmul.f32 %v2857, %v3614
        %v3625 = vmul.f32 %v2944, %v3614
        %v3626 = vmul.f32 %v2860, %v3614
        %v3627 = vmul.f32 %v2945, %v3614
        %v3628 = vmul.f32 %v2863, %v3614
        %v3629 = vmul.f32 %v2946, %v3614
        %v3630 = vmul.f32 %v2866, %v3614
        %v3631 = vmul.f32 %v2947, %v3614
        %v3632 = vmul.f32 %v2869, %v3614
        %v3633 = vmul.f32 %v2948, %v3614
        %v3634 = vmul.f32 %v2872, %v3614
        %v3635 = vmul.f32 %v2949, %v3614
        %v3636 = vmul.f32 %v2875, %v3614
        %v3637 = vmul.f32 %v2950, %v3614
        %v3638 = vmul.f32 %v2878, %v3614
        %v3639 = vmul.f32 %v2951, %v3614
        %v3640 = vmul.f32 %v2881, %v3614
        %v3641 = vmul.f32 %v2952, %v3614
        %v3642 = vmul.f32 %v2884, %v3614
        %v3643 = vmul.f32 %v2953, %v3614
        %v3644 = vmul.f32 %v2887, %v3614
        %v3645 = vmul.f32 %v2954, %v3614
        %v3646 = vmul.f32 %v2890, %v3614
        %v3679 = vrot.slane %v3615, 7
        %v3680 = vrot.slane %v3616, 7
        %v3681 = vsel %vm420, %v3679, %v3680
        %v3682 = vrot.slane %v3617, 7
        %v3683 = vrot.slane %v3618, 7
        %v3684 = vsel %vm420, %v3682, %v3683
        %v3685 = vrot.slane %v3619, 7
        %v3686 = vrot.slane %v3620, 7
        %v3687 = vsel %vm420, %v3685, %v3686
        %v3688 = vrot.slane %v3621, 7
        %v3689 = vrot.slane %v3622, 7
        %v3690 = vsel %vm420, %v3688, %v3689
        %v3691 = vrot.slane %v3623, 7
        %v3692 = vrot.slane %v3624, 7
        %v3693 = vsel %vm420, %v3691, %v3692
        %v3694 = vrot.slane %v3625, 7
        %v3695 = vrot.slane %v3626, 7
        %v3696 = vsel %vm420, %v3694, %v3695
        %v3697 = vrot.slane %v3627, 7
        %v3698 = vrot.slane %v3628, 7
        %v3699 = vsel %vm420, %v3697, %v3698
        %v3700 = vrot.slane %v3629, 7
        %v3701 = vrot.slane %v3630, 7
        %v3702 = vsel %vm420, %v3700, %v3701
        %v3703 = vrot.slane %v3631, 7
        %v3704 = vrot.slane %v3632, 7
        %v3705 = vsel %vm420, %v3703, %v3704
        %v3706 = vrot.slane %v3633, 7
        %v3707 = vrot.slane %v3634, 7
        %v3708 = vsel %vm420, %v3706, %v3707
        %v3709 = vrot.slane %v3635, 7
        %v3710 = vrot.slane %v3636, 7
        %v3711 = vsel %vm420, %v3709, %v3710
        %v3712 = vrot.slane %v3637, 7
        %v3713 = vrot.slane %v3638, 7
        %v3714 = vsel %vm420, %v3712, %v3713
        %v3715 = vrot.slane %v3639, 7
        %v3716 = vrot.slane %v3640, 7
        %v3717 = vsel %vm420, %v3715, %v3716
        %v3718 = vrot.slane %v3641, 7
        %v3719 = vrot.slane %v3642, 7
        %v3720 = vsel %vm420, %v3718, %v3719
        %v3721 = vrot.slane %v3643, 7
        %v3722 = vrot.slane %v3644, 7
        %v3723 = vsel %vm420, %v3721, %v3722
        %v3724 = vrot.slane %v3645, 7
        %v3725 = vrot.slane %v3646, 7
        %v3726 = vsel %vm420, %v3724, %v3725
        %v3775 = vadd.f32 %v3563, %v3679
        %v3776 = vadd.f32 %v3564, %v3681
        %v3777 = vadd.f32 %v3565, %v3680
        %v3778 = vadd.f32 %v3566, %v3682
        %v3779 = vadd.f32 %v3567, %v3684
        %v3780 = vadd.f32 %v3568, %v3683
        %v3781 = vadd.f32 %v3569, %v3685
        %v3782 = vadd.f32 %v3570, %v3687
        %v3783 = vadd.f32 %v3571, %v3686
        %v3784 = vadd.f32 %v3572, %v3688
        %v3785 = vadd.f32 %v3573, %v3690
        %v3786 = vadd.f32 %v3574, %v3689
        %v3787 = vadd.f32 %v3575, %v3691
        %v3788 = vadd.f32 %v3576, %v3693
        %v3789 = vadd.f32 %v3577, %v3692
        %v3790 = vadd.f32 %v3578, %v3694
        %v3791 = vadd.f32 %v3579, %v3696
        %v3792 = vadd.f32 %v3580, %v3695
        %v3793 = vadd.f32 %v3581, %v3697
        %v3794 = vadd.f32 %v3582, %v3699
        %v3795 = vadd.f32 %v3583, %v3698
        %v3796 = vadd.f32 %v3584, %v3700
        %v3797 = vadd.f32 %v3585, %v3702
        %v3798 = vadd.f32 %v3586, %v3701
        %v3799 = vadd.f32 %v3587, %v3703
        %v3800 = vadd.f32 %v3588, %v3705
        %v3801 = vadd.f32 %v3589, %v3704
        %v3802 = vadd.f32 %v3590, %v3706
        %v3803 = vadd.f32 %v3591, %v3708
        %v3804 = vadd.f32 %v3592, %v3707
        %v3805 = vadd.f32 %v3593, %v3709
        %v3806 = vadd.f32 %v3594, %v3711
        %v3807 = vadd.f32 %v3595, %v3710
        %v3808 = vadd.f32 %v3596, %v3712
        %v3809 = vadd.f32 %v3597, %v3714
        %v3810 = vadd.f32 %v3598, %v3713
        %v3811 = vadd.f32 %v3599, %v3715
        %v3812 = vadd.f32 %v3600, %v3717
        %v3813 = vadd.f32 %v3601, %v3716
        %v3814 = vadd.f32 %v3602, %v3718
        %v3815 = vadd.f32 %v3603, %v3720
        %v3816 = vadd.f32 %v3604, %v3719
        %v3817 = vadd.f32 %v3605, %v3721
        %v3818 = vadd.f32 %v3606, %v3723
        %v3819 = vadd.f32 %v3607, %v3722
        %v3820 = vadd.f32 %v3608, %v3724
        %v3821 = vadd.f32 %v3609, %v3726
        %v3822 = vadd.f32 %v3610, %v3725
        %v3823 = vlaneseq
        %v3824 = vshrl.u32 %v3823, 7
        %v3825 = vsub.s32 2, %v3824
        %v3826 = vrot.slane %v2809, %v3825
        %v3827 = vmul.f32 %v2939, %v3826
        %v3828 = vmul.f32 %v2845, %v3826
        %v3829 = vmul.f32 %v2955, %v3826
        %v3830 = vmul.f32 %v2940, %v3826
        %v3831 = vmul.f32 %v2848, %v3826
        %v3832 = vmul.f32 %v2956, %v3826
        %v3833 = vmul.f32 %v2941, %v3826
        %v3834 = vmul.f32 %v2851, %v3826
        %v3835 = vmul.f32 %v2957, %v3826
        %v3836 = vmul.f32 %v2942, %v3826
        %v3837 = vmul.f32 %v2854, %v3826
        %v3838 = vmul.f32 %v2958, %v3826
        %v3839 = vmul.f32 %v2943, %v3826
        %v3840 = vmul.f32 %v2857, %v3826
        %v3841 = vmul.f32 %v2959, %v3826
        %v3842 = vmul.f32 %v2944, %v3826
        %v3843 = vmul.f32 %v2860, %v3826
        %v3844 = vmul.f32 %v2960, %v3826
        %v3845 = vmul.f32 %v2945, %v3826
        %v3846 = vmul.f32 %v2863, %v3826
        %v3847 = vmul.f32 %v2961, %v3826
        %v3848 = vmul.f32 %v2946, %v3826
        %v3849 = vmul.f32 %v2866, %v3826
        %v3850 = vmul.f32 %v2962, %v3826
        %v3851 = vmul.f32 %v2947, %v3826
        %v3852 = vmul.f32 %v2869, %v3826
        %v3853 = vmul.f32 %v2963, %v3826
        %v3854 = vmul.f32 %v2948, %v3826
        %v3855 = vmul.f32 %v2872, %v3826
        %v3856 = vmul.f32 %v2964, %v3826
        %v3857 = vmul.f32 %v2949, %v3826
        %v3858 = vmul.f32 %v2875, %v3826
        %v3859 = vmul.f32 %v2965, %v3826
        %v3860 = vmul.f32 %v2950, %v3826
        %v3861 = vmul.f32 %v2878, %v3826
        %v3862 = vmul.f32 %v2966, %v3826
        %v3863 = vmul.f32 %v2951, %v3826
        %v3864 = vmul.f32 %v2881, %v3826
        %v3865 = vmul.f32 %v2967, %v3826
        %v3866 = vmul.f32 %v2952, %v3826
        %v3867 = vmul.f32 %v2884, %v3826
        %v3868 = vmul.f32 %v2968, %v3826
        %v3869 = vmul.f32 %v2953, %v3826
        %v3870 = vmul.f32 %v2887, %v3826
        %v3871 = vmul.f32 %v2969, %v3826
        %v3872 = vmul.f32 %v2954, %v3826
        %v3873 = vmul.f32 %v2890, %v3826
        %v3874 = vmul.f32 %v2970, %v3826
        %v3923 = vrot.slane %v3827, 1
        %v3924 = vrot.slane %v3828, 1
        %v3925 = vsel %vm1019, %v3923, %v3924
        %v3926 = vrot.slane %v3829, 1
        %v3927 = vsel %vm1019, %v3924, %v3926
        %v3928 = vrot.slane %v3830, 1
        %v3929 = vrot.slane %v3831, 1
        %v3930 = vsel %vm1019, %v3928, %v3929
        %v3931 = vrot.slane %v3832, 1
        %v3932 = vsel %vm1019, %v3929, %v3931
        %v3933 = vrot.slane %v3833, 1
        %v3934 = vrot.slane %v3834, 1
        %v3935 = vsel %vm1019, %v3933, %v3934
        %v3936 = vrot.slane %v3835, 1
        %v3937 = vsel %vm1019, %v3934, %v3936
        %v3938 = vrot.slane %v3836, 1
        %v3939 = vrot.slane %v3837, 1
        %v3940 = vsel %vm1019, %v3938, %v3939
        %v3941 = vrot.slane %v3838, 1
        %v3942 = vsel %vm1019, %v3939, %v3941
        %v3943 = vrot.slane %v3839, 1
        %v3944 = vrot.slane %v3840, 1
        %v3945 = vsel %vm1019, %v3943, %v3944
        %v3946 = vrot.slane %v3841, 1
        %v3947 = vsel %vm1019, %v3944, %v3946
        %v3948 = vrot.slane %v3842, 1
        %v3949 = vrot.slane %v3843, 1
        %v3950 = vsel %vm1019, %v3948, %v3949
        %v3951 = vrot.slane %v3844, 1
        %v3952 = vsel %vm1019, %v3949, %v3951
        %v3953 = vrot.slane %v3845, 1
        %v3954 = vrot.slane %v3846, 1
        %v3955 = vsel %vm1019, %v3953, %v3954
        %v3956 = vrot.slane %v3847, 1
        %v3957 = vsel %vm1019, %v3954, %v3956
        %v3958 = vrot.slane %v3848, 1
        %v3959 = vrot.slane %v3849, 1
        %v3960 = vsel %vm1019, %v3958, %v3959
        %v3961 = vrot.slane %v3850, 1
        %v3962 = vsel %vm1019, %v3959, %v3961
        %v3963 = vrot.slane %v3851, 1
        %v3964 = vrot.slane %v3852, 1
        %v3965 = vsel %vm1019, %v3963, %v3964
        %v3966 = vrot.slane %v3853, 1
        %v3967 = vsel %vm1019, %v3964, %v3966
        %v3968 = vrot.slane %v3854, 1
        %v3969 = vrot.slane %v3855, 1
        %v3970 = vsel %vm1019, %v3968, %v3969
        %v3971 = vrot.slane %v3856, 1
        %v3972 = vsel %vm1019, %v3969, %v3971
        %v3973 = vrot.slane %v3857, 1
        %v3974 = vrot.slane %v3858, 1
        %v3975 = vsel %vm1019, %v3973, %v3974
        %v3976 = vrot.slane %v3859, 1
        %v3977 = vsel %vm1019, %v3974, %v3976
        %v3978 = vrot.slane %v3860, 1
        %v3979 = vrot.slane %v3861, 1
        %v3980 = vsel %vm1019, %v3978, %v3979
        %v3981 = vrot.slane %v3862, 1
        %v3982 = vsel %vm1019, %v3979, %v3981
        %v3983 = vrot.slane %v3863, 1
        %v3984 = vrot.slane %v3864, 1
        %v3985 = vsel %vm1019, %v3983, %v3984
        %v3986 = vrot.slane %v3865, 1
        %v3987 = vsel %vm1019, %v3984, %v3986
        %v3988 = vrot.slane %v3866, 1
        %v3989 = vrot.slane %v3867, 1
        %v3990 = vsel %vm1019, %v3988, %v3989
        %v3991 = vrot.slane %v3868, 1
        %v3992 = vsel %vm1019, %v3989, %v3991
        %v3993 = vrot.slane %v3869, 1
        %v3994 = vrot.slane %v3870, 1
        %v3995 = vsel %vm1019, %v3993, %v3994
        %v3996 = vrot.slane %v3871, 1
        %v3997 = vsel %vm1019, %v3994, %v3996
        %v3998 = vrot.slane %v3872, 1
        %v3999 = vrot.slane %v3873, 1
        %v4000 = vsel %vm1019, %v3998, %v3999
        %v4001 = vrot.slane %v3874, 1
        %v4002 = vsel %vm1019, %v3999, %v4001
        %v4051 = vadd.f32 %v3775, %v3925
        %v4052 = vadd.f32 %v3776, %v3927
        %v4053 = vadd.f32 %v3777, %v3926
        %v4054 = vadd.f32 %v3778, %v3930
        %v4055 = vadd.f32 %v3779, %v3932
        %v4056 = vadd.f32 %v3780, %v3931
        %v4057 = vadd.f32 %v3781, %v3935
        %v4058 = vadd.f32 %v3782, %v3937
        %v4059 = vadd.f32 %v3783, %v3936
        %v4060 = vadd.f32 %v3784, %v3940
        %v4061 = vadd.f32 %v3785, %v3942
        %v4062 = vadd.f32 %v3786, %v3941
        %v4063 = vadd.f32 %v3787, %v3945
        %v4064 = vadd.f32 %v3788, %v3947
        %v4065 = vadd.f32 %v3789, %v3946
        %v4066 = vadd.f32 %v3790, %v3950
        %v4067 = vadd.f32 %v3791, %v3952
        %v4068 = vadd.f32 %v3792, %v3951
        %v4069 = vadd.f32 %v3793, %v3955
        %v4070 = vadd.f32 %v3794, %v3957
        %v4071 = vadd.f32 %v3795, %v3956
        %v4072 = vadd.f32 %v3796, %v3960
        %v4073 = vadd.f32 %v3797, %v3962
        %v4074 = vadd.f32 %v3798, %v3961
        %v4075 = vadd.f32 %v3799, %v3965
        %v4076 = vadd.f32 %v3800, %v3967
        %v4077 = vadd.f32 %v3801, %v3966
        %v4078 = vadd.f32 %v3802, %v3970
        %v4079 = vadd.f32 %v3803, %v3972
        %v4080 = vadd.f32 %v3804, %v3971
        %v4081 = vadd.f32 %v3805, %v3975
        %v4082 = vadd.f32 %v3806, %v3977
        %v4083 = vadd.f32 %v3807, %v3976
        %v4084 = vadd.f32 %v3808, %v3980
        %v4085 = vadd.f32 %v3809, %v3982
        %v4086 = vadd.f32 %v3810, %v3981
        %v4087 = vadd.f32 %v3811, %v3985
        %v4088 = vadd.f32 %v3812, %v3987
        %v4089 = vadd.f32 %v3813, %v3986
        %v4090 = vadd.f32 %v3814, %v3990
        %v4091 = vadd.f32 %v3815, %v3992
        %v4092 = vadd.f32 %v3816, %v3991
        %v4093 = vadd.f32 %v3817, %v3995
        %v4094 = vadd.f32 %v3818, %v3997
        %v4095 = vadd.f32 %v3819, %v3996
        %v4096 = vadd.f32 %v3820, %v4000
        %v4097 = vadd.f32 %v3821, %v4002
        %v4098 = vadd.f32 %v3822, %v4001
        %v4099 = vlaneseq
        %v4100 = vshrl.u32 %v4099, 7
        %v4101 = vsub.s32 0, %v4100
        %v4102 = vrot.slane %v2810, %v4101
        %v4103 = vmul.f32 %v2940, %v4102
        %v4104 = vmul.f32 %v2848, %v4102
        %v4105 = vmul.f32 %v2941, %v4102
        %v4106 = vmul.f32 %v2851, %v4102
        %v4107 = vmul.f32 %v2942, %v4102
        %v4108 = vmul.f32 %v2854, %v4102
        %v4109 = vmul.f32 %v2943, %v4102
        %v4110 = vmul.f32 %v2857, %v4102
        %v4111 = vmul.f32 %v2944, %v4102
        %v4112 = vmul.f32 %v2860, %v4102
        %v4113 = vmul.f32 %v2945, %v4102
        %v4114 = vmul.f32 %v2863, %v4102
        %v4115 = vmul.f32 %v2946, %v4102
        %v4116 = vmul.f32 %v2866, %v4102
        %v4117 = vmul.f32 %v2947, %v4102
        %v4118 = vmul.f32 %v2869, %v4102
        %v4119 = vmul.f32 %v2948, %v4102
        %v4120 = vmul.f32 %v2872, %v4102
        %v4121 = vmul.f32 %v2949, %v4102
        %v4122 = vmul.f32 %v2875, %v4102
        %v4123 = vmul.f32 %v2950, %v4102
        %v4124 = vmul.f32 %v2878, %v4102
        %v4125 = vmul.f32 %v2951, %v4102
        %v4126 = vmul.f32 %v2881, %v4102
        %v4127 = vmul.f32 %v2952, %v4102
        %v4128 = vmul.f32 %v2884, %v4102
        %v4129 = vmul.f32 %v2953, %v4102
        %v4130 = vmul.f32 %v2887, %v4102
        %v4131 = vmul.f32 %v2954, %v4102
        %v4132 = vmul.f32 %v2890, %v4102
        %v4133 = vmul.f32 %v521, %v4102
        %v4134 = vmul.f32 %v422, %v4102
        %v4167 = vrot.slane %v4103, 7
        %v4168 = vrot.slane %v4104, 7
        %v4169 = vsel %vm420, %v4167, %v4168
        %v4170 = vrot.slane %v4105, 7
        %v4171 = vrot.slane %v4106, 7
        %v4172 = vsel %vm420, %v4170, %v4171
        %v4173 = vrot.slane %v4107, 7
        %v4174 = vrot.slane %v4108, 7
        %v4175 = vsel %vm420, %v4173, %v4174
        %v4176 = vrot.slane %v4109, 7
        %v4177 = vrot.slane %v4110, 7
        %v4178 = vsel %vm420, %v4176, %v4177
        %v4179 = vrot.slane %v4111, 7
        %v4180 = vrot.slane %v4112, 7
        %v4181 = vsel %vm420, %v4179, %v4180
        %v4182 = vrot.slane %v4113, 7
        %v4183 = vrot.slane %v4114, 7
        %v4184 = vsel %vm420, %v4182, %v4183
        %v4185 = vrot.slane %v4115, 7
        %v4186 = vrot.slane %v4116, 7
        %v4187 = vsel %vm420, %v4185, %v4186
        %v4188 = vrot.slane %v4117, 7
        %v4189 = vrot.slane %v4118, 7
        %v4190 = vsel %vm420, %v4188, %v4189
        %v4191 = vrot.slane %v4119, 7
        %v4192 = vrot.slane %v4120, 7
        %v4193 = vsel %vm420, %v4191, %v4192
        %v4194 = vrot.slane %v4121, 7
        %v4195 = vrot.slane %v4122, 7
        %v4196 = vsel %vm420, %v4194, %v4195
        %v4197 = vrot.slane %v4123, 7
        %v4198 = vrot.slane %v4124, 7
        %v4199 = vsel %vm420, %v4197, %v4198
        %v4200 = vrot.slane %v4125, 7
        %v4201 = vrot.slane %v4126, 7
        %v4202 = vsel %vm420, %v4200, %v4201
        %v4203 = vrot.slane %v4127, 7
        %v4204 = vrot.slane %v4128, 7
        %v4205 = vsel %vm420, %v4203, %v4204
        %v4206 = vrot.slane %v4129, 7
        %v4207 = vrot.slane %v4130, 7
        %v4208 = vsel %vm420, %v4206, %v4207
        %v4209 = vrot.slane %v4131, 7
        %v4210 = vrot.slane %v4132, 7
        %v4211 = vsel %vm420, %v4209, %v4210
        %v4212 = vrot.slane %v4133, 7
        %v4213 = vrot.slane %v4134, 7
        %v4214 = vsel %vm420, %v4212, %v4213
        %v4263 = vadd.f32 %v4051, %v4167
        %v4264 = vadd.f32 %v4052, %v4169
        %v4265 = vadd.f32 %v4053, %v4168
        %v4266 = vadd.f32 %v4054, %v4170
        %v4267 = vadd.f32 %v4055, %v4172
        %v4268 = vadd.f32 %v4056, %v4171
        %v4269 = vadd.f32 %v4057, %v4173
        %v4270 = vadd.f32 %v4058, %v4175
        %v4271 = vadd.f32 %v4059, %v4174
        %v4272 = vadd.f32 %v4060, %v4176
        %v4273 = vadd.f32 %v4061, %v4178
        %v4274 = vadd.f32 %v4062, %v4177
        %v4275 = vadd.f32 %v4063, %v4179
        %v4276 = vadd.f32 %v4064, %v4181
        %v4277 = vadd.f32 %v4065, %v4180
        %v4278 = vadd.f32 %v4066, %v4182
        %v4279 = vadd.f32 %v4067, %v4184
        %v4280 = vadd.f32 %v4068, %v4183
        %v4281 = vadd.f32 %v4069, %v4185
        %v4282 = vadd.f32 %v4070, %v4187
        %v4283 = vadd.f32 %v4071, %v4186
        %v4284 = vadd.f32 %v4072, %v4188
        %v4285 = vadd.f32 %v4073, %v4190
        %v4286 = vadd.f32 %v4074, %v4189
        %v4287 = vadd.f32 %v4075, %v4191
        %v4288 = vadd.f32 %v4076, %v4193
        %v4289 = vadd.f32 %v4077, %v4192
        %v4290 = vadd.f32 %v4078, %v4194
        %v4291 = vadd.f32 %v4079, %v4196
        %v4292 = vadd.f32 %v4080, %v4195
        %v4293 = vadd.f32 %v4081, %v4197
        %v4294 = vadd.f32 %v4082, %v4199
        %v4295 = vadd.f32 %v4083, %v4198
        %v4296 = vadd.f32 %v4084, %v4200
        %v4297 = vadd.f32 %v4085, %v4202
        %v4298 = vadd.f32 %v4086, %v4201
        %v4299 = vadd.f32 %v4087, %v4203
        %v4300 = vadd.f32 %v4088, %v4205
        %v4301 = vadd.f32 %v4089, %v4204
        %v4302 = vadd.f32 %v4090, %v4206
        %v4303 = vadd.f32 %v4091, %v4208
        %v4304 = vadd.f32 %v4092, %v4207
        %v4305 = vadd.f32 %v4093, %v4209
        %v4306 = vadd.f32 %v4094, %v4211
        %v4307 = vadd.f32 %v4095, %v4210
        %v4308 = vadd.f32 %v4096, %v4212
        %v4309 = vadd.f32 %v4097, %v4214
        %v4310 = vadd.f32 %v4098, %v4213
        %v4311 = vlaneseq
        %v4312 = vshrl.u32 %v4311, 7
        %v4313 = vsub.s32 1, %v4312
        %v4314 = vrot.slane %v2810, %v4313
        %v4315 = vmul.f32 %v2940, %v4314
        %v4316 = vmul.f32 %v2848, %v4314
        %v4317 = vmul.f32 %v2956, %v4314
        %v4318 = vmul.f32 %v2941, %v4314
        %v4319 = vmul.f32 %v2851, %v4314
        %v4320 = vmul.f32 %v2957, %v4314
        %v4321 = vmul.f32 %v2942, %v4314
        %v4322 = vmul.f32 %v2854, %v4314
        %v4323 = vmul.f32 %v2958, %v4314
        %v4324 = vmul.f32 %v2943, %v4314
        %v4325 = vmul.f32 %v2857, %v4314
        %v4326 = vmul.f32 %v2959, %v4314
        %v4327 = vmul.f32 %v2944, %v4314
        %v4328 = vmul.f32 %v2860, %v4314
        %v4329 = vmul.f32 %v2960, %v4314
        %v4330 = vmul.f32 %v2945, %v4314
        %v4331 = vmul.f32 %v2863, %v4314
        %v4332 = vmul.f32 %v2961, %v4314
        %v4333 = vmul.f32 %v2946, %v4314
        %v4334 = vmul.f32 %v2866, %v4314
        %v4335 = vmul.f32 %v2962, %v4314
        %v4336 = vmul.f32 %v2947, %v4314
        %v4337 = vmul.f32 %v2869, %v4314
        %v4338 = vmul.f32 %v2963, %v4314
        %v4339 = vmul.f32 %v2948, %v4314
        %v4340 = vmul.f32 %v2872, %v4314
        %v4341 = vmul.f32 %v2964, %v4314
        %v4342 = vmul.f32 %v2949, %v4314
        %v4343 = vmul.f32 %v2875, %v4314
        %v4344 = vmul.f32 %v2965, %v4314
        %v4345 = vmul.f32 %v2950, %v4314
        %v4346 = vmul.f32 %v2878, %v4314
        %v4347 = vmul.f32 %v2966, %v4314
        %v4348 = vmul.f32 %v2951, %v4314
        %v4349 = vmul.f32 %v2881, %v4314
        %v4350 = vmul.f32 %v2967, %v4314
        %v4351 = vmul.f32 %v2952, %v4314
        %v4352 = vmul.f32 %v2884, %v4314
        %v4353 = vmul.f32 %v2968, %v4314
        %v4354 = vmul.f32 %v2953, %v4314
        %v4355 = vmul.f32 %v2887, %v4314
        %v4356 = vmul.f32 %v2969, %v4314
        %v4357 = vmul.f32 %v2954, %v4314
        %v4358 = vmul.f32 %v2890, %v4314
        %v4359 = vmul.f32 %v2970, %v4314
        %v4360 = vmul.f32 %v521, %v4314
        %v4361 = vmul.f32 %v422, %v4314
        %v4362 = vmul.f32 %v538, %v4314
        %v4363 = vadd.f32 %v4263, %v4315
        %v4364 = vadd.f32 %v4264, %v4316
        %v4365 = vadd.f32 %v4265, %v4317
        %v4366 = vadd.f32 %v4266, %v4318
        %v4367 = vadd.f32 %v4267, %v4319
        %v4368 = vadd.f32 %v4268, %v4320
        %v4369 = vadd.f32 %v4269, %v4321
        %v4370 = vadd.f32 %v4270, %v4322
        %v4371 = vadd.f32 %v4271, %v4323
        %v4372 = vadd.f32 %v4272, %v4324
        %v4373 = vadd.f32 %v4273, %v4325
        %v4374 = vadd.f32 %v4274, %v4326
        %v4375 = vadd.f32 %v4275, %v4327
        %v4376 = vadd.f32 %v4276, %v4328
        %v4377 = vadd.f32 %v4277, %v4329
        %v4378 = vadd.f32 %v4278, %v4330
        %v4379 = vadd.f32 %v4279, %v4331
        %v4380 = vadd.f32 %v4280, %v4332
        %v4381 = vadd.f32 %v4281, %v4333
        %v4382 = vadd.f32 %v4282, %v4334
        %v4383 = vadd.f32 %v4283, %v4335
        %v4384 = vadd.f32 %v4284, %v4336
        %v4385 = vadd.f32 %v4285, %v4337
        %v4386 = vadd.f32 %v4286, %v4338
        %v4387 = vadd.f32 %v4287, %v4339
        %v4388 = vadd.f32 %v4288, %v4340
        %v4389 = vadd.f32 %v4289, %v4341
        %v4390 = vadd.f32 %v4290, %v4342
        %v4391 = vadd.f32 %v4291, %v4343
        %v4392 = vadd.f32 %v4292, %v4344
        %v4393 = vadd.f32 %v4293, %v4345
        %v4394 = vadd.f32 %v4294, %v4346
        %v4395 = vadd.f32 %v4295, %v4347
        %v4396 = vadd.f32 %v4296, %v4348
        %v4397 = vadd.f32 %v4297, %v4349
        %v4398 = vadd.f32 %v4298, %v4350
        %v4399 = vadd.f32 %v4299, %v4351
        %v4400 = vadd.f32 %v4300, %v4352
        %v4401 = vadd.f32 %v4301, %v4353
        %v4402 = vadd.f32 %v4302, %v4354
        %v4403 = vadd.f32 %v4303, %v4355
        %v4404 = vadd.f32 %v4304, %v4356
        %v4405 = vadd.f32 %v4305, %v4357
        %v4406 = vadd.f32 %v4306, %v4358
        %v4407 = vadd.f32 %v4307, %v4359
        %v4408 = vadd.f32 %v4308, %v4360
        %v4409 = vadd.f32 %v4309, %v4361
        %v4410 = vadd.f32 %v4310, %v4362
        %v4411 = vlaneseq
        %v4412 = vshrl.u32 %v4411, 7
        %v4413 = vsub.s32 2, %v4412
        %v4414 = vrot.slane %v2810, %v4413
        %v4415 = vmul.f32 %v2940, %v4414
        %v4416 = vmul.f32 %v2848, %v4414
        %v4417 = vmul.f32 %v2956, %v4414
        %v4418 = vmul.f32 %v2941, %v4414
        %v4419 = vmul.f32 %v2851, %v4414
        %v4420 = vmul.f32 %v2957, %v4414
        %v4421 = vmul.f32 %v2942, %v4414
        %v4422 = vmul.f32 %v2854, %v4414
        %v4423 = vmul.f32 %v2958, %v4414
        %v4424 = vmul.f32 %v2943, %v4414
        %v4425 = vmul.f32 %v2857, %v4414
        %v4426 = vmul.f32 %v2959, %v4414
        %v4427 = vmul.f32 %v2944, %v4414
        %v4428 = vmul.f32 %v2860, %v4414
        %v4429 = vmul.f32 %v2960, %v4414
        %v4430 = vmul.f32 %v2945, %v4414
        %v4431 = vmul.f32 %v2863, %v4414
        %v4432 = vmul.f32 %v2961, %v4414
        %v4433 = vmul.f32 %v2946, %v4414
        %v4434 = vmul.f32 %v2866, %v4414
        %v4435 = vmul.f32 %v2962, %v4414
        %v4436 = vmul.f32 %v2947, %v4414
        %v4437 = vmul.f32 %v2869, %v4414
        %v4438 = vmul.f32 %v2963, %v4414
        %v4439 = vmul.f32 %v2948, %v4414
        %v4440 = vmul.f32 %v2872, %v4414
        %v4441 = vmul.f32 %v2964, %v4414
        %v4442 = vmul.f32 %v2949, %v4414
        %v4443 = vmul.f32 %v2875, %v4414
        %v4444 = vmul.f32 %v2965, %v4414
        %v4445 = vmul.f32 %v2950, %v4414
        %v4446 = vmul.f32 %v2878, %v4414
        %v4447 = vmul.f32 %v2966, %v4414
        %v4448 = vmul.f32 %v2951, %v4414
        %v4449 = vmul.f32 %v2881, %v4414
        %v4450 = vmul.f32 %v2967, %v4414
        %v4451 = vmul.f32 %v2952, %v4414
        %v4452 = vmul.f32 %v2884, %v4414
        %v4453 = vmul.f32 %v2968, %v4414
        %v4454 = vmul.f32 %v2953, %v4414
        %v4455 = vmul.f32 %v2887, %v4414
        %v4456 = vmul.f32 %v2969, %v4414
        %v4457 = vmul.f32 %v2954, %v4414
        %v4458 = vmul.f32 %v2890, %v4414
        %v4459 = vmul.f32 %v2970, %v4414
        %v4460 = vmul.f32 %v521, %v4414
        %v4461 = vmul.f32 %v422, %v4414
        %v4462 = vmul.f32 %v538, %v4414
        %v4511 = vrot.slane %v4415, 1
        %v4512 = vrot.slane %v4416, 1
        %v4513 = vsel %vm1019, %v4511, %v4512
        %v4514 = vrot.slane %v4417, 1
        %v4515 = vsel %vm1019, %v4512, %v4514
        %v4516 = vrot.slane %v4418, 1
        %v4517 = vrot.slane %v4419, 1
        %v4518 = vsel %vm1019, %v4516, %v4517
        %v4519 = vrot.slane %v4420, 1
        %v4520 = vsel %vm1019, %v4517, %v4519
        %v4521 = vrot.slane %v4421, 1
        %v4522 = vrot.slane %v4422, 1
        %v4523 = vsel %vm1019, %v4521, %v4522
        %v4524 = vrot.slane %v4423, 1
        %v4525 = vsel %vm1019, %v4522, %v4524
        %v4526 = vrot.slane %v4424, 1
        %v4527 = vrot.slane %v4425, 1
        %v4528 = vsel %vm1019, %v4526, %v4527
        %v4529 = vrot.slane %v4426, 1
        %v4530 = vsel %vm1019, %v4527, %v4529
        %v4531 = vrot.slane %v4427, 1
        %v4532 = vrot.slane %v4428, 1
        %v4533 = vsel %vm1019, %v4531, %v4532
        %v4534 = vrot.slane %v4429, 1
        %v4535 = vsel %vm1019, %v4532, %v4534
        %v4536 = vrot.slane %v4430, 1
        %v4537 = vrot.slane %v4431, 1
        %v4538 = vsel %vm1019, %v4536, %v4537
        %v4539 = vrot.slane %v4432, 1
        %v4540 = vsel %vm1019, %v4537, %v4539
        %v4541 = vrot.slane %v4433, 1
        %v4542 = vrot.slane %v4434, 1
        %v4543 = vsel %vm1019, %v4541, %v4542
        %v4544 = vrot.slane %v4435, 1
        %v4545 = vsel %vm1019, %v4542, %v4544
        %v4546 = vrot.slane %v4436, 1
        %v4547 = vrot.slane %v4437, 1
        %v4548 = vsel %vm1019, %v4546, %v4547
        %v4549 = vrot.slane %v4438, 1
        %v4550 = vsel %vm1019, %v4547, %v4549
        %v4551 = vrot.slane %v4439, 1
        %v4552 = vrot.slane %v4440, 1
        %v4553 = vsel %vm1019, %v4551, %v4552
        %v4554 = vrot.slane %v4441, 1
        %v4555 = vsel %vm1019, %v4552, %v4554
        %v4556 = vrot.slane %v4442, 1
        %v4557 = vrot.slane %v4443, 1
        %v4558 = vsel %vm1019, %v4556, %v4557
        %v4559 = vrot.slane %v4444, 1
        %v4560 = vsel %vm1019, %v4557, %v4559
        %v4561 = vrot.slane %v4445, 1
        %v4562 = vrot.slane %v4446, 1
        %v4563 = vsel %vm1019, %v4561, %v4562
        %v4564 = vrot.slane %v4447, 1
        %v4565 = vsel %vm1019, %v4562, %v4564
        %v4566 = vrot.slane %v4448, 1
        %v4567 = vrot.slane %v4449, 1
        %v4568 = vsel %vm1019, %v4566, %v4567
        %v4569 = vrot.slane %v4450, 1
        %v4570 = vsel %vm1019, %v4567, %v4569
        %v4571 = vrot.slane %v4451, 1
        %v4572 = vrot.slane %v4452, 1
        %v4573 = vsel %vm1019, %v4571, %v4572
        %v4574 = vrot.slane %v4453, 1
        %v4575 = vsel %vm1019, %v4572, %v4574
        %v4576 = vrot.slane %v4454, 1
        %v4577 = vrot.slane %v4455, 1
        %v4578 = vsel %vm1019, %v4576, %v4577
        %v4579 = vrot.slane %v4456, 1
        %v4580 = vsel %vm1019, %v4577, %v4579
        %v4581 = vrot.slane %v4457, 1
        %v4582 = vrot.slane %v4458, 1
        %v4583 = vsel %vm1019, %v4581, %v4582
        %v4584 = vrot.slane %v4459, 1
        %v4585 = vsel %vm1019, %v4582, %v4584
        %v4586 = vrot.slane %v4460, 1
        %v4587 = vrot.slane %v4461, 1
        %v4588 = vsel %vm1019, %v4586, %v4587
        %v4589 = vrot.slane %v4462, 1
        %v4590 = vsel %vm1019, %v4587, %v4589
        %v4639 = vadd.f32 %v4363, %v4513
        %v4640 = vadd.f32 %v4364, %v4515
        %v4641 = vadd.f32 %v4365, %v4514
        %v4642 = vadd.f32 %v4366, %v4518
        %v4643 = vadd.f32 %v4367, %v4520
        %v4644 = vadd.f32 %v4368, %v4519
        %v4645 = vadd.f32 %v4369, %v4523
        %v4646 = vadd.f32 %v4370, %v4525
        %v4647 = vadd.f32 %v4371, %v4524
        %v4648 = vadd.f32 %v4372, %v4528
        %v4649 = vadd.f32 %v4373, %v4530
        %v4650 = vadd.f32 %v4374, %v4529
        %v4651 = vadd.f32 %v4375, %v4533
        %v4652 = vadd.f32 %v4376, %v4535
        %v4653 = vadd.f32 %v4377, %v4534
        %v4654 = vadd.f32 %v4378, %v4538
        %v4655 = vadd.f32 %v4379, %v4540
        %v4656 = vadd.f32 %v4380, %v4539
        %v4657 = vadd.f32 %v4381, %v4543
        %v4658 = vadd.f32 %v4382, %v4545
        %v4659 = vadd.f32 %v4383, %v4544
        %v4660 = vadd.f32 %v4384, %v4548
        %v4661 = vadd.f32 %v4385, %v4550
        %v4662 = vadd.f32 %v4386, %v4549
        %v4663 = vadd.f32 %v4387, %v4553
        %v4664 = vadd.f32 %v4388, %v4555
        %v4665 = vadd.f32 %v4389, %v4554
        %v4666 = vadd.f32 %v4390, %v4558
        %v4667 = vadd.f32 %v4391, %v4560
        %v4668 = vadd.f32 %v4392, %v4559
        %v4669 = vadd.f32 %v4393, %v4563
        %v4670 = vadd.f32 %v4394, %v4565
        %v4671 = vadd.f32 %v4395, %v4564
        %v4672 = vadd.f32 %v4396, %v4568
        %v4673 = vadd.f32 %v4397, %v4570
        %v4674 = vadd.f32 %v4398, %v4569
        %v4675 = vadd.f32 %v4399, %v4573
        %v4676 = vadd.f32 %v4400, %v4575
        %v4677 = vadd.f32 %v4401, %v4574
        %v4678 = vadd.f32 %v4402, %v4578
        %v4679 = vadd.f32 %v4403, %v4580
        %v4680 = vadd.f32 %v4404, %v4579
        %v4681 = vadd.f32 %v4405, %v4583
        %v4682 = vadd.f32 %v4406, %v4585
        %v4683 = vadd.f32 %v4407, %v4584
        %v4684 = vadd.f32 %v4408, %v4588
        %v4685 = vadd.f32 %v4409, %v4590
        %v4686 = vadd.f32 %v4410, %v4589
        %v4687 = vld [vmem:[%s6] sm:$0x1]
        %v4689 = vlaneseq
        %v4690 = vshrl.u32 %v4689, 7
        %v4691 = vsub.s32 0, %v4690
        %v4692 = vrot.slane %v4687, %v4691
        %v4694 = vadd.f32 %v4639, %v4692
        %v4695 = vadd.f32 %v4640, %v4692
        %v4696 = vadd.f32 %v4641, %v4692
        %v4697 = vadd.f32 %v4642, %v4692
        %v4698 = vadd.f32 %v4643, %v4692
        %v4699 = vadd.f32 %v4644, %v4692
        %v4700 = vadd.f32 %v4645, %v4692
        %v4701 = vadd.f32 %v4646, %v4692
        %v4702 = vadd.f32 %v4647, %v4692
        %v4703 = vadd.f32 %v4648, %v4692
        %v4704 = vadd.f32 %v4649, %v4692
        %v4705 = vadd.f32 %v4650, %v4692
        %v4706 = vadd.f32 %v4651, %v4692
        %v4707 = vadd.f32 %v4652, %v4692
        %v4708 = vadd.f32 %v4653, %v4692
        %v4709 = vadd.f32 %v4654, %v4692
        %v4710 = vadd.f32 %v4655, %v4692
        %v4711 = vadd.f32 %v4656, %v4692
        %v4712 = vadd.f32 %v4657, %v4692
        %v4713 = vadd.f32 %v4658, %v4692
        %v4714 = vadd.f32 %v4659, %v4692
        %v4715 = vadd.f32 %v4660, %v4692
        %v4716 = vadd.f32 %v4661, %v4692
        %v4717 = vadd.f32 %v4662, %v4692
        %v4718 = vadd.f32 %v4663, %v4692
        %v4719 = vadd.f32 %v4664, %v4692
        %v4720 = vadd.f32 %v4665, %v4692
        %v4721 = vadd.f32 %v4666, %v4692
        %v4722 = vadd.f32 %v4667, %v4692
        %v4723 = vadd.f32 %v4668, %v4692
        %v4724 = vadd.f32 %v4669, %v4692
        %v4725 = vadd.f32 %v4670, %v4692
        %v4726 = vadd.f32 %v4671, %v4692
        %v4727 = vadd.f32 %v4672, %v4692
        %v4728 = vadd.f32 %v4673, %v4692
        %v4729 = vadd.f32 %v4674, %v4692
        %v4730 = vadd.f32 %v4675, %v4692
        %v4731 = vadd.f32 %v4676, %v4692
        %v4732 = vadd.f32 %v4677, %v4692
        %v4733 = vadd.f32 %v4678, %v4692
        %v4734 = vadd.f32 %v4679, %v4692
        %v4735 = vadd.f32 %v4680, %v4692
        %v4736 = vadd.f32 %v4681, %v4692
        %v4737 = vadd.f32 %v4682, %v4692
        %v4738 = vadd.f32 %v4683, %v4692
        %v4739 = vadd.f32 %v4684, %v4692
        %v4740 = vadd.f32 %v4685, %v4692
        %v4741 = vadd.f32 %v4686, %v4692
        %v4742 = vmax.f32 %v4694, 0.0
        %v4743 = vmax.f32 %v4695, 0.0
        %v4744 = vmax.f32 %v4696, 0.0
        %v4745 = vmax.f32 %v4697, 0.0
        %v4746 = vmax.f32 %v4698, 0.0
        %v4747 = vmax.f32 %v4699, 0.0
        %v4748 = vmax.f32 %v4700, 0.0
        %v4749 = vmax.f32 %v4701, 0.0
        %v4750 = vmax.f32 %v4702, 0.0
        %v4751 = vmax.f32 %v4703, 0.0
        %v4752 = vmax.f32 %v4704, 0.0
        %v4753 = vmax.f32 %v4705, 0.0
        %v4754 = vmax.f32 %v4706, 0.0
        %v4755 = vmax.f32 %v4707, 0.0
        %v4756 = vmax.f32 %v4708, 0.0
        %v4757 = vmax.f32 %v4709, 0.0
        %v4758 = vmax.f32 %v4710, 0.0
        %v4759 = vmax.f32 %v4711, 0.0
        %v4760 = vmax.f32 %v4712, 0.0
        %v4761 = vmax.f32 %v4713, 0.0
        %v4762 = vmax.f32 %v4714, 0.0
        %v4763 = vmax.f32 %v4715, 0.0
        %v4764 = vmax.f32 %v4716, 0.0
        %v4765 = vmax.f32 %v4717, 0.0
        %v4766 = vmax.f32 %v4718, 0.0
        %v4767 = vmax.f32 %v4719, 0.0
        %v4768 = vmax.f32 %v4720, 0.0
        %v4769 = vmax.f32 %v4721, 0.0
        %v4770 = vmax.f32 %v4722, 0.0
        %v4771 = vmax.f32 %v4723, 0.0
        %v4772 = vmax.f32 %v4724, 0.0
        %v4773 = vmax.f32 %v4725, 0.0
        %v4774 = vmax.f32 %v4726, 0.0
        %v4775 = vmax.f32 %v4727, 0.0
        %v4776 = vmax.f32 %v4728, 0.0
        %v4777 = vmax.f32 %v4729, 0.0
        %v4778 = vmax.f32 %v4730, 0.0
        %v4779 = vmax.f32 %v4731, 0.0
        %v4780 = vmax.f32 %v4732, 0.0
        %v4781 = vmax.f32 %v4733, 0.0
        %v4782 = vmax.f32 %v4734, 0.0
        %v4783 = vmax.f32 %v4735, 0.0
        %v4784 = vmax.f32 %v4736, 0.0
        %v4785 = vmax.f32 %v4737, 0.0
        %v4786 = vmax.f32 %v4738, 0.0
        %v4787 = vmax.f32 %v4739, 0.0
        %v4788 = vmax.f32 %v4740, 0.0
        %v4789 = vmax.f32 %v4741, 0.0
        %v4838 = vrot.slane %v4742, 1
        %v4839 = vrot.slane %v4743, 1
        %v4840 = vsel %vm1019, %v4838, %v4839
        %v4841 = vrot.slane %v4744, 1
        %v4842 = vsel %vm1019, %v4839, %v4841
        %v4843 = vrot.slane %v4745, 1
        %v4844 = vrot.slane %v4746, 1
        %v4845 = vsel %vm1019, %v4843, %v4844
        %v4846 = vrot.slane %v4747, 1
        %v4847 = vsel %vm1019, %v4844, %v4846
        %v4848 = vrot.slane %v4748, 1
        %v4849 = vrot.slane %v4749, 1
        %v4850 = vsel %vm1019, %v4848, %v4849
        %v4851 = vrot.slane %v4750, 1
        %v4852 = vsel %vm1019, %v4849, %v4851
        %v4853 = vrot.slane %v4751, 1
        %v4854 = vrot.slane %v4752, 1
        %v4855 = vsel %vm1019, %v4853, %v4854
        %v4856 = vrot.slane %v4753, 1
        %v4857 = vsel %vm1019, %v4854, %v4856
        %v4858 = vrot.slane %v4754, 1
        %v4859 = vrot.slane %v4755, 1
        %v4860 = vsel %vm1019, %v4858, %v4859
        %v4861 = vrot.slane %v4756, 1
        %v4862 = vsel %vm1019, %v4859, %v4861
        %v4863 = vrot.slane %v4757, 1
        %v4864 = vrot.slane %v4758, 1
        %v4865 = vsel %vm1019, %v4863, %v4864
        %v4866 = vrot.slane %v4759, 1
        %v4867 = vsel %vm1019, %v4864, %v4866
        %v4868 = vrot.slane %v4760, 1
        %v4869 = vrot.slane %v4761, 1
        %v4870 = vsel %vm1019, %v4868, %v4869
        %v4871 = vrot.slane %v4762, 1
        %v4872 = vsel %vm1019, %v4869, %v4871
        %v4873 = vrot.slane %v4763, 1
        %v4874 = vrot.slane %v4764, 1
        %v4875 = vsel %vm1019, %v4873, %v4874
        %v4876 = vrot.slane %v4765, 1
        %v4877 = vsel %vm1019, %v4874, %v4876
        %v4878 = vrot.slane %v4766, 1
        %v4879 = vrot.slane %v4767, 1
        %v4880 = vsel %vm1019, %v4878, %v4879
        %v4881 = vrot.slane %v4768, 1
        %v4882 = vsel %vm1019, %v4879, %v4881
        %v4883 = vrot.slane %v4769, 1
        %v4884 = vrot.slane %v4770, 1
        %v4885 = vsel %vm1019, %v4883, %v4884
        %v4886 = vrot.slane %v4771, 1
        %v4887 = vsel %vm1019, %v4884, %v4886
        %v4888 = vrot.slane %v4772, 1
        %v4889 = vrot.slane %v4773, 1
        %v4890 = vsel %vm1019, %v4888, %v4889
        %v4891 = vrot.slane %v4774, 1
        %v4892 = vsel %vm1019, %v4889, %v4891
        %v4893 = vrot.slane %v4775, 1
        %v4894 = vrot.slane %v4776, 1
        %v4895 = vsel %vm1019, %v4893, %v4894
        %v4896 = vrot.slane %v4777, 1
        %v4897 = vsel %vm1019, %v4894, %v4896
        %v4898 = vrot.slane %v4778, 1
        %v4899 = vrot.slane %v4779, 1
        %v4900 = vsel %vm1019, %v4898, %v4899
        %v4901 = vrot.slane %v4780, 1
        %v4902 = vsel %vm1019, %v4899, %v4901
        %v4903 = vrot.slane %v4781, 1
        %v4904 = vrot.slane %v4782, 1
        %v4905 = vsel %vm1019, %v4903, %v4904
        %v4906 = vrot.slane %v4783, 1
        %v4907 = vsel %vm1019, %v4904, %v4906
        %v4908 = vrot.slane %v4784, 1
        %v4909 = vrot.slane %v4785, 1
        %v4910 = vsel %vm1019, %v4908, %v4909
        %v4911 = vrot.slane %v4786, 1
        %v4912 = vsel %vm1019, %v4909, %v4911
        %v4913 = vrot.slane %v4787, 1
        %v4914 = vrot.slane %v4788, 1
        %v4915 = vsel %vm1019, %v4913, %v4914
        %v4916 = vrot.slane %v4789, 1
        %v4917 = vsel %vm1019, %v4914, %v4916
        %v4950 = vpack.c.bf16 %v4842, %v4840
        %v4951 = vpack.c.bf16 %v4847, %v4845
        %v4952 = vpack.c.bf16 %v4852, %v4850
        %v4953 = vpack.c.bf16 %v4857, %v4855
        %v4954 = vpack.c.bf16 %v4862, %v4860
        %v4955 = vpack.c.bf16 %v4867, %v4865
        %v4956 = vpack.c.bf16 %v4872, %v4870
        %v4957 = vpack.c.bf16 %v4877, %v4875
        %v4958 = vpack.c.bf16 %v4882, %v4880
        %v4959 = vpack.c.bf16 %v4887, %v4885
        %v4960 = vpack.c.bf16 %v4892, %v4890
        %v4961 = vpack.c.bf16 %v4897, %v4895
        %v4962 = vpack.c.bf16 %v4902, %v4900
        %v4963 = vpack.c.bf16 %v4907, %v4905
        %v4964 = vpack.c.bf16 %v4912, %v4910
        %v4965 = vpack.c.bf16 %v4917, %v4915
        %v4966 = vpack.c.bf16 %v353, %v352
        %v4967 = vpack.c.bf16 %v355, %v354
        %v4968 = vpack.c.bf16 %v357, %v356
        %v4969 = vpack.c.bf16 %v359, %v358
        %v4970 = vpack.c.bf16 %v361, %v360
        %v4971 = vpack.c.bf16 %v363, %v362
        %v4972 = vpack.c.bf16 %v365, %v364
        %v4973 = vpack.c.bf16 %v367, %v366
        %v4974 = vpack.c.bf16 %v369, %v368
        %v4975 = vpack.c.bf16 %v371, %v370
        %v4976 = vpack.c.bf16 %v373, %v372
        %v4977 = vpack.c.bf16 %v375, %v374
        %v4978 = vpack.c.bf16 %v377, %v376
        %v4979 = vpack.c.bf16 %v379, %v378
        %v4980 = vpack.c.bf16 %v381, %v380
        %v4981 = vpack.c.bf16 %v383, %v382
        %4998 = vrot.lane.b32.xlu0 %v4966, 32
        %v4999 = vpop.permute.xlu0 %4998
        %5000 = vrot.lane.b32.xlu0 %v4967, 32
        %v5001 = vpop.permute.xlu0 %5000
        %5002 = vrot.lane.b32.xlu0 %v4968, 32
        %v5003 = vpop.permute.xlu0 %5002
        %5004 = vrot.lane.b32.xlu0 %v4969, 32
        %v5005 = vpop.permute.xlu0 %5004
        %5006 = vrot.lane.b32.xlu0 %v4970, 32
        %v5007 = vpop.permute.xlu0 %5006
        %5008 = vrot.lane.b32.xlu0 %v4971, 32
        %v5009 = vpop.permute.xlu0 %5008
        %5010 = vrot.lane.b32.xlu0 %v4972, 32
        %v5011 = vpop.permute.xlu0 %5010
        %5012 = vrot.lane.b32.xlu0 %v4973, 32
        %v5013 = vpop.permute.xlu0 %5012
        %5014 = vrot.lane.b32.xlu0 %v4974, 32
        %v5015 = vpop.permute.xlu0 %5014
        %5016 = vrot.lane.b32.xlu0 %v4975, 32
        %v5017 = vpop.permute.xlu0 %5016
        %5018 = vrot.lane.b32.xlu0 %v4976, 32
        %v5019 = vpop.permute.xlu0 %5018
        %5020 = vrot.lane.b32.xlu0 %v4977, 32
        %v5021 = vpop.permute.xlu0 %5020
        %5022 = vrot.lane.b32.xlu0 %v4978, 32
        %v5023 = vpop.permute.xlu0 %5022
        %5024 = vrot.lane.b32.xlu0 %v4979, 32
        %v5025 = vpop.permute.xlu0 %5024
        %5026 = vrot.lane.b32.xlu0 %v4980, 32
        %v5027 = vpop.permute.xlu0 %5026
        %5028 = vrot.lane.b32.xlu0 %v4981, 32
        %v5029 = vpop.permute.xlu0 %5028
        %vm5030 = vcmask 261120
        %v5033 = vsel %vm5030, %v4950, %v4999
        %v5036 = vsel %vm5030, %v4951, %v5001
        %v5039 = vsel %vm5030, %v4952, %v5003
        %v5042 = vsel %vm5030, %v4953, %v5005
        %v5045 = vsel %vm5030, %v4954, %v5007
        %v5048 = vsel %vm5030, %v4955, %v5009
        %v5051 = vsel %vm5030, %v4956, %v5011
        %v5054 = vsel %vm5030, %v4957, %v5013
        %v5057 = vsel %vm5030, %v4958, %v5015
        %v5060 = vsel %vm5030, %v4959, %v5017
        %v5063 = vsel %vm5030, %v4960, %v5019
        %v5066 = vsel %vm5030, %v4961, %v5021
        %v5069 = vsel %vm5030, %v4962, %v5023
        %v5072 = vsel %vm5030, %v4963, %v5025
        %v5075 = vsel %vm5030, %v4964, %v5027
        %v5078 = vsel %vm5030, %v4965, %v5029
        %v5079 = vld [vmem:[%s7] sm:$0xf]
        %v5080 = vld [vmem:[%s7 + $0x4] sm:$0xf]
        %v5081 = vld [vmem:[%s7 + $0x8] sm:$0xf]
        %v5082 = vld [vmem:[%s7 + $0xc] sm:$0xf]
        %v5083 = vld [vmem:[%s7 + $0x10] sm:$0xf]
        %v5084 = vld [vmem:[%s7 + $0x14] sm:$0xf]
        %v5085 = vld [vmem:[%s8] sm:$0x1]
        %v5087 = vlaneseq
        %v5088 = vshrl.u32 %v5087, 7
        %v5089 = vsub.s32 0, %v5088
        %v5090 = vrot.slane %v5085, %v5089
        %v5098 = vunpack.c.l.b16 %v5079
        %v5099 = vunpack.c.l.b16 %v5080
        %v5100 = vunpack.c.l.b16 %v5081
        %v5101 = vunpack.c.l.b16 %v5082
        %v5102 = vunpack.c.l.b16 %v5083
        %v5103 = vunpack.c.l.b16 %v5084
        %v5104 = vpack.c.b16 %v5099, %v5098
        %v5105 = vpack.c.b16 %v5101, %v5100
        %v5106 = vpack.c.b16 %v5103, %v5102
        %vm5110 = vcmask 392192
        %v5111 = vsel %vm5110, %v5033, 0
        %v5113 = vsel %vm5110, %v5036, 0
        %v5115 = vsel %vm5110, %v5039, 0
        %v5117 = vsel %vm5110, %v5042, 0
        %v5119 = vsel %vm5110, %v5045, 0
        %v5121 = vsel %vm5110, %v5048, 0
        %v5123 = vsel %vm5110, %v5051, 0
        %v5125 = vsel %vm5110, %v5054, 0
        %v5127 = vsel %vm5110, %v5057, 0
        %v5129 = vsel %vm5110, %v5060, 0
        %v5131 = vsel %vm5110, %v5063, 0
        %v5133 = vsel %vm5110, %v5066, 0
        %v5135 = vsel %vm5110, %v5069, 0
        %v5137 = vsel %vm5110, %v5072, 0
        %v5139 = vsel %vm5110, %v5075, 0
        %v5141 = vsel %vm5110, %v5078, 0
        %5143 = vmatprep.subr.bf16.mxu0 0
        %5144 = vmatpush1.bf16.msra.mxu0 0
        %5145 = vmatprep.subr.bf16.mxu0 0
        %5146 = vmatpush1.bf16.msra.mxu0 0
        %5147 = vmatprep.subr.bf16.mxu0 0
        %5148 = vmatpush1.bf16.msra.mxu0 0
        %5149 = vmatprep.subr.bf16.mxu0 0
        %5150 = vmatpush1.bf16.msra.mxu0 0
        %5151 = vmatprep.subr.bf16.mxu0 0
        %5152 = vmatpush1.bf16.msra.mxu0 0
        %5153 = vmatprep.subr.bf16.mxu0 0
        %5154 = vmatpush1.bf16.msra.mxu0 %v5106
        %5155 = vmatprep.subr.bf16.mxu0 0
        %5156 = vmatpush1.bf16.msra.mxu0 %v5105
        %5157 = vmatprep.subr.bf16.mxu0 0
        %5158 = vmatpush1.bf16.msra.mxu0 %v5104
        %5159 = vmatprep.subr.bf16.mxu0 0
        %5160 = vmatpush2.bf16.msra.mxu0 0
        %5161 = vmatprep.subr.bf16.mxu0 0
        %5162 = vmatpush2.bf16.msra.mxu0 0
        %5163 = vmatprep.subr.bf16.mxu0 0
        %5164 = vmatpush2.bf16.msra.mxu0 0
        %5165 = vmatprep.subr.bf16.mxu0 0
        %5166 = vmatpush2.bf16.msra.mxu0 0
        %5167 = vmatprep.subr.bf16.mxu0 0
        %5168 = vmatpush2.bf16.msra.mxu0 0
        %5169 = vmatprep.subr.bf16.mxu0 0
        %5170 = vmatpush2.bf16.msra.mxu0 0
        %5171 = vmatprep.subr.bf16.mxu0 0
        %5172 = vmatpush2.bf16.msra.mxu0 0
        %5173 = vmatprep.subr.bf16.mxu0 0
        %5174 = vmatpush2.bf16.msra.mxu0 0
        %5175 = vmatprep.mubr.bf16.mxu0 0
        %5176 = vmatmul.mubr.bf16.gmra.mxu0 %v5111
        %v5177 = vpop.f32.mrf.mxu0
        %v5178 = vadd.f32 %v5090, %v5177
        %v5179 = vpop.f32.mrf.mxu0
        %v5180 = vpop.f32.mrf.mxu0
        %v5181 = vadd.f32 %v5090, %v5180
        %v5182 = vpop.f32.mrf.mxu0
        %5183 = vmatprep.mubr.bf16.mxu0 0
        %5184 = vmatmul.mubr.bf16.gmra.mxu0 %v5113
        %v5185 = vpop.f32.mrf.mxu0
        %v5186 = vadd.f32 %v5090, %v5185
        %v5187 = vpop.f32.mrf.mxu0
        %v5188 = vpop.f32.mrf.mxu0
        %v5189 = vadd.f32 %v5090, %v5188
        %v5190 = vpop.f32.mrf.mxu0
        %5191 = vmatprep.mubr.bf16.mxu0 0
        %5192 = vmatmul.mubr.bf16.gmra.mxu0 %v5115
        %v5193 = vpop.f32.mrf.mxu0
        %v5194 = vadd.f32 %v5090, %v5193
        %v5195 = vpop.f32.mrf.mxu0
        %v5196 = vpop.f32.mrf.mxu0
        %v5197 = vadd.f32 %v5090, %v5196
        %v5198 = vpop.f32.mrf.mxu0
        %5199 = vmatprep.mubr.bf16.mxu0 0
        %5200 = vmatmul.mubr.bf16.gmra.mxu0 %v5117
        %v5201 = vpop.f32.mrf.mxu0
        %v5202 = vadd.f32 %v5090, %v5201
        %v5203 = vpop.f32.mrf.mxu0
        %v5204 = vpop.f32.mrf.mxu0
        %v5205 = vadd.f32 %v5090, %v5204
        %v5206 = vpop.f32.mrf.mxu0
        %5207 = vmatprep.mubr.bf16.mxu0 0
        %5208 = vmatmul.mubr.bf16.gmra.mxu0 %v5119
        %v5209 = vpop.f32.mrf.mxu0
        %v5210 = vadd.f32 %v5090, %v5209
        %v5211 = vpop.f32.mrf.mxu0
        %v5212 = vpop.f32.mrf.mxu0
        %v5213 = vadd.f32 %v5090, %v5212
        %v5214 = vpop.f32.mrf.mxu0
        %5215 = vmatprep.mubr.bf16.mxu0 0
        %5216 = vmatmul.mubr.bf16.gmra.mxu0 %v5121
        %v5217 = vpop.f32.mrf.mxu0
        %v5218 = vadd.f32 %v5090, %v5217
        %v5219 = vpop.f32.mrf.mxu0
        %v5220 = vpop.f32.mrf.mxu0
        %v5221 = vadd.f32 %v5090, %v5220
        %v5222 = vpop.f32.mrf.mxu0
        %5223 = vmatprep.mubr.bf16.mxu0 0
        %5224 = vmatmul.mubr.bf16.gmra.mxu0 %v5123
        %v5225 = vpop.f32.mrf.mxu0
        %v5226 = vadd.f32 %v5090, %v5225
        %v5227 = vpop.f32.mrf.mxu0
        %v5228 = vpop.f32.mrf.mxu0
        %v5229 = vadd.f32 %v5090, %v5228
        %v5230 = vpop.f32.mrf.mxu0
        %5231 = vmatprep.mubr.bf16.mxu0 0
        %5232 = vmatmul.mubr.bf16.gmra.mxu0 %v5125
        %v5233 = vpop.f32.mrf.mxu0
        %v5234 = vadd.f32 %v5090, %v5233
        %v5235 = vpop.f32.mrf.mxu0
        %v5236 = vpop.f32.mrf.mxu0
        %v5237 = vadd.f32 %v5090, %v5236
        %v5238 = vpop.f32.mrf.mxu0
        %5239 = vmatprep.mubr.bf16.mxu0 0
        %5240 = vmatmul.mubr.bf16.gmra.mxu0 %v5127
        %v5241 = vpop.f32.mrf.mxu0
        %v5242 = vadd.f32 %v5090, %v5241
        %v5243 = vpop.f32.mrf.mxu0
        %v5244 = vpop.f32.mrf.mxu0
        %v5245 = vadd.f32 %v5090, %v5244
        %v5246 = vpop.f32.mrf.mxu0
        %5247 = vmatprep.mubr.bf16.mxu0 0
        %5248 = vmatmul.mubr.bf16.gmra.mxu0 %v5129
        %v5249 = vpop.f32.mrf.mxu0
        %v5250 = vadd.f32 %v5090, %v5249
        %v5251 = vpop.f32.mrf.mxu0
        %v5252 = vpop.f32.mrf.mxu0
        %v5253 = vadd.f32 %v5090, %v5252
        %v5254 = vpop.f32.mrf.mxu0
        %5255 = vmatprep.mubr.bf16.mxu0 0
        %5256 = vmatmul.mubr.bf16.gmra.mxu0 %v5131
        %v5257 = vpop.f32.mrf.mxu0
        %v5258 = vadd.f32 %v5090, %v5257
        %v5259 = vpop.f32.mrf.mxu0
        %v5260 = vpop.f32.mrf.mxu0
        %v5261 = vadd.f32 %v5090, %v5260
        %v5262 = vpop.f32.mrf.mxu0
        %5263 = vmatprep.mubr.bf16.mxu0 0
        %5264 = vmatmul.mubr.bf16.gmra.mxu0 %v5133
        %v5265 = vpop.f32.mrf.mxu0
        %v5266 = vadd.f32 %v5090, %v5265
        %v5267 = vpop.f32.mrf.mxu0
        %v5268 = vpop.f32.mrf.mxu0
        %v5269 = vadd.f32 %v5090, %v5268
        %v5270 = vpop.f32.mrf.mxu0
        %5271 = vmatprep.mubr.bf16.mxu0 0
        %5272 = vmatmul.mubr.bf16.gmra.mxu0 %v5135
        %v5273 = vpop.f32.mrf.mxu0
        %v5274 = vadd.f32 %v5090, %v5273
        %v5275 = vpop.f32.mrf.mxu0
        %v5276 = vpop.f32.mrf.mxu0
        %v5277 = vadd.f32 %v5090, %v5276
        %v5278 = vpop.f32.mrf.mxu0
        %5279 = vmatprep.mubr.bf16.mxu0 0
        %5280 = vmatmul.mubr.bf16.gmra.mxu0 %v5137
        %v5281 = vpop.f32.mrf.mxu0
        %v5282 = vadd.f32 %v5090, %v5281
        %v5283 = vpop.f32.mrf.mxu0
        %v5284 = vpop.f32.mrf.mxu0
        %v5285 = vadd.f32 %v5090, %v5284
        %v5286 = vpop.f32.mrf.mxu0
        %5287 = vmatprep.mubr.bf16.mxu0 0
        %5288 = vmatmul.mubr.bf16.gmra.mxu0 %v5139
        %v5289 = vpop.f32.mrf.mxu0
        %v5290 = vadd.f32 %v5090, %v5289
        %v5291 = vpop.f32.mrf.mxu0
        %v5292 = vpop.f32.mrf.mxu0
        %v5293 = vadd.f32 %v5090, %v5292
        %v5294 = vpop.f32.mrf.mxu0
        %5295 = vmatprep.mubr.bf16.mxu0 0
        %5296 = vmatmul.mubr.bf16.gmra.mxu0 %v5141
        %v5297 = vpop.f32.mrf.mxu0
        %v5298 = vadd.f32 %v5090, %v5297
        %v5299 = vpop.f32.mrf.mxu0
        %v5300 = vpop.f32.mrf.mxu0
        %v5301 = vadd.f32 %v5090, %v5300
        %v5302 = vpop.f32.mrf.mxu0
        %5303 = vdwg.mxu0
        %v5304 = vmax.f32 %v5178, 0.0
        %v5305 = vmax.f32 %v5181, 0.0
        %v5306 = vmax.f32 %v5186, 0.0
        %v5307 = vmax.f32 %v5189, 0.0
        %v5308 = vmax.f32 %v5194, 0.0
        %v5309 = vmax.f32 %v5197, 0.0
        %v5310 = vmax.f32 %v5202, 0.0
        %v5311 = vmax.f32 %v5205, 0.0
        %v5312 = vmax.f32 %v5210, 0.0
        %v5313 = vmax.f32 %v5213, 0.0
        %v5314 = vmax.f32 %v5218, 0.0
        %v5315 = vmax.f32 %v5221, 0.0
        %v5316 = vmax.f32 %v5226, 0.0
        %v5317 = vmax.f32 %v5229, 0.0
        %v5318 = vmax.f32 %v5234, 0.0
        %v5319 = vmax.f32 %v5237, 0.0
        %v5320 = vmax.f32 %v5242, 0.0
        %v5321 = vmax.f32 %v5245, 0.0
        %v5322 = vmax.f32 %v5250, 0.0
        %v5323 = vmax.f32 %v5253, 0.0
        %v5324 = vmax.f32 %v5258, 0.0
        %v5325 = vmax.f32 %v5261, 0.0
        %v5326 = vmax.f32 %v5266, 0.0
        %v5327 = vmax.f32 %v5269, 0.0
        %v5328 = vmax.f32 %v5274, 0.0
        %v5329 = vmax.f32 %v5277, 0.0
        %v5330 = vmax.f32 %v5282, 0.0
        %v5331 = vmax.f32 %v5285, 0.0
        %v5332 = vmax.f32 %v5290, 0.0
        %v5333 = vmax.f32 %v5293, 0.0
        %v5334 = vmax.f32 %v5298, 0.0
        %v5335 = vmax.f32 %v5301, 0.0
        %5336 = vst.msk [vmem:[%s350] sm:$0xff] %vm5030, %v5304
        %5337 = vst.msk [vmem:[%s350 + $0x8] sm:$0xff] %vm5030, %v5305
        %5338 = vst.msk [vmem:[%s350 + $0x10] sm:$0xff] %vm5030, %v5306
        %5339 = vst.msk [vmem:[%s350 + $0x18] sm:$0xff] %vm5030, %v5307
        %5340 = vst.msk [vmem:[%s350 + $0x20] sm:$0xff] %vm5030, %v5308
        %5341 = vst.msk [vmem:[%s350 + $0x28] sm:$0xff] %vm5030, %v5309
        %5342 = vst.msk [vmem:[%s350 + $0x30] sm:$0xff] %vm5030, %v5310
        %5343 = vst.msk [vmem:[%s350 + $0x38] sm:$0xff] %vm5030, %v5311
        %5344 = vst.msk [vmem:[%s350 + $0x40] sm:$0xff] %vm5030, %v5312
        %5345 = vst.msk [vmem:[%s350 + $0x48] sm:$0xff] %vm5030, %v5313
        %5346 = vst.msk [vmem:[%s350 + $0x50] sm:$0xff] %vm5030, %v5314
        %5347 = vst.msk [vmem:[%s350 + $0x58] sm:$0xff] %vm5030, %v5315
        %5348 = vst.msk [vmem:[%s350 + $0x60] sm:$0xff] %vm5030, %v5316
        %5349 = vst.msk [vmem:[%s350 + $0x68] sm:$0xff] %vm5030, %v5317
        %5350 = vst.msk [vmem:[%s350 + $0x70] sm:$0xff] %vm5030, %v5318
        %5351 = vst.msk [vmem:[%s350 + $0x78] sm:$0xff] %vm5030, %v5319
        %5352 = vst.msk [vmem:[%s350 + $0x80] sm:$0xff] %vm5030, %v5320
        %5353 = vst.msk [vmem:[%s350 + $0x88] sm:$0xff] %vm5030, %v5321
        %5354 = vst.msk [vmem:[%s350 + $0x90] sm:$0xff] %vm5030, %v5322
        %5355 = vst.msk [vmem:[%s350 + $0x98] sm:$0xff] %vm5030, %v5323
        %5356 = vst.msk [vmem:[%s350 + $0xa0] sm:$0xff] %vm5030, %v5324
        %5357 = vst.msk [vmem:[%s350 + $0xa8] sm:$0xff] %vm5030, %v5325
        %5358 = vst.msk [vmem:[%s350 + $0xb0] sm:$0xff] %vm5030, %v5326
        %5359 = vst.msk [vmem:[%s350 + $0xb8] sm:$0xff] %vm5030, %v5327
        %5360 = vst.msk [vmem:[%s350 + $0xc0] sm:$0xff] %vm5030, %v5328
        %5361 = vst.msk [vmem:[%s350 + $0xc8] sm:$0xff] %vm5030, %v5329
        %5362 = vst.msk [vmem:[%s350 + $0xd0] sm:$0xff] %vm5030, %v5330
        %5363 = vst.msk [vmem:[%s350 + $0xd8] sm:$0xff] %vm5030, %v5331
        %5364 = vst.msk [vmem:[%s350 + $0xe0] sm:$0xff] %vm5030, %v5332
        %5365 = vst.msk [vmem:[%s350 + $0xe8] sm:$0xff] %vm5030, %v5333
        %5366 = vst.msk [vmem:[%s350 + $0xf0] sm:$0xff] %vm5030, %v5334
        %5367 = vst.msk [vmem:[%s350 + $0xf8] sm:$0xff] %vm5030, %v5335
        %s5368 = sand.u32 %s228, 1
        %s5369 = scalar_lea.sflag [#allocation4], %s5368
        %s5370 = sand.u32 %s228, 1
        %s5371 = smul.addr %s5370, 256
        %s5372 = scalar_lea.vmem [#allocation5], %s5371
        // Predicated region
        $region61: #{tpu_custom_call.1} parent=55 // pred_check
          %p5373 = pneg %p238
        $region62: #{tpu_custom_call.1} parent=55 // pred_check_branch
          %5375 = sbr.rel (%p5373) target = $region64
        $region63: #{tpu_custom_call.1} parent=55 // pred_region
          %s5377 = ssub.s32 4096, 4096
          %5378 = vsyncadd %s5369, %s5377
          %s5379 = smul.addr %s26, 32
          %s5380 = smul.addr %s5379, 128
          %s5381 = scalar_lea.hbm %s9, %s5380
          %s5382 = sshll.u32 %s5372, 4
          %s5383 = int_to_ptr.vmem [resolvable:$true] %s5382
          %5388 = dma.vmem_to_hbm [thread:$0]  %s5383, 4096, %s5381, %s5369, 128, 128, 8
        $region64: #{tpu_custom_call.1} parent=55 // pred_fallthru
          _
      $region56: #{tpu_custom_call.1} parent=5 // pred_fallthru
        _
      %p5389 = scmp.le.s32.totalorder 2, %s21
      // Predicated region
      $region65: #{tpu_custom_call.1} parent=5 // pred_check
        %p5390 = pneg %p5389
      $region66: #{tpu_custom_call.1} parent=5 // pred_check_branch
        %5392 = sbr.rel (%p5390) target = $region68
      $region67: #{tpu_custom_call.1} parent=5 // pred_region
        %s5393 = ssub.s32 %s21, 2
        // Predicated region
        $region69: #{tpu_custom_call.1} parent=67 // pred_check
          %p5394 = pneg %p244
        $region70: #{tpu_custom_call.1} parent=67 // pred_check_branch
          %5396 = sbr.rel (%p5394) target = $region72
        $region71: #{tpu_custom_call.1} parent=67 // pred_region
          %s5397 = sand.u32 %s229, 1
          %s5398 = scalar_lea.sflag [#allocation4], %s5397
          %s5399 = sand.u32 %s229, 1
          %s5400 = smul.addr %s5399, 256
          %s5401 = scalar_lea.vmem [#allocation5], %s5400
          %5402 = dma.done %s5398, 4096
        $region72: #{tpu_custom_call.1} parent=67 // pred_fallthru
          _
      $region68: #{tpu_custom_call.1} parent=5 // pred_fallthru
        _
    $region6: #{tpu_custom_call.1} parent=1 // loop_footer
      %s25 = sadd.s32 1, %s21
    $region7: #{tpu_custom_call.1} parent=1 // loop_footer_branch
      %20 = sbr.rel target = $region3
    $region8: #{tpu_custom_call.1} parent=1 // loop_exit
      _
    %5403 = vsyncpa [#allocation3], 1
    %s5404 = scalar_lea.sflag [#allocation3], 1
    %5405 = vsyncpa %s5404, 1
    %5406 = vsyncpa [#allocation4], 1
    %s5407 = scalar_lea.sflag [#allocation4], 1
    %5408 = vsyncpa %s5407, 1

</llo_original>
